<compile_context>
chip_gen: v7x
topology: tpu7x:2x2x1
jax: 0.10.0
libtpu: 0.0.40
codegen_flags: <defaults>
</compile_context>

<pallas_src>
import functools
import math

import jax
import jax.numpy as jnp
from jax import lax
from jax.experimental import pallas as pl
from jax.experimental.pallas import tpu as pltpu


# ---------------- in-kernel helpers (f32 elementwise math) ----------------

def _layernorm(x, g, b, eps=1e-5):
    # PyTorch nn.LayerNorm: biased variance over last dim.
    mu = jnp.mean(x, axis=-1, keepdims=True)
    var = jnp.mean((x - mu) ** 2, axis=-1, keepdims=True)
    return (x - mu) * lax.rsqrt(var + eps) * g + b


def _gelu_exact(x):
    # PyTorch nn.GELU() default = exact erf formulation.
    return 0.5 * x * (1.0 + lax.erf(x * 0.7071067811865476))


# ---------------- the Pallas kernel ----------------

def transformer_block_kernel(n_heads,
                             x_ref,
                             ln1g_ref, ln1b_ref,
                             wqkv_ref, bqkv_ref,
                             wo_ref, bo_ref,
                             ln2g_ref, ln2b_ref,
                             w1_ref, b1_ref, w2_ref, b2_ref,
                             o_ref):
    Bb, T, D = x_ref.shape
    H = n_heads
    hd = D // H

    # Flatten the batch block into the matmul M dimension (fills sublanes).
    xf = x_ref[...].reshape(Bb * T, D)                        # f32 (rows, D)

    # --- LN1 + fused QKV projection (bf16 MXU, f32 accumulate). ---
    # 1/sqrt(hd) is already folded into the Q third of wqkv/bqkv.
    xn = _layernorm(xf, ln1g_ref[0], ln1b_ref[0])
    qkv = jnp.dot(xn.astype(jnp.bfloat16), wqkv_ref[...],
                  preferred_element_type=jnp.float32) + bqkv_ref[0]

    # --- causal mask: one (T, T) compare, broadcast over batch per head. ---
    row = lax.broadcasted_iota(jnp.int32, (T, T), 0)
    col = lax.broadcasted_iota(jnp.int32, (T, T), 1)
    causal = col <= row                                       # diag always unmasked

    # --- per-head causal attention, batched over Bb (no staging scratch). ---
    # Only one head's (Bb, T, T) scores are live at a time; head outputs are
    # folded straight into the output projection (Wo stored as (H, hd, D)),
    # so there is no concat / scatter of hd-wide column slices.
    # TODO(synk): flash-tile over KV (online softmax) for long T on v7x.
    attn = jnp.zeros((Bb * T, D), jnp.float32)
    for h in range(H):
        qh = qkv[:, 0 * D + h * hd:0 * D + (h + 1) * hd].reshape(Bb, T, hd).astype(jnp.bfloat16)
        kh = qkv[:, 1 * D + h * hd:1 * D + (h + 1) * hd].reshape(Bb, T, hd).astype(jnp.bfloat16)
        vh = qkv[:, 2 * D + h * hd:2 * D + (h + 1) * hd].reshape(Bb, T, hd).astype(jnp.bfloat16)

        s = jnp.einsum("bqd,bkd->bqk", qh, kh,
                       preferred_element_type=jnp.float32)    # contracts hd, no K transpose
        s = jnp.where(causal[None, :, :], s, -jnp.inf)
        m = jnp.max(s, axis=-1, keepdims=True)
        p = jnp.exp(s - m)
        l = jnp.sum(p, axis=-1, keepdims=True)
        ctx = jnp.einsum("bqk,bkd->bqd", p.astype(jnp.bfloat16), vh,
                         preferred_element_type=jnp.float32)
        ctx = ctx * pl.reciprocal(l, approx=True)             # deferred softmax normalization

        # Partial output projection for this head: (rows, hd) @ (hd, D).
        attn = attn + jnp.dot(ctx.reshape(Bb * T, hd).astype(jnp.bfloat16),
                              wo_ref[h], preferred_element_type=jnp.float32)

    attn = attn + bo_ref[0]

    # --- residual 1, LN2, FFN (bf16 matmuls, f32 elementwise), residual 2 ---
    # TODO(synk): tile the FFN hidden (2D) dim with an f32 accumulator for v7x.
    x1 = xf + attn
    xn2 = _layernorm(x1, ln2g_ref[0], ln2b_ref[0])
    h1 = jnp.dot(xn2.astype(jnp.bfloat16), w1_ref[...],
                 preferred_element_type=jnp.float32) + b1_ref[0]
    h1 = _gelu_exact(h1)
    h2 = jnp.dot(h1.astype(jnp.bfloat16), w2_ref[...],
                 preferred_element_type=jnp.float32) + b2_ref[0]
    o_ref[...] = (x1 + h2).reshape(Bb, T, D)


# ---------------- one-time parameter preparation ----------------

def prepare_params(params, n_heads):
    """Fuse/cast weights once (not per forward call)."""
    (ln1g, ln1b, wq, wk, wv, bq, bk, bv, wo, bo,
     ln2g, ln2b, w1, b1, w2, b2) = params
    D = wq.shape[0]
    hd = D // n_heads
    scale = 1.0 / math.sqrt(hd)
    # Fold attention 1/sqrt(hd) into the Q third of the fused QKV projection.
    wqkv = jnp.concatenate([wq * scale, wk, wv], axis=1).astype(jnp.bfloat16)
    bqkv = jnp.concatenate([bq * scale, bk, bv], axis=1).astype(jnp.float32)
    wo3 = wo.reshape(n_heads, hd, D).astype(jnp.bfloat16)     # per-head (hd, D) blocks
    return (ln1g.astype(jnp.float32), ln1b.astype(jnp.float32),
            wqkv, bqkv, wo3, bo.astype(jnp.float32),
            ln2g.astype(jnp.float32), ln2b.astype(jnp.float32),
            w1.astype(jnp.bfloat16), b1.astype(jnp.float32),
            w2.astype(jnp.bfloat16), b2.astype(jnp.float32))


# ---------------- wrapper ----------------

def _pick_block_b(B, T, rows_target=512):
    """Target ~rows_target rows per grid step, but keep >= 2 grid steps
    (so v7x's two TensorCores both get work) whenever B allows it."""
    bb = max(1, min(B, rows_target // max(T, 1)))
    while B % bb:
        bb -= 1
    if bb == B and B > 1:
        bb = max(1, B // 2)
        while B % bb:
            bb -= 1
    return bb


def _vmem_limit_bytes():
    # ~80% of physical VMEM: ~102 MiB on v5e/v6e (128 MiB), ~51 MiB on v7x (64 MiB).
    try:
        return int(pltpu.get_tpu_info().vmem_capacity_bytes * 0.8)
    except Exception:
        return 64 * 1024 * 1024


def transformer_block(x, prepared, n_heads, block_b=None):
    B, T, D = x.shape
    (ln1g, ln1b, wqkv, bqkv, wo3, bo, ln2g, ln2b, w1, b1, w2, b2) = prepared
    hd = D // n_heads
    Bb = block_b if block_b is not None else _pick_block_b(B, T)

    kernel = functools.partial(transformer_block_kernel, n_heads)
    out_shape = jax.ShapeDtypeStruct((B, T, D), jnp.float32)

    def call(weight_mode):
        def const(shape):
            return pl.BlockSpec(shape, lambda g, _s=shape: (0,) * len(_s),
                                pipeline_mode=weight_mode)

        grid_spec = pltpu.PrefetchScalarGridSpec(
            num_scalar_prefetch=0,
            grid=(B // Bb,),
            in_specs=[
                pl.BlockSpec((Bb, T, D), lambda g: (g, 0, 0)),   # x
                const((1, D)), const((1, D)),                    # ln1 gamma/beta
                const((D, 3 * D)), const((1, 3 * D)),            # fused Wqkv, bqkv
                const((n_heads, hd, D)), const((1, D)),          # Wo (H, hd, D), bo
                const((1, D)), const((1, D)),                    # ln2 gamma/beta
                const((D, 2 * D)), const((1, 2 * D)),            # W1, b1
                const((2 * D, D)), const((1, D)),                # W2, b2
            ],
            out_specs=pl.BlockSpec((Bb, T, D), lambda g: (g, 0, 0)),
        )
        return pl.pallas_call(
            kernel,
            out_shape=out_shape,
            grid_spec=grid_spec,
            compiler_params=pltpu.CompilerParams(
                dimension_semantics=("parallel",),
                vmem_limit_bytes=_vmem_limit_bytes()),
        )(x, ln1g, ln1b, wqkv, bqkv, wo3, bo, ln2g, ln2b, w1, b1, w2, b2)

    try:
        # Constant-index weight blocks: single-buffer to halve resident weight VMEM.
        return jax.block_until_ready(call(pl.Buffered(1)))
    except Exception:
        # TODO(synk): drop this fallback once pl.Buffered(1) on constant specs is
        # confirmed supported on the deployed jax version.
        return call(None)


# ---------------- pure-JAX f32 reference (same math, sanity check) ----------------

def reference(x, params, n_heads):
    (ln1g, ln1b, wq, wk, wv, bq, bk, bv, wo, bo,
     ln2g, ln2b, w1, b1, w2, b2) = params
    B, T, D = x.shape
    hd = D // n_heads
    scale = 1.0 / math.sqrt(hd)

    def ln(v, g, b):
        mu = jnp.mean(v, -1, keepdims=True)
        var = jnp.mean((v - mu) ** 2, -1, keepdims=True)
        return (v - mu) / jnp.sqrt(var + 1e-5) * g + b

    xn = ln(x, ln1g[0], ln1b[0])
    q = xn @ wq + bq[0]
    k = xn @ wk + bk[0]
    v = xn @ wv + bv[0]
    q = q.reshape(B, T, n_heads, hd).transpose(0, 2, 1, 3)
    k = k.reshape(B, T, n_heads, hd).transpose(0, 2, 1, 3)
    v = v.reshape(B, T, n_heads, hd).transpose(0, 2, 1, 3)
    s = jnp.einsum("bhqd,bhkd->bhqk", q, k) * scale
    causal = jnp.tril(jnp.ones((T, T), bool))
    s = jnp.where(causal, s, -jnp.inf)
    p = jax.nn.softmax(s, axis=-1)
    o = jnp.einsum("bhqk,bhkd->bhqd", p, v).transpose(0, 2, 1, 3).reshape(B, T, D)
    o = o @ wo + bo[0]
    x1 = x + o
    xn2 = ln(x1, ln2g[0], ln2b[0])
    h = xn2 @ w1 + b1[0]
    h = 0.5 * h * (1.0 + lax.erf(h / jnp.sqrt(2.0)))
    h = h @ w2 + b2[0]
    return x1 + h


# ---------------- main ----------------

if __name__ == "__main__":
    B, T, D, H = 2, 8, 32, 4
    # NOTE: D=32 / T=8 is a functional smoke test only; real perf tuning needs
    # D a multiple of 128 (lane-dense vregs / unmasked stores) and hd >= 128.

    key = jax.random.PRNGKey(0)
    ks = jax.random.split(key, 12)

    def randn(k, shape, scale=0.02):
        return (scale * jax.random.normal(k, shape)).astype(jnp.float32)

    x = jax.random.normal(ks[0], (B, T, D), dtype=jnp.float32)

    # Parameters (deterministic). Linear weights stored pre-transposed as (in, out)
    # so the kernel computes y = x @ W + b  (== PyTorch x @ W_pt.T + b).
    ln1g = jnp.ones((1, D), jnp.float32)
    ln1b = jnp.zeros((1, D), jnp.float32)
    ln2g = jnp.ones((1, D), jnp.float32)
    ln2b = jnp.zeros((1, D), jnp.float32)
    wq = randn(ks[1], (D, D)); bq = randn(ks[2], (1, D))
    wk = randn(ks[3], (D, D)); bk = randn(ks[4], (1, D))
    wv = randn(ks[5], (D, D)); bv = randn(ks[6], (1, D))
    wo = randn(ks[7], (D, D)); bo = jnp.zeros((1, D), jnp.float32)
    w1 = randn(ks[8], (D, 2 * D)); b1 = randn(ks[9], (1, 2 * D))
    w2 = randn(ks[10], (2 * D, D)); b2 = randn(ks[11], (1, D))

    params = (ln1g, ln1b, wq, wk, wv, bq, bk, bv, wo, bo,
              ln2g, ln2b, w1, b1, w2, b2)

    prepared = prepare_params(params, H)          # one-time weight fuse / cast
    out = transformer_block(x, prepared, H)
    out = jax.block_until_ready(out)

    ref = reference(x, params, H)
    assert out.shape == (B, T, D)
    # bf16 matmul operands + approx reciprocal -> loosened tolerance vs f32 reference
    err = float(jnp.max(jnp.abs(out - ref)))
    assert jnp.allclose(out, ref, atol=2e-2, rtol=2e-2), err

    print("KERNEL_OK")
</pallas_src>

<mosaic_0001>
module attributes {stable_mosaic.version = 11 : i64} {
  func.func @transformer_block_kernel(%arg0: i32, %arg1: memref<1x8x32xf32, #tpu.memory_space<vmem>>, %arg2: memref<1x32xf32, #tpu.memory_space<vmem>>, %arg3: memref<1x32xf32, #tpu.memory_space<vmem>>, %arg4: memref<32x96xbf16, #tpu.memory_space<vmem>>, %arg5: memref<1x96xf32, #tpu.memory_space<vmem>>, %arg6: memref<4x8x32xbf16, #tpu.memory_space<vmem>>, %arg7: memref<1x32xf32, #tpu.memory_space<vmem>>, %arg8: memref<1x32xf32, #tpu.memory_space<vmem>>, %arg9: memref<1x32xf32, #tpu.memory_space<vmem>>, %arg10: memref<32x64xbf16, #tpu.memory_space<vmem>>, %arg11: memref<1x64xf32, #tpu.memory_space<vmem>>, %arg12: memref<64x32xbf16, #tpu.memory_space<vmem>>, %arg13: memref<1x32xf32, #tpu.memory_space<vmem>>, %arg14: memref<1x8x32xf32, #tpu.memory_space<vmem>>) attributes {dimension_semantics = [#tpu.dimension_semantics<parallel>], iteration_bounds = array<i64: 2>, scalar_prefetch = 0 : i64, scratch_operands = 0 : i64, tpu.core_type = #tpu.core_type<tc>, window_params = [{transform_indices = @transform_0, window_bounds = array<i64: 1, 8, 32>}, {pipeline_mode = #tpu.pipeline_mode<synchronous>, transform_indices = @transform_1, window_bounds = array<i64: 1, 32>}, {pipeline_mode = #tpu.pipeline_mode<synchronous>, transform_indices = @transform_2, window_bounds = array<i64: 1, 32>}, {pipeline_mode = #tpu.pipeline_mode<synchronous>, transform_indices = @transform_3, window_bounds = array<i64: 32, 96>}, {pipeline_mode = #tpu.pipeline_mode<synchronous>, transform_indices = @transform_4, window_bounds = array<i64: 1, 96>}, {pipeline_mode = #tpu.pipeline_mode<synchronous>, transform_indices = @transform_5, window_bounds = array<i64: 4, 8, 32>}, {pipeline_mode = #tpu.pipeline_mode<synchronous>, transform_indices = @transform_6, window_bounds = array<i64: 1, 32>}, {pipeline_mode = #tpu.pipeline_mode<synchronous>, transform_indices = @transform_7, window_bounds = array<i64: 1, 32>}, {pipeline_mode = #tpu.pipeline_mode<synchronous>, transform_indices = @transform_8, window_bounds = array<i64: 1, 32>}, {pipeline_mode = #tpu.pipeline_mode<synchronous>, transform_indices = @transform_9, window_bounds = array<i64: 32, 64>}, {pipeline_mode = #tpu.pipeline_mode<synchronous>, transform_indices = @transform_10, window_bounds = array<i64: 1, 64>}, {pipeline_mode = #tpu.pipeline_mode<synchronous>, transform_indices = @transform_11, window_bounds = array<i64: 64, 32>}, {pipeline_mode = #tpu.pipeline_mode<synchronous>, transform_indices = @transform_12, window_bounds = array<i64: 1, 32>}, {transform_indices = @transform_13, window_bounds = array<i64: 1, 8, 32>}]} {
    %c0 = arith.constant 0 : index
    %c0_0 = arith.constant 0 : index
    %c0_1 = arith.constant 0 : index
    %0 = vector.load %arg1[%c0, %c0_0, %c0_1] : memref<1x8x32xf32, #tpu.memory_space<vmem>>, vector<1x8x32xf32>
    %1 = vector.shape_cast %0 : vector<1x8x32xf32> to vector<8x32xf32>
    %c0_2 = arith.constant 0 : index
    %c0_3 = arith.constant 0 : index
    %2 = vector.load %arg2[%c0_2, %c0_3] : memref<1x32xf32, #tpu.memory_space<vmem>>, vector<1x32xf32>
    %3 = vector.shape_cast %2 : vector<1x32xf32> to vector<32xf32>
    %c0_4 = arith.constant 0 : index
    %c0_5 = arith.constant 0 : index
    %4 = vector.load %arg3[%c0_4, %c0_5] : memref<1x32xf32, #tpu.memory_space<vmem>>, vector<1x32xf32>
    %5 = vector.shape_cast %4 : vector<1x32xf32> to vector<32xf32>
    %cst = arith.constant dense<0.000000e+00> : vector<8xf32>
    %6 = vector.multi_reduction <add>, %1, %cst [1] : vector<8x32xf32> to vector<8xf32>
    %7 = vector.shape_cast %6 : vector<8xf32> to vector<8x1xf32>
    %cst_6 = arith.constant 3.200000e+01 : f32
    %8 = vector.broadcast %cst_6 : f32 to vector<8x1xf32>
    %9 = arith.divf %7, %8 : vector<8x1xf32>
    %10 = vector.broadcast %9 : vector<8x1xf32> to vector<8x32xf32>
    %11 = arith.subf %1, %10 : vector<8x32xf32>
    %12 = arith.mulf %11, %11 : vector<8x32xf32>
    %cst_7 = arith.constant dense<0.000000e+00> : vector<8xf32>
    %13 = vector.multi_reduction <add>, %12, %cst_7 [1] : vector<8x32xf32> to vector<8xf32>
    %14 = vector.shape_cast %13 : vector<8xf32> to vector<8x1xf32>
    %cst_8 = arith.constant 3.200000e+01 : f32
    %15 = vector.broadcast %cst_8 : f32 to vector<8x1xf32>
    %16 = arith.divf %14, %15 : vector<8x1xf32>
    %17 = vector.broadcast %9 : vector<8x1xf32> to vector<8x32xf32>
    %18 = arith.subf %1, %17 : vector<8x32xf32>
    %cst_9 = arith.constant 9.99999974E-6 : f32
    %19 = vector.broadcast %cst_9 : f32 to vector<8x1xf32>
    %20 = arith.addf %16, %19 : vector<8x1xf32>
    %21 = math.rsqrt %20 : vector<8x1xf32>
    %22 = vector.broadcast %21 : vector<8x1xf32> to vector<8x32xf32>
    %23 = arith.mulf %18, %22 : vector<8x32xf32>
    %24 = vector.shape_cast %3 : vector<32xf32> to vector<1x32xf32>
    %25 = vector.broadcast %24 : vector<1x32xf32> to vector<8x32xf32>
    %26 = arith.mulf %23, %25 : vector<8x32xf32>
    %27 = vector.shape_cast %5 : vector<32xf32> to vector<1x32xf32>
    %28 = vector.broadcast %27 : vector<1x32xf32> to vector<8x32xf32>
    %29 = arith.addf %26, %28 : vector<8x32xf32>
    %30 = arith.truncf %29 : vector<8x32xf32> to vector<8x32xbf16>
    %c0_10 = arith.constant 0 : index
    %c0_11 = arith.constant 0 : index
    %31 = vector.load %arg4[%c0_10, %c0_11] : memref<32x96xbf16, #tpu.memory_space<vmem>>, vector<32x96xbf16>
    %cst_12 = arith.constant dense<0.000000e+00> : vector<8x96xf32>
    %32 = tpu.matmul %30, %31, %cst_12 {dimension_numbers = #tpu.dot_dimension_numbers<[1], [0], [0], [1], [0, 0, 1, 1], [], []>} : vector<8x32xbf16>, vector<32x96xbf16>, vector<8x96xf32> -> vector<8x96xf32>
    %c0_13 = arith.constant 0 : index
    %c0_14 = arith.constant 0 : index
    %33 = vector.load %arg5[%c0_13, %c0_14] : memref<1x96xf32, #tpu.memory_space<vmem>>, vector<1x96xf32>
    %34 = vector.shape_cast %33 : vector<1x96xf32> to vector<96xf32>
    %35 = vector.shape_cast %34 : vector<96xf32> to vector<1x96xf32>
    %36 = vector.broadcast %35 : vector<1x96xf32> to vector<8x96xf32>
    %37 = arith.addf %32, %36 : vector<8x96xf32>
    %38 = tpu.iota {dimensions = array<i32: 0>} : vector<8x8xi32>
    %39 = tpu.iota {dimensions = array<i32: 1>} : vector<8x8xi32>
    %40 = arith.cmpi sle, %39, %38 : vector<8x8xi32>
    %cst_15 = arith.constant 0.000000e+00 : f32
    %41 = vector.broadcast %cst_15 : f32 to vector<8x32xf32>
    %42 = vector.extract_strided_slice %37 {offsets = [0, 0], sizes = [8, 8], strides = [1, 1]} : vector<8x96xf32> to vector<8x8xf32>
    %43 = vector.shape_cast %42 : vector<8x8xf32> to vector<1x8x8xf32>
    %44 = arith.truncf %43 : vector<1x8x8xf32> to vector<1x8x8xbf16>
    %45 = vector.extract_strided_slice %37 {offsets = [0, 32], sizes = [8, 8], strides = [1, 1]} : vector<8x96xf32> to vector<8x8xf32>
    %46 = vector.shape_cast %45 : vector<8x8xf32> to vector<1x8x8xf32>
    %47 = arith.truncf %46 : vector<1x8x8xf32> to vector<1x8x8xbf16>
    %48 = vector.extract_strided_slice %37 {offsets = [0, 64], sizes = [8, 8], strides = [1, 1]} : vector<8x96xf32> to vector<8x8xf32>
    %49 = vector.shape_cast %48 : vector<8x8xf32> to vector<1x8x8xf32>
    %50 = arith.truncf %49 : vector<1x8x8xf32> to vector<1x8x8xbf16>
    "tpu.trace_start"() <{level = 10 : i32, message = "bqd,bkd->bqk"}> : () -> ()
    %cst_16 = arith.constant dense<0.000000e+00> : vector<1x8x8xf32>
    %51 = tpu.matmul %44, %47, %cst_16 {dimension_numbers = #tpu.dot_dimension_numbers<[2], [2], [1], [1], [0, 0, 0, 1, 1, 1], [0], [0]>} : vector<1x8x8xbf16>, vector<1x8x8xbf16>, vector<1x8x8xf32> -> vector<1x8x8xf32>
    "tpu.trace_stop"() : () -> ()
    %52 = vector.shape_cast %40 : vector<8x8xi1> to vector<1x8x8xi1>
    %cst_17 = arith.constant 0xFF800000 : f32
    %53 = vector.broadcast %cst_17 : f32 to vector<1x8x8xf32>
    %54 = arith.select %52, %51, %53 : vector<1x8x8xi1>, vector<1x8x8xf32>
    %cst_18 = arith.constant dense<0xFF800000> : vector<1x8xf32>
    %55 = vector.multi_reduction <maximumf>, %54, %cst_18 [2] : vector<1x8x8xf32> to vector<1x8xf32>
    %56 = vector.shape_cast %55 : vector<1x8xf32> to vector<1x8x1xf32>
    %57 = vector.broadcast %56 : vector<1x8x1xf32> to vector<1x8x8xf32>
    %58 = arith.subf %54, %57 : vector<1x8x8xf32>
    %59 = math.exp %58 : vector<1x8x8xf32>
    %cst_19 = arith.constant dense<0.000000e+00> : vector<1x8xf32>
    %60 = vector.multi_reduction <add>, %59, %cst_19 [2] : vector<1x8x8xf32> to vector<1x8xf32>
    %61 = vector.shape_cast %60 : vector<1x8xf32> to vector<1x8x1xf32>
    %62 = arith.truncf %59 : vector<1x8x8xf32> to vector<1x8x8xbf16>
    "tpu.trace_start"() <{level = 10 : i32, message = "bqk,bkd->bqd"}> : () -> ()
    %cst_20 = arith.constant dense<0.000000e+00> : vector<1x8x8xf32>
    %63 = tpu.matmul %62, %50, %cst_20 {dimension_numbers = #tpu.dot_dimension_numbers<[2], [1], [1], [2], [0, 0, 0, 1, 1, 2], [0], [0]>} : vector<1x8x8xbf16>, vector<1x8x8xbf16>, vector<1x8x8xf32> -> vector<1x8x8xf32>
    "tpu.trace_stop"() : () -> ()
    %64 = tpu.reciprocal %61 {approx = true} : vector<1x8x1xf32> -> vector<1x8x1xf32>
    %65 = vector.broadcast %64 : vector<1x8x1xf32> to vector<1x8x8xf32>
    %66 = arith.mulf %63, %65 : vector<1x8x8xf32>
    %67 = vector.shape_cast %66 : vector<1x8x8xf32> to vector<8x8xf32>
    %68 = arith.truncf %67 : vector<8x8xf32> to vector<8x8xbf16>
    %c0_21 = arith.constant 0 : index
    %c0_22 = arith.constant 0 : index
    %c0_23 = arith.constant 0 : index
    %69 = vector.load %arg6[%c0_21, %c0_22, %c0_23] : memref<4x8x32xbf16, #tpu.memory_space<vmem>>, vector<1x8x32xbf16>
    %70 = vector.shape_cast %69 : vector<1x8x32xbf16> to vector<8x32xbf16>
    %cst_24 = arith.constant dense<0.000000e+00> : vector<8x32xf32>
    %71 = tpu.matmul %68, %70, %cst_24 {dimension_numbers = #tpu.dot_dimension_numbers<[1], [0], [0], [1], [0, 0, 1, 1], [], []>} : vector<8x8xbf16>, vector<8x32xbf16>, vector<8x32xf32> -> vector<8x32xf32>
    %72 = arith.addf %41, %71 : vector<8x32xf32>
    %73 = vector.extract_strided_slice %37 {offsets = [0, 8], sizes = [8, 8], strides = [1, 1]} : vector<8x96xf32> to vector<8x8xf32>
    %74 = vector.shape_cast %73 : vector<8x8xf32> to vector<1x8x8xf32>
    %75 = arith.truncf %74 : vector<1x8x8xf32> to vector<1x8x8xbf16>
    %76 = vector.extract_strided_slice %37 {offsets = [0, 40], sizes = [8, 8], strides = [1, 1]} : vector<8x96xf32> to vector<8x8xf32>
    %77 = vector.shape_cast %76 : vector<8x8xf32> to vector<1x8x8xf32>
    %78 = arith.truncf %77 : vector<1x8x8xf32> to vector<1x8x8xbf16>
    %79 = vector.extract_strided_slice %37 {offsets = [0, 72], sizes = [8, 8], strides = [1, 1]} : vector<8x96xf32> to vector<8x8xf32>
    %80 = vector.shape_cast %79 : vector<8x8xf32> to vector<1x8x8xf32>
    %81 = arith.truncf %80 : vector<1x8x8xf32> to vector<1x8x8xbf16>
    "tpu.trace_start"() <{level = 10 : i32, message = "bqd,bkd->bqk"}> : () -> ()
    %cst_25 = arith.constant dense<0.000000e+00> : vector<1x8x8xf32>
    %82 = tpu.matmul %75, %78, %cst_25 {dimension_numbers = #tpu.dot_dimension_numbers<[2], [2], [1], [1], [0, 0, 0, 1, 1, 1], [0], [0]>} : vector<1x8x8xbf16>, vector<1x8x8xbf16>, vector<1x8x8xf32> -> vector<1x8x8xf32>
    "tpu.trace_stop"() : () -> ()
    %83 = vector.shape_cast %40 : vector<8x8xi1> to vector<1x8x8xi1>
    %cst_26 = arith.constant 0xFF800000 : f32
    %84 = vector.broadcast %cst_26 : f32 to vector<1x8x8xf32>
    %85 = arith.select %83, %82, %84 : vector<1x8x8xi1>, vector<1x8x8xf32>
    %cst_27 = arith.constant dense<0xFF800000> : vector<1x8xf32>
    %86 = vector.multi_reduction <maximumf>, %85, %cst_27 [2] : vector<1x8x8xf32> to vector<1x8xf32>
    %87 = vector.shape_cast %86 : vector<1x8xf32> to vector<1x8x1xf32>
    %88 = vector.broadcast %87 : vector<1x8x1xf32> to vector<1x8x8xf32>
    %89 = arith.subf %85, %88 : vector<1x8x8xf32>
    %90 = math.exp %89 : vector<1x8x8xf32>
    %cst_28 = arith.constant dense<0.000000e+00> : vector<1x8xf32>
    %91 = vector.multi_reduction <add>, %90, %cst_28 [2] : vector<1x8x8xf32> to vector<1x8xf32>
    %92 = vector.shape_cast %91 : vector<1x8xf32> to vector<1x8x1xf32>
    %93 = arith.truncf %90 : vector<1x8x8xf32> to vector<1x8x8xbf16>
    "tpu.trace_start"() <{level = 10 : i32, message = "bqk,bkd->bqd"}> : () -> ()
    %cst_29 = arith.constant dense<0.000000e+00> : vector<1x8x8xf32>
    %94 = tpu.matmul %93, %81, %cst_29 {dimension_numbers = #tpu.dot_dimension_numbers<[2], [1], [1], [2], [0, 0, 0, 1, 1, 2], [0], [0]>} : vector<1x8x8xbf16>, vector<1x8x8xbf16>, vector<1x8x8xf32> -> vector<1x8x8xf32>
    "tpu.trace_stop"() : () -> ()
    %95 = tpu.reciprocal %92 {approx = true} : vector<1x8x1xf32> -> vector<1x8x1xf32>
    %96 = vector.broadcast %95 : vector<1x8x1xf32> to vector<1x8x8xf32>
    %97 = arith.mulf %94, %96 : vector<1x8x8xf32>
    %98 = vector.shape_cast %97 : vector<1x8x8xf32> to vector<8x8xf32>
    %99 = arith.truncf %98 : vector<8x8xf32> to vector<8x8xbf16>
    %c1 = arith.constant 1 : index
    %c0_30 = arith.constant 0 : index
    %c0_31 = arith.constant 0 : index
    %100 = vector.load %arg6[%c1, %c0_30, %c0_31] : memref<4x8x32xbf16, #tpu.memory_space<vmem>>, vector<1x8x32xbf16>
    %101 = vector.shape_cast %100 : vector<1x8x32xbf16> to vector<8x32xbf16>
    %cst_32 = arith.constant dense<0.000000e+00> : vector<8x32xf32>
    %102 = tpu.matmul %99, %101, %cst_32 {dimension_numbers = #tpu.dot_dimension_numbers<[1], [0], [0], [1], [0, 0, 1, 1], [], []>} : vector<8x8xbf16>, vector<8x32xbf16>, vector<8x32xf32> -> vector<8x32xf32>
    %103 = arith.addf %72, %102 : vector<8x32xf32>
    %104 = vector.extract_strided_slice %37 {offsets = [0, 16], sizes = [8, 8], strides = [1, 1]} : vector<8x96xf32> to vector<8x8xf32>
    %105 = vector.shape_cast %104 : vector<8x8xf32> to vector<1x8x8xf32>
    %106 = arith.truncf %105 : vector<1x8x8xf32> to vector<1x8x8xbf16>
    %107 = vector.extract_strided_slice %37 {offsets = [0, 48], sizes = [8, 8], strides = [1, 1]} : vector<8x96xf32> to vector<8x8xf32>
    %108 = vector.shape_cast %107 : vector<8x8xf32> to vector<1x8x8xf32>
    %109 = arith.truncf %108 : vector<1x8x8xf32> to vector<1x8x8xbf16>
    %110 = vector.extract_strided_slice %37 {offsets = [0, 80], sizes = [8, 8], strides = [1, 1]} : vector<8x96xf32> to vector<8x8xf32>
    %111 = vector.shape_cast %110 : vector<8x8xf32> to vector<1x8x8xf32>
    %112 = arith.truncf %111 : vector<1x8x8xf32> to vector<1x8x8xbf16>
    "tpu.trace_start"() <{level = 10 : i32, message = "bqd,bkd->bqk"}> : () -> ()
    %cst_33 = arith.constant dense<0.000000e+00> : vector<1x8x8xf32>
    %113 = tpu.matmul %106, %109, %cst_33 {dimension_numbers = #tpu.dot_dimension_numbers<[2], [2], [1], [1], [0, 0, 0, 1, 1, 1], [0], [0]>} : vector<1x8x8xbf16>, vector<1x8x8xbf16>, vector<1x8x8xf32> -> vector<1x8x8xf32>
    "tpu.trace_stop"() : () -> ()
    %114 = vector.shape_cast %40 : vector<8x8xi1> to vector<1x8x8xi1>
    %cst_34 = arith.constant 0xFF800000 : f32
    %115 = vector.broadcast %cst_34 : f32 to vector<1x8x8xf32>
    %116 = arith.select %114, %113, %115 : vector<1x8x8xi1>, vector<1x8x8xf32>
    %cst_35 = arith.constant dense<0xFF800000> : vector<1x8xf32>
    %117 = vector.multi_reduction <maximumf>, %116, %cst_35 [2] : vector<1x8x8xf32> to vector<1x8xf32>
    %118 = vector.shape_cast %117 : vector<1x8xf32> to vector<1x8x1xf32>
    %119 = vector.broadcast %118 : vector<1x8x1xf32> to vector<1x8x8xf32>
    %120 = arith.subf %116, %119 : vector<1x8x8xf32>
    %121 = math.exp %120 : vector<1x8x8xf32>
    %cst_36 = arith.constant dense<0.000000e+00> : vector<1x8xf32>
    %122 = vector.multi_reduction <add>, %121, %cst_36 [2] : vector<1x8x8xf32> to vector<1x8xf32>
    %123 = vector.shape_cast %122 : vector<1x8xf32> to vector<1x8x1xf32>
    %124 = arith.truncf %121 : vector<1x8x8xf32> to vector<1x8x8xbf16>
    "tpu.trace_start"() <{level = 10 : i32, message = "bqk,bkd->bqd"}> : () -> ()
    %cst_37 = arith.constant dense<0.000000e+00> : vector<1x8x8xf32>
    %125 = tpu.matmul %124, %112, %cst_37 {dimension_numbers = #tpu.dot_dimension_numbers<[2], [1], [1], [2], [0, 0, 0, 1, 1, 2], [0], [0]>} : vector<1x8x8xbf16>, vector<1x8x8xbf16>, vector<1x8x8xf32> -> vector<1x8x8xf32>
    "tpu.trace_stop"() : () -> ()
    %126 = tpu.reciprocal %123 {approx = true} : vector<1x8x1xf32> -> vector<1x8x1xf32>
    %127 = vector.broadcast %126 : vector<1x8x1xf32> to vector<1x8x8xf32>
    %128 = arith.mulf %125, %127 : vector<1x8x8xf32>
    %129 = vector.shape_cast %128 : vector<1x8x8xf32> to vector<8x8xf32>
    %130 = arith.truncf %129 : vector<8x8xf32> to vector<8x8xbf16>
    %c2 = arith.constant 2 : index
    %c0_38 = arith.constant 0 : index
    %c0_39 = arith.constant 0 : index
    %131 = vector.load %arg6[%c2, %c0_38, %c0_39] : memref<4x8x32xbf16, #tpu.memory_space<vmem>>, vector<1x8x32xbf16>
    %132 = vector.shape_cast %131 : vector<1x8x32xbf16> to vector<8x32xbf16>
    %cst_40 = arith.constant dense<0.000000e+00> : vector<8x32xf32>
    %133 = tpu.matmul %130, %132, %cst_40 {dimension_numbers = #tpu.dot_dimension_numbers<[1], [0], [0], [1], [0, 0, 1, 1], [], []>} : vector<8x8xbf16>, vector<8x32xbf16>, vector<8x32xf32> -> vector<8x32xf32>
    %134 = arith.addf %103, %133 : vector<8x32xf32>
    %135 = vector.extract_strided_slice %37 {offsets = [0, 24], sizes = [8, 8], strides = [1, 1]} : vector<8x96xf32> to vector<8x8xf32>
    %136 = vector.shape_cast %135 : vector<8x8xf32> to vector<1x8x8xf32>
    %137 = arith.truncf %136 : vector<1x8x8xf32> to vector<1x8x8xbf16>
    %138 = vector.extract_strided_slice %37 {offsets = [0, 56], sizes = [8, 8], strides = [1, 1]} : vector<8x96xf32> to vector<8x8xf32>
    %139 = vector.shape_cast %138 : vector<8x8xf32> to vector<1x8x8xf32>
    %140 = arith.truncf %139 : vector<1x8x8xf32> to vector<1x8x8xbf16>
    %141 = vector.extract_strided_slice %37 {offsets = [0, 88], sizes = [8, 8], strides = [1, 1]} : vector<8x96xf32> to vector<8x8xf32>
    %142 = vector.shape_cast %141 : vector<8x8xf32> to vector<1x8x8xf32>
    %143 = arith.truncf %142 : vector<1x8x8xf32> to vector<1x8x8xbf16>
    "tpu.trace_start"() <{level = 10 : i32, message = "bqd,bkd->bqk"}> : () -> ()
    %cst_41 = arith.constant dense<0.000000e+00> : vector<1x8x8xf32>
    %144 = tpu.matmul %137, %140, %cst_41 {dimension_numbers = #tpu.dot_dimension_numbers<[2], [2], [1], [1], [0, 0, 0, 1, 1, 1], [0], [0]>} : vector<1x8x8xbf16>, vector<1x8x8xbf16>, vector<1x8x8xf32> -> vector<1x8x8xf32>
    "tpu.trace_stop"() : () -> ()
    %145 = vector.shape_cast %40 : vector<8x8xi1> to vector<1x8x8xi1>
    %cst_42 = arith.constant 0xFF800000 : f32
    %146 = vector.broadcast %cst_42 : f32 to vector<1x8x8xf32>
    %147 = arith.select %145, %144, %146 : vector<1x8x8xi1>, vector<1x8x8xf32>
    %cst_43 = arith.constant dense<0xFF800000> : vector<1x8xf32>
    %148 = vector.multi_reduction <maximumf>, %147, %cst_43 [2] : vector<1x8x8xf32> to vector<1x8xf32>
    %149 = vector.shape_cast %148 : vector<1x8xf32> to vector<1x8x1xf32>
    %150 = vector.broadcast %149 : vector<1x8x1xf32> to vector<1x8x8xf32>
    %151 = arith.subf %147, %150 : vector<1x8x8xf32>
    %152 = math.exp %151 : vector<1x8x8xf32>
    %cst_44 = arith.constant dense<0.000000e+00> : vector<1x8xf32>
    %153 = vector.multi_reduction <add>, %152, %cst_44 [2] : vector<1x8x8xf32> to vector<1x8xf32>
    %154 = vector.shape_cast %153 : vector<1x8xf32> to vector<1x8x1xf32>
    %155 = arith.truncf %152 : vector<1x8x8xf32> to vector<1x8x8xbf16>
    "tpu.trace_start"() <{level = 10 : i32, message = "bqk,bkd->bqd"}> : () -> ()
    %cst_45 = arith.constant dense<0.000000e+00> : vector<1x8x8xf32>
    %156 = tpu.matmul %155, %143, %cst_45 {dimension_numbers = #tpu.dot_dimension_numbers<[2], [1], [1], [2], [0, 0, 0, 1, 1, 2], [0], [0]>} : vector<1x8x8xbf16>, vector<1x8x8xbf16>, vector<1x8x8xf32> -> vector<1x8x8xf32>
    "tpu.trace_stop"() : () -> ()
    %157 = tpu.reciprocal %154 {approx = true} : vector<1x8x1xf32> -> vector<1x8x1xf32>
    %158 = vector.broadcast %157 : vector<1x8x1xf32> to vector<1x8x8xf32>
    %159 = arith.mulf %156, %158 : vector<1x8x8xf32>
    %160 = vector.shape_cast %159 : vector<1x8x8xf32> to vector<8x8xf32>
    %161 = arith.truncf %160 : vector<8x8xf32> to vector<8x8xbf16>
    %c3 = arith.constant 3 : index
    %c0_46 = arith.constant 0 : index
    %c0_47 = arith.constant 0 : index
    %162 = vector.load %arg6[%c3, %c0_46, %c0_47] : memref<4x8x32xbf16, #tpu.memory_space<vmem>>, vector<1x8x32xbf16>
    %163 = vector.shape_cast %162 : vector<1x8x32xbf16> to vector<8x32xbf16>
    %cst_48 = arith.constant dense<0.000000e+00> : vector<8x32xf32>
    %164 = tpu.matmul %161, %163, %cst_48 {dimension_numbers = #tpu.dot_dimension_numbers<[1], [0], [0], [1], [0, 0, 1, 1], [], []>} : vector<8x8xbf16>, vector<8x32xbf16>, vector<8x32xf32> -> vector<8x32xf32>
    %165 = arith.addf %134, %164 : vector<8x32xf32>
    %c0_49 = arith.constant 0 : index
    %c0_50 = arith.constant 0 : index
    %166 = vector.load %arg7[%c0_49, %c0_50] : memref<1x32xf32, #tpu.memory_space<vmem>>, vector<1x32xf32>
    %167 = vector.shape_cast %166 : vector<1x32xf32> to vector<32xf32>
    %168 = vector.shape_cast %167 : vector<32xf32> to vector<1x32xf32>
    %169 = vector.broadcast %168 : vector<1x32xf32> to vector<8x32xf32>
    %170 = arith.addf %165, %169 : vector<8x32xf32>
    %171 = arith.addf %1, %170 : vector<8x32xf32>
    %c0_51 = arith.constant 0 : index
    %c0_52 = arith.constant 0 : index
    %172 = vector.load %arg8[%c0_51, %c0_52] : memref<1x32xf32, #tpu.memory_space<vmem>>, vector<1x32xf32>
    %173 = vector.shape_cast %172 : vector<1x32xf32> to vector<32xf32>
    %c0_53 = arith.constant 0 : index
    %c0_54 = arith.constant 0 : index
    %174 = vector.load %arg9[%c0_53, %c0_54] : memref<1x32xf32, #tpu.memory_space<vmem>>, vector<1x32xf32>
    %175 = vector.shape_cast %174 : vector<1x32xf32> to vector<32xf32>
    %cst_55 = arith.constant dense<0.000000e+00> : vector<8xf32>
    %176 = vector.multi_reduction <add>, %171, %cst_55 [1] : vector<8x32xf32> to vector<8xf32>
    %177 = vector.shape_cast %176 : vector<8xf32> to vector<8x1xf32>
    %cst_56 = arith.constant 3.200000e+01 : f32
    %178 = vector.broadcast %cst_56 : f32 to vector<8x1xf32>
    %179 = arith.divf %177, %178 : vector<8x1xf32>
    %180 = vector.broadcast %179 : vector<8x1xf32> to vector<8x32xf32>
    %181 = arith.subf %171, %180 : vector<8x32xf32>
    %182 = arith.mulf %181, %181 : vector<8x32xf32>
    %cst_57 = arith.constant dense<0.000000e+00> : vector<8xf32>
    %183 = vector.multi_reduction <add>, %182, %cst_57 [1] : vector<8x32xf32> to vector<8xf32>
    %184 = vector.shape_cast %183 : vector<8xf32> to vector<8x1xf32>
    %cst_58 = arith.constant 3.200000e+01 : f32
    %185 = vector.broadcast %cst_58 : f32 to vector<8x1xf32>
    %186 = arith.divf %184, %185 : vector<8x1xf32>
    %187 = vector.broadcast %179 : vector<8x1xf32> to vector<8x32xf32>
    %188 = arith.subf %171, %187 : vector<8x32xf32>
    %cst_59 = arith.constant 9.99999974E-6 : f32
    %189 = vector.broadcast %cst_59 : f32 to vector<8x1xf32>
    %190 = arith.addf %186, %189 : vector<8x1xf32>
    %191 = math.rsqrt %190 : vector<8x1xf32>
    %192 = vector.broadcast %191 : vector<8x1xf32> to vector<8x32xf32>
    %193 = arith.mulf %188, %192 : vector<8x32xf32>
    %194 = vector.shape_cast %173 : vector<32xf32> to vector<1x32xf32>
    %195 = vector.broadcast %194 : vector<1x32xf32> to vector<8x32xf32>
    %196 = arith.mulf %193, %195 : vector<8x32xf32>
    %197 = vector.shape_cast %175 : vector<32xf32> to vector<1x32xf32>
    %198 = vector.broadcast %197 : vector<1x32xf32> to vector<8x32xf32>
    %199 = arith.addf %196, %198 : vector<8x32xf32>
    %200 = arith.truncf %199 : vector<8x32xf32> to vector<8x32xbf16>
    %c0_60 = arith.constant 0 : index
    %c0_61 = arith.constant 0 : index
    %201 = vector.load %arg10[%c0_60, %c0_61] : memref<32x64xbf16, #tpu.memory_space<vmem>>, vector<32x64xbf16>
    %cst_62 = arith.constant dense<0.000000e+00> : vector<8x64xf32>
    %202 = tpu.matmul %200, %201, %cst_62 {dimension_numbers = #tpu.dot_dimension_numbers<[1], [0], [0], [1], [0, 0, 1, 1], [], []>} : vector<8x32xbf16>, vector<32x64xbf16>, vector<8x64xf32> -> vector<8x64xf32>
    %c0_63 = arith.constant 0 : index
    %c0_64 = arith.constant 0 : index
    %203 = vector.load %arg11[%c0_63, %c0_64] : memref<1x64xf32, #tpu.memory_space<vmem>>, vector<1x64xf32>
    %204 = vector.shape_cast %203 : vector<1x64xf32> to vector<64xf32>
    %205 = vector.shape_cast %204 : vector<64xf32> to vector<1x64xf32>
    %206 = vector.broadcast %205 : vector<1x64xf32> to vector<8x64xf32>
    %207 = arith.addf %202, %206 : vector<8x64xf32>
    %cst_65 = arith.constant 5.000000e-01 : f32
    %208 = vector.broadcast %cst_65 : f32 to vector<8x64xf32>
    %209 = arith.mulf %208, %207 : vector<8x64xf32>
    %cst_66 = arith.constant 0.707106769 : f32
    %210 = vector.broadcast %cst_66 : f32 to vector<8x64xf32>
    %211 = arith.mulf %207, %210 : vector<8x64xf32>
    %212 = math.erf %211 : vector<8x64xf32>
    %cst_67 = arith.constant 1.000000e+00 : f32
    %213 = vector.broadcast %cst_67 : f32 to vector<8x64xf32>
    %214 = arith.addf %213, %212 : vector<8x64xf32>
    %215 = arith.mulf %209, %214 : vector<8x64xf32>
    %216 = arith.truncf %215 : vector<8x64xf32> to vector<8x64xbf16>
    %c0_68 = arith.constant 0 : index
    %c0_69 = arith.constant 0 : index
    %217 = vector.load %arg12[%c0_68, %c0_69] : memref<64x32xbf16, #tpu.memory_space<vmem>>, vector<64x32xbf16>
    %cst_70 = arith.constant dense<0.000000e+00> : vector<8x32xf32>
    %218 = tpu.matmul %216, %217, %cst_70 {dimension_numbers = #tpu.dot_dimension_numbers<[1], [0], [0], [1], [0, 0, 1, 1], [], []>} : vector<8x64xbf16>, vector<64x32xbf16>, vector<8x32xf32> -> vector<8x32xf32>
    %c0_71 = arith.constant 0 : index
    %c0_72 = arith.constant 0 : index
    %219 = vector.load %arg13[%c0_71, %c0_72] : memref<1x32xf32, #tpu.memory_space<vmem>>, vector<1x32xf32>
    %220 = vector.shape_cast %219 : vector<1x32xf32> to vector<32xf32>
    %221 = vector.shape_cast %220 : vector<32xf32> to vector<1x32xf32>
    %222 = vector.broadcast %221 : vector<1x32xf32> to vector<8x32xf32>
    %223 = arith.addf %218, %222 : vector<8x32xf32>
    %224 = arith.addf %171, %223 : vector<8x32xf32>
    %225 = vector.shape_cast %224 : vector<8x32xf32> to vector<1x8x32xf32>
    %c0_73 = arith.constant 0 : index
    %c0_74 = arith.constant 0 : index
    %c0_75 = arith.constant 0 : index
    %226 = vector.load %arg14[%c0_73, %c0_74, %c0_75] : memref<1x8x32xf32, #tpu.memory_space<vmem>>, vector<1x8x32xf32>
    tpu.vector_store %arg14[%c0_73, %c0_74, %c0_75], %225 {strides = array<i32>} : memref<1x8x32xf32, #tpu.memory_space<vmem>>, vector<1x8x32xf32>,
    return
  }
  func.func @transform_0(%arg0: i32) -> (i32, i32, i32) {
    %c0_i32 = arith.constant 0 : i32
    %c0_i32_0 = arith.constant 0 : i32
    %c0_i32_1 = arith.constant 0 : i32
    return %arg0, %c0_i32, %c0_i32_0 : i32, i32, i32
  }
  func.func @transform_1(%arg0: i32) -> (i32, i32) {
    %c0_i32 = arith.constant 0 : i32
    %c0_i32_0 = arith.constant 0 : i32
    %c0_i32_1 = arith.constant 0 : i32
    return %c0_i32, %c0_i32_0 : i32, i32
  }
  func.func @transform_2(%arg0: i32) -> (i32, i32) {
    %c0_i32 = arith.constant 0 : i32
    %c0_i32_0 = arith.constant 0 : i32
    %c0_i32_1 = arith.constant 0 : i32
    return %c0_i32, %c0_i32_0 : i32, i32
  }
  func.func @transform_3(%arg0: i32) -> (i32, i32) {
    %c0_i32 = arith.constant 0 : i32
    %c0_i32_0 = arith.constant 0 : i32
    %c0_i32_1 = arith.constant 0 : i32
    return %c0_i32, %c0_i32_0 : i32, i32
  }
  func.func @transform_4(%arg0: i32) -> (i32, i32) {
    %c0_i32 = arith.constant 0 : i32
    %c0_i32_0 = arith.constant 0 : i32
    %c0_i32_1 = arith.constant 0 : i32
    return %c0_i32, %c0_i32_0 : i32, i32
  }
  func.func @transform_5(%arg0: i32) -> (i32, i32, i32) {
    %c0_i32 = arith.constant 0 : i32
    %c0_i32_0 = arith.constant 0 : i32
    %c0_i32_1 = arith.constant 0 : i32
    %c0_i32_2 = arith.constant 0 : i32
    return %c0_i32, %c0_i32_0, %c0_i32_1 : i32, i32, i32
  }
  func.func @transform_6(%arg0: i32) -> (i32, i32) {
    %c0_i32 = arith.constant 0 : i32
    %c0_i32_0 = arith.constant 0 : i32
    %c0_i32_1 = arith.constant 0 : i32
    return %c0_i32, %c0_i32_0 : i32, i32
  }
  func.func @transform_7(%arg0: i32) -> (i32, i32) {
    %c0_i32 = arith.constant 0 : i32
    %c0_i32_0 = arith.constant 0 : i32
    %c0_i32_1 = arith.constant 0 : i32
    return %c0_i32, %c0_i32_0 : i32, i32
  }
  func.func @transform_8(%arg0: i32) -> (i32, i32) {
    %c0_i32 = arith.constant 0 : i32
    %c0_i32_0 = arith.constant 0 : i32
    %c0_i32_1 = arith.constant 0 : i32
    return %c0_i32, %c0_i32_0 : i32, i32
  }
  func.func @transform_9(%arg0: i32) -> (i32, i32) {
    %c0_i32 = arith.constant 0 : i32
    %c0_i32_0 = arith.constant 0 : i32
    %c0_i32_1 = arith.constant 0 : i32
    return %c0_i32, %c0_i32_0 : i32, i32
  }
  func.func @transform_10(%arg0: i32) -> (i32, i32) {
    %c0_i32 = arith.constant 0 : i32
    %c0_i32_0 = arith.constant 0 : i32
    %c0_i32_1 = arith.constant 0 : i32
    return %c0_i32, %c0_i32_0 : i32, i32
  }
  func.func @transform_11(%arg0: i32) -> (i32, i32) {
    %c0_i32 = arith.constant 0 : i32
    %c0_i32_0 = arith.constant 0 : i32
    %c0_i32_1 = arith.constant 0 : i32
    return %c0_i32, %c0_i32_0 : i32, i32
  }
  func.func @transform_12(%arg0: i32) -> (i32, i32) {
    %c0_i32 = arith.constant 0 : i32
    %c0_i32_0 = arith.constant 0 : i32
    %c0_i32_1 = arith.constant 0 : i32
    return %c0_i32, %c0_i32_0 : i32, i32
  }
  func.func @transform_13(%arg0: i32) -> (i32, i32, i32) {
    %c0_i32 = arith.constant 0 : i32
    %c0_i32_0 = arith.constant 0 : i32
    %c0_i32_1 = arith.constant 0 : i32
    return %arg0, %c0_i32, %c0_i32_0 : i32, i32, i32
  }
}

module attributes {stable_mosaic.version = 11 : i64} {
  func.func @transformer_block_kernel(%arg0: i32, %arg1: memref<1x8x32xf32, #tpu.memory_space<vmem>>, %arg2: memref<1x32xf32, #tpu.memory_space<vmem>>, %arg3: memref<1x32xf32, #tpu.memory_space<vmem>>, %arg4: memref<32x96xbf16, #tpu.memory_space<vmem>>, %arg5: memref<1x96xf32, #tpu.memory_space<vmem>>, %arg6: memref<4x8x32xbf16, #tpu.memory_space<vmem>>, %arg7: memref<1x32xf32, #tpu.memory_space<vmem>>, %arg8: memref<1x32xf32, #tpu.memory_space<vmem>>, %arg9: memref<1x32xf32, #tpu.memory_space<vmem>>, %arg10: memref<32x64xbf16, #tpu.memory_space<vmem>>, %arg11: memref<1x64xf32, #tpu.memory_space<vmem>>, %arg12: memref<64x32xbf16, #tpu.memory_space<vmem>>, %arg13: memref<1x32xf32, #tpu.memory_space<vmem>>, %arg14: memref<1x8x32xf32, #tpu.memory_space<vmem>>) attributes {dimension_semantics = [#tpu.dimension_semantics<parallel>], iteration_bounds = array<i64: 2>, scalar_prefetch = 0 : i64, scratch_operands = 0 : i64, tpu.core_type = #tpu.core_type<tc>, window_params = [{transform_indices = @transform_0, window_bounds = array<i64: 1, 8, 32>}, {pipeline_mode = #tpu.pipeline_mode<synchronous>, transform_indices = @transform_1, window_bounds = array<i64: 1, 32>}, {pipeline_mode = #tpu.pipeline_mode<synchronous>, transform_indices = @transform_2, window_bounds = array<i64: 1, 32>}, {pipeline_mode = #tpu.pipeline_mode<synchronous>, transform_indices = @transform_3, window_bounds = array<i64: 32, 96>}, {pipeline_mode = #tpu.pipeline_mode<synchronous>, transform_indices = @transform_4, window_bounds = array<i64: 1, 96>}, {pipeline_mode = #tpu.pipeline_mode<synchronous>, transform_indices = @transform_5, window_bounds = array<i64: 4, 8, 32>}, {pipeline_mode = #tpu.pipeline_mode<synchronous>, transform_indices = @transform_6, window_bounds = array<i64: 1, 32>}, {pipeline_mode = #tpu.pipeline_mode<synchronous>, transform_indices = @transform_7, window_bounds = array<i64: 1, 32>}, {pipeline_mode = #tpu.pipeline_mode<synchronous>, transform_indices = @transform_8, window_bounds = array<i64: 1, 32>}, {pipeline_mode = #tpu.pipeline_mode<synchronous>, transform_indices = @transform_9, window_bounds = array<i64: 32, 64>}, {pipeline_mode = #tpu.pipeline_mode<synchronous>, transform_indices = @transform_10, window_bounds = array<i64: 1, 64>}, {pipeline_mode = #tpu.pipeline_mode<synchronous>, transform_indices = @transform_11, window_bounds = array<i64: 64, 32>}, {pipeline_mode = #tpu.pipeline_mode<synchronous>, transform_indices = @transform_12, window_bounds = array<i64: 1, 32>}, {transform_indices = @transform_13, window_bounds = array<i64: 1, 8, 32>}]} {
    %c0 = arith.constant 0 : index
    %c0_0 = arith.constant 0 : index
    %c0_1 = arith.constant 0 : index
    %0 = vector.load %arg1[%c0, %c0_0, %c0_1] : memref<1x8x32xf32, #tpu.memory_space<vmem>>, vector<1x8x32xf32>
    %1 = vector.shape_cast %0 : vector<1x8x32xf32> to vector<8x32xf32>
    %c0_2 = arith.constant 0 : index
    %c0_3 = arith.constant 0 : index
    %2 = vector.load %arg2[%c0_2, %c0_3] : memref<1x32xf32, #tpu.memory_space<vmem>>, vector<1x32xf32>
    %3 = vector.shape_cast %2 : vector<1x32xf32> to vector<32xf32>
    %c0_4 = arith.constant 0 : index
    %c0_5 = arith.constant 0 : index
    %4 = vector.load %arg3[%c0_4, %c0_5] : memref<1x32xf32, #tpu.memory_space<vmem>>, vector<1x32xf32>
    %5 = vector.shape_cast %4 : vector<1x32xf32> to vector<32xf32>
    %cst = arith.constant dense<0.000000e+00> : vector<8xf32>
    %6 = vector.multi_reduction <add>, %1, %cst [1] : vector<8x32xf32> to vector<8xf32>
    %7 = vector.shape_cast %6 : vector<8xf32> to vector<8x1xf32>
    %cst_6 = arith.constant 3.200000e+01 : f32
    %8 = vector.broadcast %cst_6 : f32 to vector<8x1xf32>
    %9 = arith.divf %7, %8 : vector<8x1xf32>
    %10 = vector.broadcast %9 : vector<8x1xf32> to vector<8x32xf32>
    %11 = arith.subf %1, %10 : vector<8x32xf32>
    %12 = arith.mulf %11, %11 : vector<8x32xf32>
    %cst_7 = arith.constant dense<0.000000e+00> : vector<8xf32>
    %13 = vector.multi_reduction <add>, %12, %cst_7 [1] : vector<8x32xf32> to vector<8xf32>
    %14 = vector.shape_cast %13 : vector<8xf32> to vector<8x1xf32>
    %cst_8 = arith.constant 3.200000e+01 : f32
    %15 = vector.broadcast %cst_8 : f32 to vector<8x1xf32>
    %16 = arith.divf %14, %15 : vector<8x1xf32>
    %17 = vector.broadcast %9 : vector<8x1xf32> to vector<8x32xf32>
    %18 = arith.subf %1, %17 : vector<8x32xf32>
    %cst_9 = arith.constant 9.99999974E-6 : f32
    %19 = vector.broadcast %cst_9 : f32 to vector<8x1xf32>
    %20 = arith.addf %16, %19 : vector<8x1xf32>
    %21 = math.rsqrt %20 : vector<8x1xf32>
    %22 = vector.broadcast %21 : vector<8x1xf32> to vector<8x32xf32>
    %23 = arith.mulf %18, %22 : vector<8x32xf32>
    %24 = vector.shape_cast %3 : vector<32xf32> to vector<1x32xf32>
    %25 = vector.broadcast %24 : vector<1x32xf32> to vector<8x32xf32>
    %26 = arith.mulf %23, %25 : vector<8x32xf32>
    %27 = vector.shape_cast %5 : vector<32xf32> to vector<1x32xf32>
    %28 = vector.broadcast %27 : vector<1x32xf32> to vector<8x32xf32>
    %29 = arith.addf %26, %28 : vector<8x32xf32>
    %30 = arith.truncf %29 : vector<8x32xf32> to vector<8x32xbf16>
    %c0_10 = arith.constant 0 : index
    %c0_11 = arith.constant 0 : index
    %31 = vector.load %arg4[%c0_10, %c0_11] : memref<32x96xbf16, #tpu.memory_space<vmem>>, vector<32x96xbf16>
    %cst_12 = arith.constant dense<0.000000e+00> : vector<8x96xf32>
    %32 = tpu.matmul %30, %31, %cst_12 {dimension_numbers = #tpu.dot_dimension_numbers<[1], [0], [0], [1], [0, 0, 1, 1], [], []>} : vector<8x32xbf16>, vector<32x96xbf16>, vector<8x96xf32> -> vector<8x96xf32>
    %c0_13 = arith.constant 0 : index
    %c0_14 = arith.constant 0 : index
    %33 = vector.load %arg5[%c0_13, %c0_14] : memref<1x96xf32, #tpu.memory_space<vmem>>, vector<1x96xf32>
    %34 = vector.shape_cast %33 : vector<1x96xf32> to vector<96xf32>
    %35 = vector.shape_cast %34 : vector<96xf32> to vector<1x96xf32>
    %36 = vector.broadcast %35 : vector<1x96xf32> to vector<8x96xf32>
    %37 = arith.addf %32, %36 : vector<8x96xf32>
    %38 = tpu.iota {dimensions = array<i32: 0>} : vector<8x8xi32>
    %39 = tpu.iota {dimensions = array<i32: 1>} : vector<8x8xi32>
    %40 = arith.cmpi sle, %39, %38 : vector<8x8xi32>
    %cst_15 = arith.constant 0.000000e+00 : f32
    %41 = vector.broadcast %cst_15 : f32 to vector<8x32xf32>
    %42 = vector.extract_strided_slice %37 {offsets = [0, 0], sizes = [8, 8], strides = [1, 1]} : vector<8x96xf32> to vector<8x8xf32>
    %43 = vector.shape_cast %42 : vector<8x8xf32> to vector<1x8x8xf32>
    %44 = arith.truncf %43 : vector<1x8x8xf32> to vector<1x8x8xbf16>
    %45 = vector.extract_strided_slice %37 {offsets = [0, 32], sizes = [8, 8], strides = [1, 1]} : vector<8x96xf32> to vector<8x8xf32>
    %46 = vector.shape_cast %45 : vector<8x8xf32> to vector<1x8x8xf32>
    %47 = arith.truncf %46 : vector<1x8x8xf32> to vector<1x8x8xbf16>
    %48 = vector.extract_strided_slice %37 {offsets = [0, 64], sizes = [8, 8], strides = [1, 1]} : vector<8x96xf32> to vector<8x8xf32>
    %49 = vector.shape_cast %48 : vector<8x8xf32> to vector<1x8x8xf32>
    %50 = arith.truncf %49 : vector<1x8x8xf32> to vector<1x8x8xbf16>
    "tpu.trace_start"() <{level = 10 : i32, message = "bqd,bkd->bqk"}> : () -> ()
    %cst_16 = arith.constant dense<0.000000e+00> : vector<1x8x8xf32>
    %51 = tpu.matmul %44, %47, %cst_16 {dimension_numbers = #tpu.dot_dimension_numbers<[2], [2], [1], [1], [0, 0, 0, 1, 1, 1], [0], [0]>} : vector<1x8x8xbf16>, vector<1x8x8xbf16>, vector<1x8x8xf32> -> vector<1x8x8xf32>
    "tpu.trace_stop"() : () -> ()
    %52 = vector.shape_cast %40 : vector<8x8xi1> to vector<1x8x8xi1>
    %cst_17 = arith.constant 0xFF800000 : f32
    %53 = vector.broadcast %cst_17 : f32 to vector<1x8x8xf32>
    %54 = arith.select %52, %51, %53 : vector<1x8x8xi1>, vector<1x8x8xf32>
    %cst_18 = arith.constant dense<0xFF800000> : vector<1x8xf32>
    %55 = vector.multi_reduction <maximumf>, %54, %cst_18 [2] : vector<1x8x8xf32> to vector<1x8xf32>
    %56 = vector.shape_cast %55 : vector<1x8xf32> to vector<1x8x1xf32>
    %57 = vector.broadcast %56 : vector<1x8x1xf32> to vector<1x8x8xf32>
    %58 = arith.subf %54, %57 : vector<1x8x8xf32>
    %59 = math.exp %58 : vector<1x8x8xf32>
    %cst_19 = arith.constant dense<0.000000e+00> : vector<1x8xf32>
    %60 = vector.multi_reduction <add>, %59, %cst_19 [2] : vector<1x8x8xf32> to vector<1x8xf32>
    %61 = vector.shape_cast %60 : vector<1x8xf32> to vector<1x8x1xf32>
    %62 = arith.truncf %59 : vector<1x8x8xf32> to vector<1x8x8xbf16>
    "tpu.trace_start"() <{level = 10 : i32, message = "bqk,bkd->bqd"}> : () -> ()
    %cst_20 = arith.constant dense<0.000000e+00> : vector<1x8x8xf32>
    %63 = tpu.matmul %62, %50, %cst_20 {dimension_numbers = #tpu.dot_dimension_numbers<[2], [1], [1], [2], [0, 0, 0, 1, 1, 2], [0], [0]>} : vector<1x8x8xbf16>, vector<1x8x8xbf16>, vector<1x8x8xf32> -> vector<1x8x8xf32>
    "tpu.trace_stop"() : () -> ()
    %64 = tpu.reciprocal %61 {approx = true} : vector<1x8x1xf32> -> vector<1x8x1xf32>
    %65 = vector.broadcast %64 : vector<1x8x1xf32> to vector<1x8x8xf32>
    %66 = arith.mulf %63, %65 : vector<1x8x8xf32>
    %67 = vector.shape_cast %66 : vector<1x8x8xf32> to vector<8x8xf32>
    %68 = arith.truncf %67 : vector<8x8xf32> to vector<8x8xbf16>
    %c0_21 = arith.constant 0 : index
    %c0_22 = arith.constant 0 : index
    %c0_23 = arith.constant 0 : index
    %69 = vector.load %arg6[%c0_21, %c0_22, %c0_23] : memref<4x8x32xbf16, #tpu.memory_space<vmem>>, vector<1x8x32xbf16>
    %70 = vector.shape_cast %69 : vector<1x8x32xbf16> to vector<8x32xbf16>
    %cst_24 = arith.constant dense<0.000000e+00> : vector<8x32xf32>
    %71 = tpu.matmul %68, %70, %cst_24 {dimension_numbers = #tpu.dot_dimension_numbers<[1], [0], [0], [1], [0, 0, 1, 1], [], []>} : vector<8x8xbf16>, vector<8x32xbf16>, vector<8x32xf32> -> vector<8x32xf32>
    %72 = arith.addf %41, %71 : vector<8x32xf32>
    %73 = vector.extract_strided_slice %37 {offsets = [0, 8], sizes = [8, 8], strides = [1, 1]} : vector<8x96xf32> to vector<8x8xf32>
    %74 = vector.shape_cast %73 : vector<8x8xf32> to vector<1x8x8xf32>
    %75 = arith.truncf %74 : vector<1x8x8xf32> to vector<1x8x8xbf16>
    %76 = vector.extract_strided_slice %37 {offsets = [0, 40], sizes = [8, 8], strides = [1, 1]} : vector<8x96xf32> to vector<8x8xf32>
    %77 = vector.shape_cast %76 : vector<8x8xf32> to vector<1x8x8xf32>
    %78 = arith.truncf %77 : vector<1x8x8xf32> to vector<1x8x8xbf16>
    %79 = vector.extract_strided_slice %37 {offsets = [0, 72], sizes = [8, 8], strides = [1, 1]} : vector<8x96xf32> to vector<8x8xf32>
    %80 = vector.shape_cast %79 : vector<8x8xf32> to vector<1x8x8xf32>
    %81 = arith.truncf %80 : vector<1x8x8xf32> to vector<1x8x8xbf16>
    "tpu.trace_start"() <{level = 10 : i32, message = "bqd,bkd->bqk"}> : () -> ()
    %cst_25 = arith.constant dense<0.000000e+00> : vector<1x8x8xf32>
    %82 = tpu.matmul %75, %78, %cst_25 {dimension_numbers = #tpu.dot_dimension_numbers<[2], [2], [1], [1], [0, 0, 0, 1, 1, 1], [0], [0]>} : vector<1x8x8xbf16>, vector<1x8x8xbf16>, vector<1x8x8xf32> -> vector<1x8x8xf32>
    "tpu.trace_stop"() : () -> ()
    %83 = vector.shape_cast %40 : vector<8x8xi1> to vector<1x8x8xi1>
    %cst_26 = arith.constant 0xFF800000 : f32
    %84 = vector.broadcast %cst_26 : f32 to vector<1x8x8xf32>
    %85 = arith.select %83, %82, %84 : vector<1x8x8xi1>, vector<1x8x8xf32>
    %cst_27 = arith.constant dense<0xFF800000> : vector<1x8xf32>
    %86 = vector.multi_reduction <maximumf>, %85, %cst_27 [2] : vector<1x8x8xf32> to vector<1x8xf32>
    %87 = vector.shape_cast %86 : vector<1x8xf32> to vector<1x8x1xf32>
    %88 = vector.broadcast %87 : vector<1x8x1xf32> to vector<1x8x8xf32>
    %89 = arith.subf %85, %88 : vector<1x8x8xf32>
    %90 = math.exp %89 : vector<1x8x8xf32>
    %cst_28 = arith.constant dense<0.000000e+00> : vector<1x8xf32>
    %91 = vector.multi_reduction <add>, %90, %cst_28 [2] : vector<1x8x8xf32> to vector<1x8xf32>
    %92 = vector.shape_cast %91 : vector<1x8xf32> to vector<1x8x1xf32>
    %93 = arith.truncf %90 : vector<1x8x8xf32> to vector<1x8x8xbf16>
    "tpu.trace_start"() <{level = 10 : i32, message = "bqk,bkd->bqd"}> : () -> ()
    %cst_29 = arith.constant dense<0.000000e+00> : vector<1x8x8xf32>
    %94 = tpu.matmul %93, %81, %cst_29 {dimension_numbers = #tpu.dot_dimension_numbers<[2], [1], [1], [2], [0, 0, 0, 1, 1, 2], [0], [0]>} : vector<1x8x8xbf16>, vector<1x8x8xbf16>, vector<1x8x8xf32> -> vector<1x8x8xf32>
    "tpu.trace_stop"() : () -> ()
    %95 = tpu.reciprocal %92 {approx = true} : vector<1x8x1xf32> -> vector<1x8x1xf32>
    %96 = vector.broadcast %95 : vector<1x8x1xf32> to vector<1x8x8xf32>
    %97 = arith.mulf %94, %96 : vector<1x8x8xf32>
    %98 = vector.shape_cast %97 : vector<1x8x8xf32> to vector<8x8xf32>
    %99 = arith.truncf %98 : vector<8x8xf32> to vector<8x8xbf16>
    %c1 = arith.constant 1 : index
    %c0_30 = arith.constant 0 : index
    %c0_31 = arith.constant 0 : index
    %100 = vector.load %arg6[%c1, %c0_30, %c0_31] : memref<4x8x32xbf16, #tpu.memory_space<vmem>>, vector<1x8x32xbf16>
    %101 = vector.shape_cast %100 : vector<1x8x32xbf16> to vector<8x32xbf16>
    %cst_32 = arith.constant dense<0.000000e+00> : vector<8x32xf32>
    %102 = tpu.matmul %99, %101, %cst_32 {dimension_numbers = #tpu.dot_dimension_numbers<[1], [0], [0], [1], [0, 0, 1, 1], [], []>} : vector<8x8xbf16>, vector<8x32xbf16>, vector<8x32xf32> -> vector<8x32xf32>
    %103 = arith.addf %72, %102 : vector<8x32xf32>
    %104 = vector.extract_strided_slice %37 {offsets = [0, 16], sizes = [8, 8], strides = [1, 1]} : vector<8x96xf32> to vector<8x8xf32>
    %105 = vector.shape_cast %104 : vector<8x8xf32> to vector<1x8x8xf32>
    %106 = arith.truncf %105 : vector<1x8x8xf32> to vector<1x8x8xbf16>
    %107 = vector.extract_strided_slice %37 {offsets = [0, 48], sizes = [8, 8], strides = [1, 1]} : vector<8x96xf32> to vector<8x8xf32>
    %108 = vector.shape_cast %107 : vector<8x8xf32> to vector<1x8x8xf32>
    %109 = arith.truncf %108 : vector<1x8x8xf32> to vector<1x8x8xbf16>
    %110 = vector.extract_strided_slice %37 {offsets = [0, 80], sizes = [8, 8], strides = [1, 1]} : vector<8x96xf32> to vector<8x8xf32>
    %111 = vector.shape_cast %110 : vector<8x8xf32> to vector<1x8x8xf32>
    %112 = arith.truncf %111 : vector<1x8x8xf32> to vector<1x8x8xbf16>
    "tpu.trace_start"() <{level = 10 : i32, message = "bqd,bkd->bqk"}> : () -> ()
    %cst_33 = arith.constant dense<0.000000e+00> : vector<1x8x8xf32>
    %113 = tpu.matmul %106, %109, %cst_33 {dimension_numbers = #tpu.dot_dimension_numbers<[2], [2], [1], [1], [0, 0, 0, 1, 1, 1], [0], [0]>} : vector<1x8x8xbf16>, vector<1x8x8xbf16>, vector<1x8x8xf32> -> vector<1x8x8xf32>
    "tpu.trace_stop"() : () -> ()
    %114 = vector.shape_cast %40 : vector<8x8xi1> to vector<1x8x8xi1>
    %cst_34 = arith.constant 0xFF800000 : f32
    %115 = vector.broadcast %cst_34 : f32 to vector<1x8x8xf32>
    %116 = arith.select %114, %113, %115 : vector<1x8x8xi1>, vector<1x8x8xf32>
    %cst_35 = arith.constant dense<0xFF800000> : vector<1x8xf32>
    %117 = vector.multi_reduction <maximumf>, %116, %cst_35 [2] : vector<1x8x8xf32> to vector<1x8xf32>
    %118 = vector.shape_cast %117 : vector<1x8xf32> to vector<1x8x1xf32>
    %119 = vector.broadcast %118 : vector<1x8x1xf32> to vector<1x8x8xf32>
    %120 = arith.subf %116, %119 : vector<1x8x8xf32>
    %121 = math.exp %120 : vector<1x8x8xf32>
    %cst_36 = arith.constant dense<0.000000e+00> : vector<1x8xf32>
    %122 = vector.multi_reduction <add>, %121, %cst_36 [2] : vector<1x8x8xf32> to vector<1x8xf32>
    %123 = vector.shape_cast %122 : vector<1x8xf32> to vector<1x8x1xf32>
    %124 = arith.truncf %121 : vector<1x8x8xf32> to vector<1x8x8xbf16>
    "tpu.trace_start"() <{level = 10 : i32, message = "bqk,bkd->bqd"}> : () -> ()
    %cst_37 = arith.constant dense<0.000000e+00> : vector<1x8x8xf32>
    %125 = tpu.matmul %124, %112, %cst_37 {dimension_numbers = #tpu.dot_dimension_numbers<[2], [1], [1], [2], [0, 0, 0, 1, 1, 2], [0], [0]>} : vector<1x8x8xbf16>, vector<1x8x8xbf16>, vector<1x8x8xf32> -> vector<1x8x8xf32>
    "tpu.trace_stop"() : () -> ()
    %126 = tpu.reciprocal %123 {approx = true} : vector<1x8x1xf32> -> vector<1x8x1xf32>
    %127 = vector.broadcast %126 : vector<1x8x1xf32> to vector<1x8x8xf32>
    %128 = arith.mulf %125, %127 : vector<1x8x8xf32>
    %129 = vector.shape_cast %128 : vector<1x8x8xf32> to vector<8x8xf32>
    %130 = arith.truncf %129 : vector<8x8xf32> to vector<8x8xbf16>
    %c2 = arith.constant 2 : index
    %c0_38 = arith.constant 0 : index
    %c0_39 = arith.constant 0 : index
    %131 = vector.load %arg6[%c2, %c0_38, %c0_39] : memref<4x8x32xbf16, #tpu.memory_space<vmem>>, vector<1x8x32xbf16>
    %132 = vector.shape_cast %131 : vector<1x8x32xbf16> to vector<8x32xbf16>
    %cst_40 = arith.constant dense<0.000000e+00> : vector<8x32xf32>
    %133 = tpu.matmul %130, %132, %cst_40 {dimension_numbers = #tpu.dot_dimension_numbers<[1], [0], [0], [1], [0, 0, 1, 1], [], []>} : vector<8x8xbf16>, vector<8x32xbf16>, vector<8x32xf32> -> vector<8x32xf32>
    %134 = arith.addf %103, %133 : vector<8x32xf32>
    %135 = vector.extract_strided_slice %37 {offsets = [0, 24], sizes = [8, 8], strides = [1, 1]} : vector<8x96xf32> to vector<8x8xf32>
    %136 = vector.shape_cast %135 : vector<8x8xf32> to vector<1x8x8xf32>
    %137 = arith.truncf %136 : vector<1x8x8xf32> to vector<1x8x8xbf16>
    %138 = vector.extract_strided_slice %37 {offsets = [0, 56], sizes = [8, 8], strides = [1, 1]} : vector<8x96xf32> to vector<8x8xf32>
    %139 = vector.shape_cast %138 : vector<8x8xf32> to vector<1x8x8xf32>
    %140 = arith.truncf %139 : vector<1x8x8xf32> to vector<1x8x8xbf16>
    %141 = vector.extract_strided_slice %37 {offsets = [0, 88], sizes = [8, 8], strides = [1, 1]} : vector<8x96xf32> to vector<8x8xf32>
    %142 = vector.shape_cast %141 : vector<8x8xf32> to vector<1x8x8xf32>
    %143 = arith.truncf %142 : vector<1x8x8xf32> to vector<1x8x8xbf16>
    "tpu.trace_start"() <{level = 10 : i32, message = "bqd,bkd->bqk"}> : () -> ()
    %cst_41 = arith.constant dense<0.000000e+00> : vector<1x8x8xf32>
    %144 = tpu.matmul %137, %140, %cst_41 {dimension_numbers = #tpu.dot_dimension_numbers<[2], [2], [1], [1], [0, 0, 0, 1, 1, 1], [0], [0]>} : vector<1x8x8xbf16>, vector<1x8x8xbf16>, vector<1x8x8xf32> -> vector<1x8x8xf32>
    "tpu.trace_stop"() : () -> ()
    %145 = vector.shape_cast %40 : vector<8x8xi1> to vector<1x8x8xi1>
    %cst_42 = arith.constant 0xFF800000 : f32
    %146 = vector.broadcast %cst_42 : f32 to vector<1x8x8xf32>
    %147 = arith.select %145, %144, %146 : vector<1x8x8xi1>, vector<1x8x8xf32>
    %cst_43 = arith.constant dense<0xFF800000> : vector<1x8xf32>
    %148 = vector.multi_reduction <maximumf>, %147, %cst_43 [2] : vector<1x8x8xf32> to vector<1x8xf32>
    %149 = vector.shape_cast %148 : vector<1x8xf32> to vector<1x8x1xf32>
    %150 = vector.broadcast %149 : vector<1x8x1xf32> to vector<1x8x8xf32>
    %151 = arith.subf %147, %150 : vector<1x8x8xf32>
    %152 = math.exp %151 : vector<1x8x8xf32>
    %cst_44 = arith.constant dense<0.000000e+00> : vector<1x8xf32>
    %153 = vector.multi_reduction <add>, %152, %cst_44 [2] : vector<1x8x8xf32> to vector<1x8xf32>
    %154 = vector.shape_cast %153 : vector<1x8xf32> to vector<1x8x1xf32>
    %155 = arith.truncf %152 : vector<1x8x8xf32> to vector<1x8x8xbf16>
    "tpu.trace_start"() <{level = 10 : i32, message = "bqk,bkd->bqd"}> : () -> ()
    %cst_45 = arith.constant dense<0.000000e+00> : vector<1x8x8xf32>
    %156 = tpu.matmul %155, %143, %cst_45 {dimension_numbers = #tpu.dot_dimension_numbers<[2], [1], [1], [2], [0, 0, 0, 1, 1, 2], [0], [0]>} : vector<1x8x8xbf16>, vector<1x8x8xbf16>, vector<1x8x8xf32> -> vector<1x8x8xf32>
    "tpu.trace_stop"() : () -> ()
    %157 = tpu.reciprocal %154 {approx = true} : vector<1x8x1xf32> -> vector<1x8x1xf32>
    %158 = vector.broadcast %157 : vector<1x8x1xf32> to vector<1x8x8xf32>
    %159 = arith.mulf %156, %158 : vector<1x8x8xf32>
    %160 = vector.shape_cast %159 : vector<1x8x8xf32> to vector<8x8xf32>
    %161 = arith.truncf %160 : vector<8x8xf32> to vector<8x8xbf16>
    %c3 = arith.constant 3 : index
    %c0_46 = arith.constant 0 : index
    %c0_47 = arith.constant 0 : index
    %162 = vector.load %arg6[%c3, %c0_46, %c0_47] : memref<4x8x32xbf16, #tpu.memory_space<vmem>>, vector<1x8x32xbf16>
    %163 = vector.shape_cast %162 : vector<1x8x32xbf16> to vector<8x32xbf16>
    %cst_48 = arith.constant dense<0.000000e+00> : vector<8x32xf32>
    %164 = tpu.matmul %161, %163, %cst_48 {dimension_numbers = #tpu.dot_dimension_numbers<[1], [0], [0], [1], [0, 0, 1, 1], [], []>} : vector<8x8xbf16>, vector<8x32xbf16>, vector<8x32xf32> -> vector<8x32xf32>
    %165 = arith.addf %134, %164 : vector<8x32xf32>
    %c0_49 = arith.constant 0 : index
    %c0_50 = arith.constant 0 : index
    %166 = vector.load %arg7[%c0_49, %c0_50] : memref<1x32xf32, #tpu.memory_space<vmem>>, vector<1x32xf32>
    %167 = vector.shape_cast %166 : vector<1x32xf32> to vector<32xf32>
    %168 = vector.shape_cast %167 : vector<32xf32> to vector<1x32xf32>
    %169 = vector.broadcast %168 : vector<1x32xf32> to vector<8x32xf32>
    %170 = arith.addf %165, %169 : vector<8x32xf32>
    %171 = arith.addf %1, %170 : vector<8x32xf32>
    %c0_51 = arith.constant 0 : index
    %c0_52 = arith.constant 0 : index
    %172 = vector.load %arg8[%c0_51, %c0_52] : memref<1x32xf32, #tpu.memory_space<vmem>>, vector<1x32xf32>
    %173 = vector.shape_cast %172 : vector<1x32xf32> to vector<32xf32>
    %c0_53 = arith.constant 0 : index
    %c0_54 = arith.constant 0 : index
    %174 = vector.load %arg9[%c0_53, %c0_54] : memref<1x32xf32, #tpu.memory_space<vmem>>, vector<1x32xf32>
    %175 = vector.shape_cast %174 : vector<1x32xf32> to vector<32xf32>
    %cst_55 = arith.constant dense<0.000000e+00> : vector<8xf32>
    %176 = vector.multi_reduction <add>, %171, %cst_55 [1] : vector<8x32xf32> to vector<8xf32>
    %177 = vector.shape_cast %176 : vector<8xf32> to vector<8x1xf32>
    %cst_56 = arith.constant 3.200000e+01 : f32
    %178 = vector.broadcast %cst_56 : f32 to vector<8x1xf32>
    %179 = arith.divf %177, %178 : vector<8x1xf32>
    %180 = vector.broadcast %179 : vector<8x1xf32> to vector<8x32xf32>
    %181 = arith.subf %171, %180 : vector<8x32xf32>
    %182 = arith.mulf %181, %181 : vector<8x32xf32>
    %cst_57 = arith.constant dense<0.000000e+00> : vector<8xf32>
    %183 = vector.multi_reduction <add>, %182, %cst_57 [1] : vector<8x32xf32> to vector<8xf32>
    %184 = vector.shape_cast %183 : vector<8xf32> to vector<8x1xf32>
    %cst_58 = arith.constant 3.200000e+01 : f32
    %185 = vector.broadcast %cst_58 : f32 to vector<8x1xf32>
    %186 = arith.divf %184, %185 : vector<8x1xf32>
    %187 = vector.broadcast %179 : vector<8x1xf32> to vector<8x32xf32>
    %188 = arith.subf %171, %187 : vector<8x32xf32>
    %cst_59 = arith.constant 9.99999974E-6 : f32
    %189 = vector.broadcast %cst_59 : f32 to vector<8x1xf32>
    %190 = arith.addf %186, %189 : vector<8x1xf32>
    %191 = math.rsqrt %190 : vector<8x1xf32>
    %192 = vector.broadcast %191 : vector<8x1xf32> to vector<8x32xf32>
    %193 = arith.mulf %188, %192 : vector<8x32xf32>
    %194 = vector.shape_cast %173 : vector<32xf32> to vector<1x32xf32>
    %195 = vector.broadcast %194 : vector<1x32xf32> to vector<8x32xf32>
    %196 = arith.mulf %193, %195 : vector<8x32xf32>
    %197 = vector.shape_cast %175 : vector<32xf32> to vector<1x32xf32>
    %198 = vector.broadcast %197 : vector<1x32xf32> to vector<8x32xf32>
    %199 = arith.addf %196, %198 : vector<8x32xf32>
    %200 = arith.truncf %199 : vector<8x32xf32> to vector<8x32xbf16>
    %c0_60 = arith.constant 0 : index
    %c0_61 = arith.constant 0 : index
    %201 = vector.load %arg10[%c0_60, %c0_61] : memref<32x64xbf16, #tpu.memory_space<vmem>>, vector<32x64xbf16>
    %cst_62 = arith.constant dense<0.000000e+00> : vector<8x64xf32>
    %202 = tpu.matmul %200, %201, %cst_62 {dimension_numbers = #tpu.dot_dimension_numbers<[1], [0], [0], [1], [0, 0, 1, 1], [], []>} : vector<8x32xbf16>, vector<32x64xbf16>, vector<8x64xf32> -> vector<8x64xf32>
    %c0_63 = arith.constant 0 : index
    %c0_64 = arith.constant 0 : index
    %203 = vector.load %arg11[%c0_63, %c0_64] : memref<1x64xf32, #tpu.memory_space<vmem>>, vector<1x64xf32>
    %204 = vector.shape_cast %203 : vector<1x64xf32> to vector<64xf32>
    %205 = vector.shape_cast %204 : vector<64xf32> to vector<1x64xf32>
    %206 = vector.broadcast %205 : vector<1x64xf32> to vector<8x64xf32>
    %207 = arith.addf %202, %206 : vector<8x64xf32>
    %cst_65 = arith.constant 5.000000e-01 : f32
    %208 = vector.broadcast %cst_65 : f32 to vector<8x64xf32>
    %209 = arith.mulf %208, %207 : vector<8x64xf32>
    %cst_66 = arith.constant 0.707106769 : f32
    %210 = vector.broadcast %cst_66 : f32 to vector<8x64xf32>
    %211 = arith.mulf %207, %210 : vector<8x64xf32>
    %212 = math.erf %211 : vector<8x64xf32>
    %cst_67 = arith.constant 1.000000e+00 : f32
    %213 = vector.broadcast %cst_67 : f32 to vector<8x64xf32>
    %214 = arith.addf %213, %212 : vector<8x64xf32>
    %215 = arith.mulf %209, %214 : vector<8x64xf32>
    %216 = arith.truncf %215 : vector<8x64xf32> to vector<8x64xbf16>
    %c0_68 = arith.constant 0 : index
    %c0_69 = arith.constant 0 : index
    %217 = vector.load %arg12[%c0_68, %c0_69] : memref<64x32xbf16, #tpu.memory_space<vmem>>, vector<64x32xbf16>
    %cst_70 = arith.constant dense<0.000000e+00> : vector<8x32xf32>
    %218 = tpu.matmul %216, %217, %cst_70 {dimension_numbers = #tpu.dot_dimension_numbers<[1], [0], [0], [1], [0, 0, 1, 1], [], []>} : vector<8x64xbf16>, vector<64x32xbf16>, vector<8x32xf32> -> vector<8x32xf32>
    %c0_71 = arith.constant 0 : index
    %c0_72 = arith.constant 0 : index
    %219 = vector.load %arg13[%c0_71, %c0_72] : memref<1x32xf32, #tpu.memory_space<vmem>>, vector<1x32xf32>
    %220 = vector.shape_cast %219 : vector<1x32xf32> to vector<32xf32>
    %221 = vector.shape_cast %220 : vector<32xf32> to vector<1x32xf32>
    %222 = vector.broadcast %221 : vector<1x32xf32> to vector<8x32xf32>
    %223 = arith.addf %218, %222 : vector<8x32xf32>
    %224 = arith.addf %171, %223 : vector<8x32xf32>
    %225 = vector.shape_cast %224 : vector<8x32xf32> to vector<1x8x32xf32>
    %c0_73 = arith.constant 0 : index
    %c0_74 = arith.constant 0 : index
    %c0_75 = arith.constant 0 : index
    %226 = vector.load %arg14[%c0_73, %c0_74, %c0_75] : memref<1x8x32xf32, #tpu.memory_space<vmem>>, vector<1x8x32xf32>
    tpu.vector_store %arg14[%c0_73, %c0_74, %c0_75], %225 {strides = array<i32>} : memref<1x8x32xf32, #tpu.memory_space<vmem>>, vector<1x8x32xf32>,
    return
  }
  func.func @transform_0(%arg0: i32) -> (i32, i32, i32) {
    %c0_i32 = arith.constant 0 : i32
    %c0_i32_0 = arith.constant 0 : i32
    %c0_i32_1 = arith.constant 0 : i32
    return %arg0, %c0_i32, %c0_i32_0 : i32, i32, i32
  }
  func.func @transform_1(%arg0: i32) -> (i32, i32) {
    %c0_i32 = arith.constant 0 : i32
    %c0_i32_0 = arith.constant 0 : i32
    %c0_i32_1 = arith.constant 0 : i32
    return %c0_i32, %c0_i32_0 : i32, i32
  }
  func.func @transform_2(%arg0: i32) -> (i32, i32) {
    %c0_i32 = arith.constant 0 : i32
    %c0_i32_0 = arith.constant 0 : i32
    %c0_i32_1 = arith.constant 0 : i32
    return %c0_i32, %c0_i32_0 : i32, i32
  }
  func.func @transform_3(%arg0: i32) -> (i32, i32) {
    %c0_i32 = arith.constant 0 : i32
    %c0_i32_0 = arith.constant 0 : i32
    %c0_i32_1 = arith.constant 0 : i32
    return %c0_i32, %c0_i32_0 : i32, i32
  }
  func.func @transform_4(%arg0: i32) -> (i32, i32) {
    %c0_i32 = arith.constant 0 : i32
    %c0_i32_0 = arith.constant 0 : i32
    %c0_i32_1 = arith.constant 0 : i32
    return %c0_i32, %c0_i32_0 : i32, i32
  }
  func.func @transform_5(%arg0: i32) -> (i32, i32, i32) {
    %c0_i32 = arith.constant 0 : i32
    %c0_i32_0 = arith.constant 0 : i32
    %c0_i32_1 = arith.constant 0 : i32
    %c0_i32_2 = arith.constant 0 : i32
    return %c0_i32, %c0_i32_0, %c0_i32_1 : i32, i32, i32
  }
  func.func @transform_6(%arg0: i32) -> (i32, i32) {
    %c0_i32 = arith.constant 0 : i32
    %c0_i32_0 = arith.constant 0 : i32
    %c0_i32_1 = arith.constant 0 : i32
    return %c0_i32, %c0_i32_0 : i32, i32
  }
  func.func @transform_7(%arg0: i32) -> (i32, i32) {
    %c0_i32 = arith.constant 0 : i32
    %c0_i32_0 = arith.constant 0 : i32
    %c0_i32_1 = arith.constant 0 : i32
    return %c0_i32, %c0_i32_0 : i32, i32
  }
  func.func @transform_8(%arg0: i32) -> (i32, i32) {
    %c0_i32 = arith.constant 0 : i32
    %c0_i32_0 = arith.constant 0 : i32
    %c0_i32_1 = arith.constant 0 : i32
    return %c0_i32, %c0_i32_0 : i32, i32
  }
  func.func @transform_9(%arg0: i32) -> (i32, i32) {
    %c0_i32 = arith.constant 0 : i32
    %c0_i32_0 = arith.constant 0 : i32
    %c0_i32_1 = arith.constant 0 : i32
    return %c0_i32, %c0_i32_0 : i32, i32
  }
  func.func @transform_10(%arg0: i32) -> (i32, i32) {
    %c0_i32 = arith.constant 0 : i32
    %c0_i32_0 = arith.constant 0 : i32
    %c0_i32_1 = arith.constant 0 : i32
    return %c0_i32, %c0_i32_0 : i32, i32
  }
  func.func @transform_11(%arg0: i32) -> (i32, i32) {
    %c0_i32 = arith.constant 0 : i32
    %c0_i32_0 = arith.constant 0 : i32
    %c0_i32_1 = arith.constant 0 : i32
    return %c0_i32, %c0_i32_0 : i32, i32
  }
  func.func @transform_12(%arg0: i32) -> (i32, i32) {
    %c0_i32 = arith.constant 0 : i32
    %c0_i32_0 = arith.constant 0 : i32
    %c0_i32_1 = arith.constant 0 : i32
    return %c0_i32, %c0_i32_0 : i32, i32
  }
  func.func @transform_13(%arg0: i32) -> (i32, i32, i32) {
    %c0_i32 = arith.constant 0 : i32
    %c0_i32_0 = arith.constant 0 : i32
    %c0_i32_1 = arith.constant 0 : i32
    return %arg0, %c0_i32, %c0_i32_0 : i32, i32, i32
  }
}

</mosaic_0001>

<llo_original>
// kernel: tpu_custom_call.1
$region0: #{tpu_custom_call.1}
  #allocation0 [shape = 'u32[]', space=smem, size = 0x4, offset = 0x4, fixed_abs, tag = 'smem constant byte address 0x4 - core index']
  #allocation1 [shape = 'u32[144,128]{1,0:T(1,128)}', space=vmem, size = 0x12000, scoped, tag = 'internal scratch']
  %s0 = inlined_call_operand.hbm [shape: f32[2,8,32], index: 0, kind: input, shape index: {}]
  %s1 = inlined_call_operand.hbm [shape: f32[1,32], index: 1, kind: input, shape index: {}]
  %s2 = inlined_call_operand.hbm [shape: f32[1,32], index: 2, kind: input, shape index: {}]
  %s3 = inlined_call_operand.hbm [shape: bf16[32,96], index: 3, kind: input, shape index: {}]
  %s4 = inlined_call_operand.hbm [shape: f32[1,96], index: 4, kind: input, shape index: {}]
  %s5 = inlined_call_operand.hbm [shape: bf16[4,8,32], index: 5, kind: input, shape index: {}]
  %s6 = inlined_call_operand.hbm [shape: f32[1,32], index: 6, kind: input, shape index: {}]
  %s7 = inlined_call_operand.hbm [shape: f32[1,32], index: 7, kind: input, shape index: {}]
  %s8 = inlined_call_operand.hbm [shape: f32[1,32], index: 8, kind: input, shape index: {}]
  %s9 = inlined_call_operand.hbm [shape: bf16[32,64], index: 9, kind: input, shape index: {}]
  %s10 = inlined_call_operand.hbm [shape: f32[1,64], index: 10, kind: input, shape index: {}]
  %s11 = inlined_call_operand.hbm [shape: bf16[64,32], index: 11, kind: input, shape index: {}]
  %s12 = inlined_call_operand.hbm [shape: f32[1,32], index: 12, kind: input, shape index: {}]
  %s13 = inlined_call_operand.hbm [shape: f32[2,8,32], index: 13, kind: output, shape index: {}]
  %s14 = sld [smem:[#allocation0]]
  $region137: #{tpu_custom_call.1} parent=0
    _
  %s16 = ssub.s32 1, %s14
  %s17 = scalar_select 0, %s16, %s14
  $region1: #{tpu_custom_call.1} parent=0
    #allocation2 [shape = 'u8[8192]{0}', space=vmem, size = 0x2000, scoped, tag = 'input window, operand 0']
    #allocation3 [shape = 's32[2]{0}', space=sflag, size = 0x8, scoped, tag = 'scoped memory for tpu_custom_call.1']
    #allocation4 [shape = 's32[2]{0}', space=sflag, size = 0x8, scoped, tag = 'scoped memory for tpu_custom_call.1']
    #allocation5 [shape = 'u8[512]{0}', space=vmem, size = 0x400, scoped, tag = 'input window, operand 1, single buffered']
    #allocation6 [shape = 's32[1]{0}', space=sflag, size = 0x4, scoped, tag = 'scoped memory for tpu_custom_call.1']
    #allocation7 [shape = 'u8[512]{0}', space=vmem, size = 0x400, scoped, tag = 'input window, operand 2, single buffered']
    #allocation8 [shape = 'u8[8192]{0}', space=vmem, size = 0x2000, scoped, tag = 'input window, operand 3, single buffered']
    #allocation9 [shape = 's32[1]{0}', space=sflag, size = 0x4, scoped, tag = 'scoped memory for tpu_custom_call.1']
    #allocation10 [shape = 'u8[512]{0}', space=vmem, size = 0x400, scoped, tag = 'input window, operand 4, single buffered']
    #allocation11 [shape = 'u8[8192]{0}', space=vmem, size = 0x2000, scoped, tag = 'input window, operand 5, single buffered']
    #allocation12 [shape = 's32[1]{0}', space=sflag, size = 0x4, scoped, tag = 'scoped memory for tpu_custom_call.1']
    #allocation13 [shape = 'u8[512]{0}', space=vmem, size = 0x400, scoped, tag = 'input window, operand 6, single buffered']
    #allocation14 [shape = 'u8[512]{0}', space=vmem, size = 0x400, scoped, tag = 'input window, operand 7, single buffered']
    #allocation15 [shape = 's32[1]{0}', space=sflag, size = 0x4, scoped, tag = 'scoped memory for tpu_custom_call.1']
    #allocation16 [shape = 'u8[512]{0}', space=vmem, size = 0x400, scoped, tag = 'input window, operand 8, single buffered']
    #allocation17 [shape = 'u8[8192]{0}', space=vmem, size = 0x2000, scoped, tag = 'input window, operand 9, single buffered']
    #allocation18 [shape = 's32[1]{0}', space=sflag, size = 0x4, scoped, tag = 'scoped memory for tpu_custom_call.1']
    #allocation19 [shape = 'u8[512]{0}', space=vmem, size = 0x400, scoped, tag = 'input window, operand 10, single buffered']
    #allocation20 [shape = 'u8[16384]{0}', space=vmem, size = 0x4000, scoped, tag = 'input window, operand 11, single buffered']
    #allocation21 [shape = 's32[1]{0}', space=sflag, size = 0x4, scoped, tag = 'scoped memory for tpu_custom_call.1']
    #allocation22 [shape = 'u8[512]{0}', space=vmem, size = 0x400, scoped, tag = 'input window, operand 12, single buffered']
    #allocation23 [shape = 'u8[8192]{0}', space=vmem, size = 0x2000, scoped, tag = 'output window, operand 0']
    %18 = vsyncpa [#allocation3], 0
    %s19 = scalar_lea.sflag [#allocation3], 1
    %20 = vsyncpa %s19, 0
    %21 = vsyncpa [#allocation6], 0
    %22 = vsyncpa [#allocation9], 0
    %23 = vsyncpa [#allocation12], 0
    %24 = vsyncpa [#allocation15], 0
    %25 = vsyncpa [#allocation18], 0
    %26 = vsyncpa [#allocation21], 0
    %27 = vsyncpa [#allocation4], 0
    %s28 = scalar_lea.sflag [#allocation4], 1
    %29 = vsyncpa %s28, 0
    loop: start=0, step=1, limit=4
    $region2: #{tpu_custom_call.1} parent=1 // loop_pre_header
      _
    $region3: #{tpu_custom_call.1} parent=1 // loop_header
      %s31 = sphi 0, %s35
      %p32 = scmp.ge.s32.totalorder %s31, 4
      %s41 = sphi 0, %s43
      %s44 = sphi 0, %s41
      %s45 = sphi 0, %s44
      %s61 = sphi 0, %s45
      %s65 = sphi 0, %s65
      %s67 = sphi 0, %s65
      %s68 = sphi 0, %s67
      %s82 = sphi 0, %s68
      %s86 = sphi 0, %s86
      %s88 = sphi 0, %s86
      %s89 = sphi 0, %s88
      %s103 = sphi 0, %s89
      %s107 = sphi 0, %s107
      %s109 = sphi 0, %s107
      %s110 = sphi 0, %s109
      %s124 = sphi 0, %s110
      %s128 = sphi 0, %s128
      %s130 = sphi 0, %s128
      %s131 = sphi 0, %s130
      %s145 = sphi 0, %s131
      %s149 = sphi 0, %s149
      %s151 = sphi 0, %s149
      %s152 = sphi 0, %s151
      %s166 = sphi 0, %s152
      %s170 = sphi 0, %s170
      %s172 = sphi 0, %s170
      %s173 = sphi 0, %s172
      %s187 = sphi 0, %s173
      %s191 = sphi 0, %s191
      %s193 = sphi 0, %s191
      %s194 = sphi 0, %s193
      %s208 = sphi 0, %s194
      %s212 = sphi 0, %s212
      %s214 = sphi 0, %s212
      %s215 = sphi 0, %s214
      %s229 = sphi 0, %s215
      %s233 = sphi 0, %s233
      %s235 = sphi 0, %s233
      %s236 = sphi 0, %s235
      %s250 = sphi 0, %s236
      %s254 = sphi 0, %s254
      %s256 = sphi 0, %s254
      %s257 = sphi 0, %s256
      %s271 = sphi 0, %s257
      %s275 = sphi 0, %s275
      %s277 = sphi 0, %s275
      %s278 = sphi 0, %s277
      %s292 = sphi 0, %s278
      %s296 = sphi 0, %s296
      %s298 = sphi 0, %s296
      %s299 = sphi 0, %s298
      %s313 = sphi 0, %s299
      %s319 = sphi 0, %s321
      %s322 = sphi 0, %s319
      %s323 = sphi 0, %s322
      %s339 = sphi 0, %s323
    $region4: #{tpu_custom_call.1} parent=1 // loop_header_branch
      %34 = sbr.rel (%p32) target = $region8
    $region5: #{tpu_custom_call.1} parent=1 // loop_body
      %s36 = ssub.s32 %s31, 1
      %s37 = ssub.s32 %s31, 2
      %s38 = sadd.s32 %s31, 1
      %s39 = ssub.s32 %s31, %s38
      %p40 = scmp.eq.s32.totalorder %s39, 0
      %s42 = sadd.s32 %s41, 1
      %s43 = scalar_select %p40, %s41, %s42
      %p46 = pneg %p40
      %p47 = scmp.eq.s32.totalorder %s31, 1
      %p48 = por %p46, %p47
      %p49 = scmp.ne.s32.totalorder %s41, %s44
      %p50 = scmp.eq.s32.totalorder %s31, 0
      %p51 = por %p49, %p50
      %p52 = scmp.ne.s32.totalorder %s41, %s44
      %p53 = scmp.eq.s32.totalorder %s36, 1
      %p54 = por %p52, %p53
      %p55 = scmp.ne.s32.totalorder %s44, %s45
      %p56 = scmp.eq.s32.totalorder %s36, 0
      %p57 = por %p55, %p56
      %p58 = scmp.ne.s32.totalorder %s44, %s45
      %p59 = scmp.eq.s32.totalorder %s37, 1
      %p60 = por %p58, %p59
      %p62 = scmp.ne.s32.totalorder %s45, %s61
      %p63 = scmp.eq.s32.totalorder %s37, 0
      %p64 = por %p62, %p63
      %s66 = sadd.s32 %s65, 1
      %p69 = scmp.eq.s32.totalorder %s31, 1
      %p70 = scmp.ne.s32.totalorder %s65, %s67
      %p71 = scmp.eq.s32.totalorder %s31, 0
      %p72 = por %p70, %p71
      %p73 = scmp.ne.s32.totalorder %s65, %s67
      %p74 = scmp.eq.s32.totalorder %s36, 1
      %p75 = por %p73, %p74
      %p76 = scmp.ne.s32.totalorder %s67, %s68
      %p77 = scmp.eq.s32.totalorder %s36, 0
      %p78 = por %p76, %p77
      %p79 = scmp.ne.s32.totalorder %s67, %s68
      %p80 = scmp.eq.s32.totalorder %s37, 1
      %p81 = por %p79, %p80
      %p83 = scmp.ne.s32.totalorder %s68, %s82
      %p84 = scmp.eq.s32.totalorder %s37, 0
      %p85 = por %p83, %p84
      %s87 = sadd.s32 %s86, 1
      %p90 = scmp.eq.s32.totalorder %s31, 1
      %p91 = scmp.ne.s32.totalorder %s86, %s88
      %p92 = scmp.eq.s32.totalorder %s31, 0
      %p93 = por %p91, %p92
      %p94 = scmp.ne.s32.totalorder %s86, %s88
      %p95 = scmp.eq.s32.totalorder %s36, 1
      %p96 = por %p94, %p95
      %p97 = scmp.ne.s32.totalorder %s88, %s89
      %p98 = scmp.eq.s32.totalorder %s36, 0
      %p99 = por %p97, %p98
      %p100 = scmp.ne.s32.totalorder %s88, %s89
      %p101 = scmp.eq.s32.totalorder %s37, 1
      %p102 = por %p100, %p101
      %p104 = scmp.ne.s32.totalorder %s89, %s103
      %p105 = scmp.eq.s32.totalorder %s37, 0
      %p106 = por %p104, %p105
      %s108 = sadd.s32 %s107, 1
      %p111 = scmp.eq.s32.totalorder %s31, 1
      %p112 = scmp.ne.s32.totalorder %s107, %s109
      %p113 = scmp.eq.s32.totalorder %s31, 0
      %p114 = por %p112, %p113
      %p115 = scmp.ne.s32.totalorder %s107, %s109
      %p116 = scmp.eq.s32.totalorder %s36, 1
      %p117 = por %p115, %p116
      %p118 = scmp.ne.s32.totalorder %s109, %s110
      %p119 = scmp.eq.s32.totalorder %s36, 0
      %p120 = por %p118, %p119
      %p121 = scmp.ne.s32.totalorder %s109, %s110
      %p122 = scmp.eq.s32.totalorder %s37, 1
      %p123 = por %p121, %p122
      %p125 = scmp.ne.s32.totalorder %s110, %s124
      %p126 = scmp.eq.s32.totalorder %s37, 0
      %p127 = por %p125, %p126
      %s129 = sadd.s32 %s128, 1
      %p132 = scmp.eq.s32.totalorder %s31, 1
      %p133 = scmp.ne.s32.totalorder %s128, %s130
      %p134 = scmp.eq.s32.totalorder %s31, 0
      %p135 = por %p133, %p134
      %p136 = scmp.ne.s32.totalorder %s128, %s130
      %p137 = scmp.eq.s32.totalorder %s36, 1
      %p138 = por %p136, %p137
      %p139 = scmp.ne.s32.totalorder %s130, %s131
      %p140 = scmp.eq.s32.totalorder %s36, 0
      %p141 = por %p139, %p140
      %p142 = scmp.ne.s32.totalorder %s130, %s131
      %p143 = scmp.eq.s32.totalorder %s37, 1
      %p144 = por %p142, %p143
      %p146 = scmp.ne.s32.totalorder %s131, %s145
      %p147 = scmp.eq.s32.totalorder %s37, 0
      %p148 = por %p146, %p147
      %s150 = sadd.s32 %s149, 1
      %p153 = scmp.eq.s32.totalorder %s31, 1
      %p154 = scmp.ne.s32.totalorder %s149, %s151
      %p155 = scmp.eq.s32.totalorder %s31, 0
      %p156 = por %p154, %p155
      %p157 = scmp.ne.s32.totalorder %s149, %s151
      %p158 = scmp.eq.s32.totalorder %s36, 1
      %p159 = por %p157, %p158
      %p160 = scmp.ne.s32.totalorder %s151, %s152
      %p161 = scmp.eq.s32.totalorder %s36, 0
      %p162 = por %p160, %p161
      %p163 = scmp.ne.s32.totalorder %s151, %s152
      %p164 = scmp.eq.s32.totalorder %s37, 1
      %p165 = por %p163, %p164
      %p167 = scmp.ne.s32.totalorder %s152, %s166
      %p168 = scmp.eq.s32.totalorder %s37, 0
      %p169 = por %p167, %p168
      %s171 = sadd.s32 %s170, 1
      %p174 = scmp.eq.s32.totalorder %s31, 1
      %p175 = scmp.ne.s32.totalorder %s170, %s172
      %p176 = scmp.eq.s32.totalorder %s31, 0
      %p177 = por %p175, %p176
      %p178 = scmp.ne.s32.totalorder %s170, %s172
      %p179 = scmp.eq.s32.totalorder %s36, 1
      %p180 = por %p178, %p179
      %p181 = scmp.ne.s32.totalorder %s172, %s173
      %p182 = scmp.eq.s32.totalorder %s36, 0
      %p183 = por %p181, %p182
      %p184 = scmp.ne.s32.totalorder %s172, %s173
      %p185 = scmp.eq.s32.totalorder %s37, 1
      %p186 = por %p184, %p185
      %p188 = scmp.ne.s32.totalorder %s173, %s187
      %p189 = scmp.eq.s32.totalorder %s37, 0
      %p190 = por %p188, %p189
      %s192 = sadd.s32 %s191, 1
      %p195 = scmp.eq.s32.totalorder %s31, 1
      %p196 = scmp.ne.s32.totalorder %s191, %s193
      %p197 = scmp.eq.s32.totalorder %s31, 0
      %p198 = por %p196, %p197
      %p199 = scmp.ne.s32.totalorder %s191, %s193
      %p200 = scmp.eq.s32.totalorder %s36, 1
      %p201 = por %p199, %p200
      %p202 = scmp.ne.s32.totalorder %s193, %s194
      %p203 = scmp.eq.s32.totalorder %s36, 0
      %p204 = por %p202, %p203
      %p205 = scmp.ne.s32.totalorder %s193, %s194
      %p206 = scmp.eq.s32.totalorder %s37, 1
      %p207 = por %p205, %p206
      %p209 = scmp.ne.s32.totalorder %s194, %s208
      %p210 = scmp.eq.s32.totalorder %s37, 0
      %p211 = por %p209, %p210
      %s213 = sadd.s32 %s212, 1
      %p216 = scmp.eq.s32.totalorder %s31, 1
      %p217 = scmp.ne.s32.totalorder %s212, %s214
      %p218 = scmp.eq.s32.totalorder %s31, 0
      %p219 = por %p217, %p218
      %p220 = scmp.ne.s32.totalorder %s212, %s214
      %p221 = scmp.eq.s32.totalorder %s36, 1
      %p222 = por %p220, %p221
      %p223 = scmp.ne.s32.totalorder %s214, %s215
      %p224 = scmp.eq.s32.totalorder %s36, 0
      %p225 = por %p223, %p224
      %p226 = scmp.ne.s32.totalorder %s214, %s215
      %p227 = scmp.eq.s32.totalorder %s37, 1
      %p228 = por %p226, %p227
      %p230 = scmp.ne.s32.totalorder %s215, %s229
      %p231 = scmp.eq.s32.totalorder %s37, 0
      %p232 = por %p230, %p231
      %s234 = sadd.s32 %s233, 1
      %p237 = scmp.eq.s32.totalorder %s31, 1
      %p238 = scmp.ne.s32.totalorder %s233, %s235
      %p239 = scmp.eq.s32.totalorder %s31, 0
      %p240 = por %p238, %p239
      %p241 = scmp.ne.s32.totalorder %s233, %s235
      %p242 = scmp.eq.s32.totalorder %s36, 1
      %p243 = por %p241, %p242
      %p244 = scmp.ne.s32.totalorder %s235, %s236
      %p245 = scmp.eq.s32.totalorder %s36, 0
      %p246 = por %p244, %p245
      %p247 = scmp.ne.s32.totalorder %s235, %s236
      %p248 = scmp.eq.s32.totalorder %s37, 1
      %p249 = por %p247, %p248
      %p251 = scmp.ne.s32.totalorder %s236, %s250
      %p252 = scmp.eq.s32.totalorder %s37, 0
      %p253 = por %p251, %p252
      %s255 = sadd.s32 %s254, 1
      %p258 = scmp.eq.s32.totalorder %s31, 1
      %p259 = scmp.ne.s32.totalorder %s254, %s256
      %p260 = scmp.eq.s32.totalorder %s31, 0
      %p261 = por %p259, %p260
      %p262 = scmp.ne.s32.totalorder %s254, %s256
      %p263 = scmp.eq.s32.totalorder %s36, 1
      %p264 = por %p262, %p263
      %p265 = scmp.ne.s32.totalorder %s256, %s257
      %p266 = scmp.eq.s32.totalorder %s36, 0
      %p267 = por %p265, %p266
      %p268 = scmp.ne.s32.totalorder %s256, %s257
      %p269 = scmp.eq.s32.totalorder %s37, 1
      %p270 = por %p268, %p269
      %p272 = scmp.ne.s32.totalorder %s257, %s271
      %p273 = scmp.eq.s32.totalorder %s37, 0
      %p274 = por %p272, %p273
      %s276 = sadd.s32 %s275, 1
      %p279 = scmp.eq.s32.totalorder %s31, 1
      %p280 = scmp.ne.s32.totalorder %s275, %s277
      %p281 = scmp.eq.s32.totalorder %s31, 0
      %p282 = por %p280, %p281
      %p283 = scmp.ne.s32.totalorder %s275, %s277
      %p284 = scmp.eq.s32.totalorder %s36, 1
      %p285 = por %p283, %p284
      %p286 = scmp.ne.s32.totalorder %s277, %s278
      %p287 = scmp.eq.s32.totalorder %s36, 0
      %p288 = por %p286, %p287
      %p289 = scmp.ne.s32.totalorder %s277, %s278
      %p290 = scmp.eq.s32.totalorder %s37, 1
      %p291 = por %p289, %p290
      %p293 = scmp.ne.s32.totalorder %s278, %s292
      %p294 = scmp.eq.s32.totalorder %s37, 0
      %p295 = por %p293, %p294
      %s297 = sadd.s32 %s296, 1
      %p300 = scmp.eq.s32.totalorder %s31, 1
      %p301 = scmp.ne.s32.totalorder %s296, %s298
      %p302 = scmp.eq.s32.totalorder %s31, 0
      %p303 = por %p301, %p302
      %p304 = scmp.ne.s32.totalorder %s296, %s298
      %p305 = scmp.eq.s32.totalorder %s36, 1
      %p306 = por %p304, %p305
      %p307 = scmp.ne.s32.totalorder %s298, %s299
      %p308 = scmp.eq.s32.totalorder %s36, 0
      %p309 = por %p307, %p308
      %p310 = scmp.ne.s32.totalorder %s298, %s299
      %p311 = scmp.eq.s32.totalorder %s37, 1
      %p312 = por %p310, %p311
      %p314 = scmp.ne.s32.totalorder %s299, %s313
      %p315 = scmp.eq.s32.totalorder %s37, 0
      %p316 = por %p314, %p315
      %s317 = ssub.s32 %s31, %s38
      %p318 = scmp.eq.s32.totalorder %s317, 0
      %s320 = sadd.s32 %s319, 1
      %s321 = scalar_select %p318, %s319, %s320
      %p324 = pneg %p318
      %p325 = scmp.eq.s32.totalorder %s31, 1
      %p326 = por %p324, %p325
      %p327 = scmp.ne.s32.totalorder %s319, %s322
      %p328 = scmp.eq.s32.totalorder %s31, 0
      %p329 = por %p327, %p328
      %p330 = scmp.ne.s32.totalorder %s319, %s322
      %p331 = scmp.eq.s32.totalorder %s36, 1
      %p332 = por %p330, %p331
      %p333 = scmp.ne.s32.totalorder %s322, %s323
      %p334 = scmp.eq.s32.totalorder %s36, 0
      %p335 = por %p333, %p334
      %p336 = scmp.ne.s32.totalorder %s322, %s323
      %p337 = scmp.eq.s32.totalorder %s37, 1
      %p338 = por %p336, %p337
      %p340 = scmp.ne.s32.totalorder %s323, %s339
      %p341 = scmp.eq.s32.totalorder %s37, 0
      %p342 = por %p340, %p341
      %p343 = scmp.le.s32.totalorder 1, %s31
      %p344 = scmp.lt.s32.totalorder %s31, 3
      %p345 = pnand %p343, %p344
      %p346 = pneg %p345
      // Predicated region
      $region9: #{tpu_custom_call.1} parent=5 // pred_check
        _
      $region10: #{tpu_custom_call.1} parent=5 // pred_check_branch
        %348 = sbr.rel (%p345) target = $region12
      $region11: #{tpu_custom_call.1} parent=5 // pred_region
        %s349 = ssub.s32 %s31, 1
        // Predicated region
        $region13: #{tpu_custom_call.1} parent=11 // pred_check
          %p350 = pneg %p78
        $region14: #{tpu_custom_call.1} parent=11 // pred_check_branch
          %352 = sbr.rel (%p350) target = $region16
        $region15: #{tpu_custom_call.1} parent=11 // pred_region
          %s354 = ssub.s32 16, 16
          %355 = vsyncadd [#allocation6], %s354
          %s357 = sshll.u32 [#allocation5], 4
          %s358 = int_to_ptr.vmem [resolvable:$true] %s357
          %360 = dma.hbm_to_vmem [thread:$0]  %s1, 16, %s358, [#allocation6]
        $region16: #{tpu_custom_call.1} parent=11 // pred_fallthru
          _
        // Predicated region
        $region17: #{tpu_custom_call.1} parent=11 // pred_check
          %p361 = pneg %p99
        $region18: #{tpu_custom_call.1} parent=11 // pred_check_branch
          %363 = sbr.rel (%p361) target = $region20
        $region19: #{tpu_custom_call.1} parent=11 // pred_region
          %s365 = ssub.s32 16, 16
          %366 = vsyncadd [#allocation6], %s365
          %s368 = sshll.u32 [#allocation7], 4
          %s369 = int_to_ptr.vmem [resolvable:$true] %s368
          %371 = dma.hbm_to_vmem [thread:$0]  %s2, 16, %s369, [#allocation6]
        $region20: #{tpu_custom_call.1} parent=11 // pred_fallthru
          _
        // Predicated region
        $region21: #{tpu_custom_call.1} parent=11 // pred_check
          %p372 = pneg %p120
        $region22: #{tpu_custom_call.1} parent=11 // pred_check_branch
          %374 = sbr.rel (%p372) target = $region24
        $region23: #{tpu_custom_call.1} parent=11 // pred_region
          %s376 = ssub.s32 256, 256
          %377 = vsyncadd [#allocation9], %s376
          %s378 = sshll.u32 [#allocation8], 4
          %s379 = int_to_ptr.vmem [resolvable:$true] %s378
          %384 = dma.hbm_to_vmem [thread:$0]  %s3, 256, %s379, [#allocation9], 64, 64, 4
        $region24: #{tpu_custom_call.1} parent=11 // pred_fallthru
          _
        // Predicated region
        $region25: #{tpu_custom_call.1} parent=11 // pred_check
          %p385 = pneg %p141
        $region26: #{tpu_custom_call.1} parent=11 // pred_check_branch
          %387 = sbr.rel (%p385) target = $region28
        $region27: #{tpu_custom_call.1} parent=11 // pred_region
          %s389 = ssub.s32 16, 16
          %390 = vsyncadd [#allocation9], %s389
          %s392 = sshll.u32 [#allocation10], 4
          %s393 = int_to_ptr.vmem [resolvable:$true] %s392
          %395 = dma.hbm_to_vmem [thread:$0]  %s4, 16, %s393, [#allocation9]
        $region28: #{tpu_custom_call.1} parent=11 // pred_fallthru
          _
        // Predicated region
        $region29: #{tpu_custom_call.1} parent=11 // pred_check
          %p396 = pneg %p162
        $region30: #{tpu_custom_call.1} parent=11 // pred_check_branch
          %398 = sbr.rel (%p396) target = $region32
        $region31: #{tpu_custom_call.1} parent=11 // pred_region
          %s400 = ssub.s32 256, 256
          %401 = vsyncadd [#allocation12], %s400
          %s402 = sshll.u32 [#allocation11], 4
          %s403 = int_to_ptr.vmem [resolvable:$true] %s402
          %408 = dma.hbm_to_vmem [thread:$0]  %s5, 256, %s403, [#allocation12], 64, 64, 4
        $region32: #{tpu_custom_call.1} parent=11 // pred_fallthru
          _
        // Predicated region
        $region33: #{tpu_custom_call.1} parent=11 // pred_check
          %p409 = pneg %p183
        $region34: #{tpu_custom_call.1} parent=11 // pred_check_branch
          %411 = sbr.rel (%p409) target = $region36
        $region35: #{tpu_custom_call.1} parent=11 // pred_region
          %s413 = ssub.s32 16, 16
          %414 = vsyncadd [#allocation12], %s413
          %s416 = sshll.u32 [#allocation13], 4
          %s417 = int_to_ptr.vmem [resolvable:$true] %s416
          %419 = dma.hbm_to_vmem [thread:$0]  %s6, 16, %s417, [#allocation12]
        $region36: #{tpu_custom_call.1} parent=11 // pred_fallthru
          _
        // Predicated region
        $region37: #{tpu_custom_call.1} parent=11 // pred_check
          %p420 = pneg %p204
        $region38: #{tpu_custom_call.1} parent=11 // pred_check_branch
          %422 = sbr.rel (%p420) target = $region40
        $region39: #{tpu_custom_call.1} parent=11 // pred_region
          %s424 = ssub.s32 16, 16
          %425 = vsyncadd [#allocation15], %s424
          %s427 = sshll.u32 [#allocation14], 4
          %s428 = int_to_ptr.vmem [resolvable:$true] %s427
          %430 = dma.hbm_to_vmem [thread:$0]  %s7, 16, %s428, [#allocation15]
        $region40: #{tpu_custom_call.1} parent=11 // pred_fallthru
          _
        // Predicated region
        $region41: #{tpu_custom_call.1} parent=11 // pred_check
          %p431 = pneg %p225
        $region42: #{tpu_custom_call.1} parent=11 // pred_check_branch
          %433 = sbr.rel (%p431) target = $region44
        $region43: #{tpu_custom_call.1} parent=11 // pred_region
          %s435 = ssub.s32 16, 16
          %436 = vsyncadd [#allocation15], %s435
          %s438 = sshll.u32 [#allocation16], 4
          %s439 = int_to_ptr.vmem [resolvable:$true] %s438
          %441 = dma.hbm_to_vmem [thread:$0]  %s8, 16, %s439, [#allocation15]
        $region44: #{tpu_custom_call.1} parent=11 // pred_fallthru
          _
        // Predicated region
        $region45: #{tpu_custom_call.1} parent=11 // pred_check
          %p442 = pneg %p246
        $region46: #{tpu_custom_call.1} parent=11 // pred_check_branch
          %444 = sbr.rel (%p442) target = $region48
        $region47: #{tpu_custom_call.1} parent=11 // pred_region
          %s446 = ssub.s32 256, 256
          %447 = vsyncadd [#allocation18], %s446
          %s448 = sshll.u32 [#allocation17], 4
          %s449 = int_to_ptr.vmem [resolvable:$true] %s448
          %454 = dma.hbm_to_vmem [thread:$0]  %s9, 256, %s449, [#allocation18], 64, 64, 4
        $region48: #{tpu_custom_call.1} parent=11 // pred_fallthru
          _
        // Predicated region
        $region49: #{tpu_custom_call.1} parent=11 // pred_check
          %p455 = pneg %p267
        $region50: #{tpu_custom_call.1} parent=11 // pred_check_branch
          %457 = sbr.rel (%p455) target = $region52
        $region51: #{tpu_custom_call.1} parent=11 // pred_region
          %s459 = ssub.s32 16, 16
          %460 = vsyncadd [#allocation18], %s459
          %s462 = sshll.u32 [#allocation19], 4
          %s463 = int_to_ptr.vmem [resolvable:$true] %s462
          %465 = dma.hbm_to_vmem [thread:$0]  %s10, 16, %s463, [#allocation18]
        $region52: #{tpu_custom_call.1} parent=11 // pred_fallthru
          _
        // Predicated region
        $region53: #{tpu_custom_call.1} parent=11 // pred_check
          %p466 = pneg %p288
        $region54: #{tpu_custom_call.1} parent=11 // pred_check_branch
          %468 = sbr.rel (%p466) target = $region56
        $region55: #{tpu_custom_call.1} parent=11 // pred_region
          %s470 = ssub.s32 512, 512
          %471 = vsyncadd [#allocation21], %s470
          %s472 = sshll.u32 [#allocation20], 4
          %s473 = int_to_ptr.vmem [resolvable:$true] %s472
          %478 = dma.hbm_to_vmem [thread:$0]  %s11, 512, %s473, [#allocation21], 64, 64, 4
        $region56: #{tpu_custom_call.1} parent=11 // pred_fallthru
          _
        // Predicated region
        $region57: #{tpu_custom_call.1} parent=11 // pred_check
          %p479 = pneg %p309
        $region58: #{tpu_custom_call.1} parent=11 // pred_check_branch
          %481 = sbr.rel (%p479) target = $region60
        $region59: #{tpu_custom_call.1} parent=11 // pred_region
          %s483 = ssub.s32 16, 16
          %484 = vsyncadd [#allocation21], %s483
          %s486 = sshll.u32 [#allocation22], 4
          %s487 = int_to_ptr.vmem [resolvable:$true] %s486
          %489 = dma.hbm_to_vmem [thread:$0]  %s12, 16, %s487, [#allocation21]
        $region60: #{tpu_custom_call.1} parent=11 // pred_fallthru
          _
      $region12: #{tpu_custom_call.1} parent=5 // pred_fallthru
        _
      %p490 = scmp.lt.s32.totalorder %s31, 2
      // Predicated region
      $region61: #{tpu_custom_call.1} parent=5 // pred_check
        %p491 = pneg %p490
      $region62: #{tpu_custom_call.1} parent=5 // pred_check_branch
        %493 = sbr.rel (%p491) target = $region64
      $region63: #{tpu_custom_call.1} parent=5 // pred_region
        // Predicated region
        $region65: #{tpu_custom_call.1} parent=63 // pred_check
          %p494 = pneg %p51
        $region66: #{tpu_custom_call.1} parent=63 // pred_check_branch
          %496 = sbr.rel (%p494) target = $region68
        $region67: #{tpu_custom_call.1} parent=63 // pred_region
          %s497 = sand.u32 %s41, 1
          %s498 = scalar_lea.sflag [#allocation3], %s497
          %s499 = sand.u32 %s41, 1
          %s500 = smul.addr %s499, 8
          %s501 = scalar_lea.vmem [#allocation2], %s500
          %s503 = ssub.s32 128, 128
          %504 = vsyncadd %s498, %s503
          %s505 = smul.addr %s31, 128
          %s506 = scalar_lea.hbm %s0, %s505
          %s508 = sshll.u32 %s501, 4
          %s509 = int_to_ptr.vmem [resolvable:$true] %s508
          %511 = dma.hbm_to_vmem [thread:$0]  %s506, 128, %s509, %s498
        $region68: #{tpu_custom_call.1} parent=63 // pred_fallthru
          _
      $region64: #{tpu_custom_call.1} parent=5 // pred_fallthru
        _
      %p512 = scmp.le.s32.totalorder 1, %s31
      %p513 = scmp.lt.s32.totalorder %s31, 3
      %p514 = pnand %p512, %p513
      %p515 = pneg %p514
      // Predicated region
      $region69: #{tpu_custom_call.1} parent=5 // pred_check
        _
      $region70: #{tpu_custom_call.1} parent=5 // pred_check_branch
        %517 = sbr.rel (%p514) target = $region72
      $region71: #{tpu_custom_call.1} parent=5 // pred_region
        %s518 = ssub.s32 %s31, 1
        %s519 = sand.u32 %s44, 1
        %s520 = scalar_lea.sflag [#allocation3], %s519
        %s521 = sand.u32 %s44, 1
        %s522 = smul.addr %s521, 8
        %s523 = scalar_lea.vmem [#allocation2], %s522
        // Predicated region
        $region73: #{tpu_custom_call.1} parent=71 // pred_check
          %p524 = pneg %p57
        $region74: #{tpu_custom_call.1} parent=71 // pred_check_branch
          %526 = sbr.rel (%p524) target = $region76
        $region75: #{tpu_custom_call.1} parent=71 // pred_region
          %527 = dma.done %s520, 128
        $region76: #{tpu_custom_call.1} parent=71 // pred_fallthru
          _
        // Predicated region
        $region77: #{tpu_custom_call.1} parent=71 // pred_check
          %p528 = pneg %p78
        $region78: #{tpu_custom_call.1} parent=71 // pred_check_branch
          %530 = sbr.rel (%p528) target = $region80
        $region79: #{tpu_custom_call.1} parent=71 // pred_region
          %531 = dma.done [#allocation6], 16
        $region80: #{tpu_custom_call.1} parent=71 // pred_fallthru
          _
        // Predicated region
        $region81: #{tpu_custom_call.1} parent=71 // pred_check
          %p532 = pneg %p99
        $region82: #{tpu_custom_call.1} parent=71 // pred_check_branch
          %534 = sbr.rel (%p532) target = $region84
        $region83: #{tpu_custom_call.1} parent=71 // pred_region
          %535 = dma.done [#allocation6], 16
        $region84: #{tpu_custom_call.1} parent=71 // pred_fallthru
          _
        // Predicated region
        $region85: #{tpu_custom_call.1} parent=71 // pred_check
          %p536 = pneg %p120
        $region86: #{tpu_custom_call.1} parent=71 // pred_check_branch
          %538 = sbr.rel (%p536) target = $region88
        $region87: #{tpu_custom_call.1} parent=71 // pred_region
          %539 = dma.done [#allocation9], 256
        $region88: #{tpu_custom_call.1} parent=71 // pred_fallthru
          _
        // Predicated region
        $region89: #{tpu_custom_call.1} parent=71 // pred_check
          %p540 = pneg %p141
        $region90: #{tpu_custom_call.1} parent=71 // pred_check_branch
          %542 = sbr.rel (%p540) target = $region92
        $region91: #{tpu_custom_call.1} parent=71 // pred_region
          %543 = dma.done [#allocation9], 16
        $region92: #{tpu_custom_call.1} parent=71 // pred_fallthru
          _
        // Predicated region
        $region93: #{tpu_custom_call.1} parent=71 // pred_check
          %p544 = pneg %p162
        $region94: #{tpu_custom_call.1} parent=71 // pred_check_branch
          %546 = sbr.rel (%p544) target = $region96
        $region95: #{tpu_custom_call.1} parent=71 // pred_region
          %547 = dma.done [#allocation12], 256
        $region96: #{tpu_custom_call.1} parent=71 // pred_fallthru
          _
        // Predicated region
        $region97: #{tpu_custom_call.1} parent=71 // pred_check
          %p548 = pneg %p183
        $region98: #{tpu_custom_call.1} parent=71 // pred_check_branch
          %550 = sbr.rel (%p548) target = $region100
        $region99: #{tpu_custom_call.1} parent=71 // pred_region
          %551 = dma.done [#allocation12], 16
        $region100: #{tpu_custom_call.1} parent=71 // pred_fallthru
          _
        // Predicated region
        $region101: #{tpu_custom_call.1} parent=71 // pred_check
          %p552 = pneg %p204
        $region102: #{tpu_custom_call.1} parent=71 // pred_check_branch
          %554 = sbr.rel (%p552) target = $region104
        $region103: #{tpu_custom_call.1} parent=71 // pred_region
          %555 = dma.done [#allocation15], 16
        $region104: #{tpu_custom_call.1} parent=71 // pred_fallthru
          _
        // Predicated region
        $region105: #{tpu_custom_call.1} parent=71 // pred_check
          %p556 = pneg %p225
        $region106: #{tpu_custom_call.1} parent=71 // pred_check_branch
          %558 = sbr.rel (%p556) target = $region108
        $region107: #{tpu_custom_call.1} parent=71 // pred_region
          %559 = dma.done [#allocation15], 16
        $region108: #{tpu_custom_call.1} parent=71 // pred_fallthru
          _
        // Predicated region
        $region109: #{tpu_custom_call.1} parent=71 // pred_check
          %p560 = pneg %p246
        $region110: #{tpu_custom_call.1} parent=71 // pred_check_branch
          %562 = sbr.rel (%p560) target = $region112
        $region111: #{tpu_custom_call.1} parent=71 // pred_region
          %563 = dma.done [#allocation18], 256
        $region112: #{tpu_custom_call.1} parent=71 // pred_fallthru
          _
        // Predicated region
        $region113: #{tpu_custom_call.1} parent=71 // pred_check
          %p564 = pneg %p267
        $region114: #{tpu_custom_call.1} parent=71 // pred_check_branch
          %566 = sbr.rel (%p564) target = $region116
        $region115: #{tpu_custom_call.1} parent=71 // pred_region
          %567 = dma.done [#allocation18], 16
        $region116: #{tpu_custom_call.1} parent=71 // pred_fallthru
          _
        // Predicated region
        $region117: #{tpu_custom_call.1} parent=71 // pred_check
          %p568 = pneg %p288
        $region118: #{tpu_custom_call.1} parent=71 // pred_check_branch
          %570 = sbr.rel (%p568) target = $region120
        $region119: #{tpu_custom_call.1} parent=71 // pred_region
          %571 = dma.done [#allocation21], 512
        $region120: #{tpu_custom_call.1} parent=71 // pred_fallthru
          _
        // Predicated region
        $region121: #{tpu_custom_call.1} parent=71 // pred_check
          %p572 = pneg %p309
        $region122: #{tpu_custom_call.1} parent=71 // pred_check_branch
          %574 = sbr.rel (%p572) target = $region124
        $region123: #{tpu_custom_call.1} parent=71 // pred_region
          %575 = dma.done [#allocation21], 16
        $region124: #{tpu_custom_call.1} parent=71 // pred_fallthru
          _
        %s576 = sand.u32 %s44, 1
        %s577 = scalar_lea.sflag [#allocation3], %s576
        %s578 = sand.u32 %s44, 1
        %s579 = smul.addr %s578, 8
        %s580 = scalar_lea.vmem [#allocation2], %s579
        %p581 = pneg %p57
        %p582 = pneg %p54
        %p583 = pneg %p78
        %p584 = pneg %p75
        %p585 = pneg %p99
        %p586 = pneg %p96
        %p587 = pneg %p120
        %p588 = pneg %p117
        %p589 = pneg %p141
        %p590 = pneg %p138
        %p591 = pneg %p162
        %p592 = pneg %p159
        %p593 = pneg %p183
        %p594 = pneg %p180
        %p595 = pneg %p204
        %p596 = pneg %p201
        %p597 = pneg %p225
        %p598 = pneg %p222
        %p599 = pneg %p246
        %p600 = pneg %p243
        %p601 = pneg %p267
        %p602 = pneg %p264
        %p603 = pneg %p288
        %p604 = pneg %p285
        %p605 = pneg %p309
        %p606 = pneg %p306
        %p607 = pneg %p335
        %p608 = pneg %p332
        %s609 = sand.u32 %s322, 1
        %s610 = scalar_lea.sflag [#allocation4], %s609
        %s611 = sand.u32 %s322, 1
        %s612 = smul.addr %s611, 8
        %s613 = scalar_lea.vmem [#allocation23], %s612
        %v615 = vld [vmem:[%s523] sm:$0xff]
        %v616 = vld [vmem:[#allocation5] sm:$0x1]
        %v617 = vld [vmem:[#allocation7] sm:$0x1]
        %vm618 = vcmask 261120
        %v619 = vsel %vm618, %v615, 0.0
        %620 = vadd.xlane.f32.xlu0 %v619
        %v621 = vpop.xlane.xlu0 %620
        %v622 = vrcp.pop 32.0
        %v623 = vmul.f32 %v621, %v622
        %v624 = vsub.f32 %v615, %v623
        %v625 = vmul.f32 %v624, %v624
        %v626 = vsel %vm618, %v625, 0.0
        %627 = vadd.xlane.f32.xlu0 %v626
        %v628 = vpop.xlane.xlu0 %627
        %v629 = vmul.f32 %v628, %v622
        %v630 = vadd.f32 %v629, 1e-05
        %v631 = vrsqrt.pop %v630
        %v632 = vmul.f32 %v624, %v631
        %v634 = vlaneseq
        %v635 = vshrl.u32 %v634, 7
        %v636 = vsub.s32 0, %v635
        %v637 = vrot.slane %v616, %v636
        %v639 = vmul.f32 %v632, %v637
        %v641 = vlaneseq
        %v642 = vshrl.u32 %v641, 7
        %v643 = vsub.s32 0, %v642
        %v644 = vrot.slane %v617, %v643
        %v646 = vadd.f32 %v639, %v644
        %v647 = vpack.c.bf16 %v646, %v646
        %v648 = vld [vmem:[#allocation8] sm:$0xf]
        %v649 = vld [vmem:[#allocation8 + $0x4] sm:$0xf]
        %v650 = vld [vmem:[#allocation8 + $0x8] sm:$0xf]
        %v651 = vld [vmem:[#allocation8 + $0xc] sm:$0xf]
        %v652 = vld [vmem:[#allocation10] sm:$0x1]
        %v654 = vlaneseq
        %v655 = vshrl.u32 %v654, 7
        %v656 = vsub.s32 0, %v655
        %v657 = vrot.slane %v652, %v656
        %v663 = vunpack.c.l.b16 %v648
        %v664 = vunpack.c.l.b16 %v649
        %v665 = vunpack.c.l.b16 %v650
        %v666 = vunpack.c.l.b16 %v651
        %v667 = vpack.c.b16 %v664, %v663
        %v668 = vpack.c.b16 %v666, %v665
        %v672 = vsel %vm618, %v647, 0
        %674 = vmatprep.subr.bf16.mxu0 0
        %675 = vmatpush1.bf16.msra.mxu0 %v667
        %676 = vmatprep.subr.bf16.mxu0 0
        %677 = vmatpush1.bf16.msra.mxu0 %v668
        %678 = vmatprep.subr.bf16.mxu0 0
        %679 = vmatpush1.bf16.msra.mxu0 0
        %680 = vmatprep.subr.bf16.mxu0 0
        %681 = vmatpush1.bf16.msra.mxu0 0
        %682 = vmatprep.subr.bf16.mxu0 0
        %683 = vmatpush1.bf16.msra.mxu0 0
        %684 = vmatprep.subr.bf16.mxu0 0
        %685 = vmatpush1.bf16.msra.mxu0 0
        %686 = vmatprep.subr.bf16.mxu0 0
        %687 = vmatpush1.bf16.msra.mxu0 0
        %688 = vmatprep.subr.bf16.mxu0 0
        %689 = vmatpush1.bf16.msra.mxu0 0
        %690 = vmatprep.subr.bf16.mxu0 0
        %691 = vmatpush1.bf16.msra.mxu0 0
        %692 = vmatprep.subr.bf16.mxu0 0
        %693 = vmatpush1.bf16.msra.mxu0 0
        %694 = vmatprep.subr.bf16.mxu0 0
        %695 = vmatpush1.bf16.msra.mxu0 0
        %696 = vmatprep.subr.bf16.mxu0 0
        %697 = vmatpush1.bf16.msra.mxu0 0
        %698 = vmatprep.subr.bf16.mxu0 0
        %699 = vmatpush1.bf16.msra.mxu0 0
        %700 = vmatprep.subr.bf16.mxu0 0
        %701 = vmatpush1.bf16.msra.mxu0 0
        %702 = vmatprep.subr.bf16.mxu0 0
        %703 = vmatpush1.bf16.msra.mxu0 0
        %704 = vmatprep.subr.bf16.mxu0 0
        %705 = vmatpush1.bf16.msra.mxu0 0
        %706 = vmatprep.mubr.bf16.mxu0 0
        %707 = vmatmul.mubr.bf16.gmra.mrb[0].mxu0 %v672
        %v708 = vpop.f32.mrb[0].mxu0
        %v709 = vadd.f32 %v657, %v708
        %v710 = vpop.f32.mrb[0].mxu0
        %v711 = vpop.f32.mrb[0].mxu0
        %v712 = vpop.f32.mrb[0].mxu0
        %713 = vdwg.mxu0
        %v714 = vlaneseq
        %v715 = vshrl.u32 %v714, 7
        %v716 = vlaneseq
        %v717 = vand.u32 %v716, 127
        %vm718 = vcmp.le.s32.totalorder %v717, %v715
        %v719 = vpack.c.bf16 %v709, %v709
        %721 = vrot.lane.b32.xlu0 %v719, 96
        %v722 = vpop.permute.xlu0 %721
        %vm723 = vcmask 64512
        %v725 = vsel %vm723, %v719, 0
        %v728 = vsel %vm723, %v722, 0
        %730 = vmatprep.subr.bf16.mxu0 0
        %731 = vmatpush1.bf16.xpose.msra.mxu0 %v728
        %732 = vmatprep.subr.bf16.mxu0 0
        %733 = vmatpush1.bf16.xpose.msra.mxu0 0
        %734 = vmatprep.subr.bf16.mxu0 0
        %735 = vmatpush1.bf16.xpose.msra.mxu0 0
        %736 = vmatprep.subr.bf16.mxu0 0
        %737 = vmatpush1.bf16.xpose.msra.mxu0 0
        %738 = vmatprep.subr.bf16.mxu0 0
        %739 = vmatpush1.bf16.xpose.msra.mxu0 0
        %740 = vmatprep.subr.bf16.mxu0 0
        %741 = vmatpush1.bf16.xpose.msra.mxu0 0
        %742 = vmatprep.subr.bf16.mxu0 0
        %743 = vmatpush1.bf16.xpose.msra.mxu0 0
        %744 = vmatprep.subr.bf16.mxu0 0
        %745 = vmatpush1.bf16.xpose.msra.mxu0 0
        %746 = vmatprep.subr.bf16.mxu0 0
        %747 = vmatpush1.bf16.xpose.msra.mxu0 0
        %748 = vmatprep.subr.bf16.mxu0 0
        %749 = vmatpush1.bf16.xpose.msra.mxu0 0
        %750 = vmatprep.subr.bf16.mxu0 0
        %751 = vmatpush1.bf16.xpose.msra.mxu0 0
        %752 = vmatprep.subr.bf16.mxu0 0
        %753 = vmatpush1.bf16.xpose.msra.mxu0 0
        %754 = vmatprep.subr.bf16.mxu0 0
        %755 = vmatpush1.bf16.xpose.msra.mxu0 0
        %756 = vmatprep.subr.bf16.mxu0 0
        %757 = vmatpush1.bf16.xpose.msra.mxu0 0
        %758 = vmatprep.subr.bf16.mxu0 0
        %759 = vmatpush1.bf16.xpose.msra.mxu0 0
        %760 = vmatprep.subr.bf16.mxu0 0
        %761 = vmatpush1.bf16.xpose.msra.mxu0 0
        %762 = vmatprep.mubr.bf16.mxu0 0
        %763 = vmatmul.mubr.bf16.gmra.mrb[0].mxu0 %v725
        %v764 = vpop.f32.mrb[0].mxu0
        %v765 = vadd.f32 0.0, %v764
        %v766 = vpop.f32.mrb[0].mxu0
        %v767 = vpop.f32.mrb[0].mxu0
        %v768 = vpop.f32.mrb[0].mxu0
        %769 = vdwg.mxu0
        %v770 = vsel %vm718, %v765, -inf
        %v771 = vsel %vm723, %v770, -inf
        %772 = vmax.xlane.f32.xlu0 %v771
        %v773 = vpop.xlane.xlu0 %772
        %v774 = vsub.f32 %v770, %v773
        %v775 = vmul.f32 %v774, 1.442695
        %v776 = vpow.pop %v775
        %v777 = vsel %vm723, %v776, 0.0
        %778 = vadd.xlane.f32.xlu0 %v777
        %v779 = vpop.xlane.xlu0 %778
        %v780 = vpack.c.bf16 %v776, %v776
        %781 = vrot.lane.b32.xlu0 %v719, 64
        %v782 = vpop.permute.xlu0 %781
        %v784 = vsel %vm723, %v780, 0
        %vm786 = vcmask 1043456
        %v788 = vsel %vm786, %v782, 0
        %790 = vmatprep.subr.bf16.mxu0 0
        %791 = vmatpush1.bf16.msra.mxu0 %v788
        %792 = vmatprep.subr.bf16.mxu0 0
        %793 = vmatpush1.bf16.msra.mxu0 0
        %794 = vmatprep.subr.bf16.mxu0 0
        %795 = vmatpush1.bf16.msra.mxu0 0
        %796 = vmatprep.subr.bf16.mxu0 0
        %797 = vmatpush1.bf16.msra.mxu0 0
        %798 = vmatprep.subr.bf16.mxu0 0
        %799 = vmatpush1.bf16.msra.mxu0 0
        %800 = vmatprep.subr.bf16.mxu0 0
        %801 = vmatpush1.bf16.msra.mxu0 0
        %802 = vmatprep.subr.bf16.mxu0 0
        %803 = vmatpush1.bf16.msra.mxu0 0
        %804 = vmatprep.subr.bf16.mxu0 0
        %805 = vmatpush1.bf16.msra.mxu0 0
        %806 = vmatprep.subr.bf16.mxu0 0
        %807 = vmatpush1.bf16.msra.mxu0 0
        %808 = vmatprep.subr.bf16.mxu0 0
        %809 = vmatpush1.bf16.msra.mxu0 0
        %810 = vmatprep.subr.bf16.mxu0 0
        %811 = vmatpush1.bf16.msra.mxu0 0
        %812 = vmatprep.subr.bf16.mxu0 0
        %813 = vmatpush1.bf16.msra.mxu0 0
        %814 = vmatprep.subr.bf16.mxu0 0
        %815 = vmatpush1.bf16.msra.mxu0 0
        %816 = vmatprep.subr.bf16.mxu0 0
        %817 = vmatpush1.bf16.msra.mxu0 0
        %818 = vmatprep.subr.bf16.mxu0 0
        %819 = vmatpush1.bf16.msra.mxu0 0
        %820 = vmatprep.subr.bf16.mxu0 0
        %821 = vmatpush1.bf16.msra.mxu0 0
        %822 = vmatprep.mubr.bf16.mxu0 0
        %823 = vmatmul.mubr.bf16.gmra.mrb[0].mxu0 %v784
        %v824 = vpop.f32.mrb[0].mxu0
        %v825 = vadd.f32 0.0, %v824
        %v826 = vpop.f32.mrb[0].mxu0
        %v827 = vpop.f32.mrb[0].mxu0
        %v828 = vpop.f32.mrb[0].mxu0
        %829 = vdwg.mxu0
        %v830 = vrcp.pop %v779
        %v831 = vmul.f32 %v825, %v830
        %v832 = vpack.c.bf16 %v831, %v831
        %v833 = vld [vmem:[#allocation11] sm:$0xf]
        %834 = vrot.lane.b32.xlu0 %v719, 120
        %v835 = vpop.permute.xlu0 %834
        %836 = vrot.lane.b32.xlu0 %v719, 88
        %v837 = vpop.permute.xlu0 %836
        %v839 = vsel %vm723, %v835, 0
        %v842 = vsel %vm723, %v837, 0
        %844 = vmatprep.subr.bf16.mxu0 0
        %845 = vmatpush1.bf16.xpose.msra.mxu0 %v842
        %846 = vmatprep.subr.bf16.mxu0 0
        %847 = vmatpush1.bf16.xpose.msra.mxu0 0
        %848 = vmatprep.subr.bf16.mxu0 0
        %849 = vmatpush1.bf16.xpose.msra.mxu0 0
        %850 = vmatprep.subr.bf16.mxu0 0
        %851 = vmatpush1.bf16.xpose.msra.mxu0 0
        %852 = vmatprep.subr.bf16.mxu0 0
        %853 = vmatpush1.bf16.xpose.msra.mxu0 0
        %854 = vmatprep.subr.bf16.mxu0 0
        %855 = vmatpush1.bf16.xpose.msra.mxu0 0
        %856 = vmatprep.subr.bf16.mxu0 0
        %857 = vmatpush1.bf16.xpose.msra.mxu0 0
        %858 = vmatprep.subr.bf16.mxu0 0
        %859 = vmatpush1.bf16.xpose.msra.mxu0 0
        %860 = vmatprep.subr.bf16.mxu0 0
        %861 = vmatpush1.bf16.xpose.msra.mxu0 0
        %862 = vmatprep.subr.bf16.mxu0 0
        %863 = vmatpush1.bf16.xpose.msra.mxu0 0
        %864 = vmatprep.subr.bf16.mxu0 0
        %865 = vmatpush1.bf16.xpose.msra.mxu0 0
        %866 = vmatprep.subr.bf16.mxu0 0
        %867 = vmatpush1.bf16.xpose.msra.mxu0 0
        %868 = vmatprep.subr.bf16.mxu0 0
        %869 = vmatpush1.bf16.xpose.msra.mxu0 0
        %870 = vmatprep.subr.bf16.mxu0 0
        %871 = vmatpush1.bf16.xpose.msra.mxu0 0
        %872 = vmatprep.subr.bf16.mxu0 0
        %873 = vmatpush1.bf16.xpose.msra.mxu0 0
        %874 = vmatprep.subr.bf16.mxu0 0
        %875 = vmatpush1.bf16.xpose.msra.mxu0 0
        %876 = vmatprep.mubr.bf16.mxu0 0
        %877 = vmatmul.mubr.bf16.gmra.mrb[0].mxu0 %v839
        %v878 = vpop.f32.mrb[0].mxu0
        %v879 = vadd.f32 0.0, %v878
        %v880 = vpop.f32.mrb[0].mxu0
        %v881 = vpop.f32.mrb[0].mxu0
        %v882 = vpop.f32.mrb[0].mxu0
        %883 = vdwg.mxu0
        %v884 = vsel %vm718, %v879, -inf
        %v885 = vsel %vm723, %v884, -inf
        %886 = vmax.xlane.f32.xlu0 %v885
        %v887 = vpop.xlane.xlu0 %886
        %v888 = vsub.f32 %v884, %v887
        %v889 = vmul.f32 %v888, 1.442695
        %v890 = vpow.pop %v889
        %v891 = vsel %vm723, %v890, 0.0
        %892 = vadd.xlane.f32.xlu0 %v891
        %v893 = vpop.xlane.xlu0 %892
        %v894 = vpack.c.bf16 %v890, %v890
        %895 = vrot.lane.b32.xlu0 %v719, 56
        %v896 = vpop.permute.xlu0 %895
        %v898 = vsel %vm723, %v894, 0
        %v901 = vsel %vm786, %v896, 0
        %903 = vmatprep.subr.bf16.mxu0 0
        %904 = vmatpush1.bf16.msra.mxu0 %v901
        %905 = vmatprep.subr.bf16.mxu0 0
        %906 = vmatpush1.bf16.msra.mxu0 0
        %907 = vmatprep.subr.bf16.mxu0 0
        %908 = vmatpush1.bf16.msra.mxu0 0
        %909 = vmatprep.subr.bf16.mxu0 0
        %910 = vmatpush1.bf16.msra.mxu0 0
        %911 = vmatprep.subr.bf16.mxu0 0
        %912 = vmatpush1.bf16.msra.mxu0 0
        %913 = vmatprep.subr.bf16.mxu0 0
        %914 = vmatpush1.bf16.msra.mxu0 0
        %915 = vmatprep.subr.bf16.mxu0 0
        %916 = vmatpush1.bf16.msra.mxu0 0
        %917 = vmatprep.subr.bf16.mxu0 0
        %918 = vmatpush1.bf16.msra.mxu0 0
        %919 = vmatprep.subr.bf16.mxu0 0
        %920 = vmatpush1.bf16.msra.mxu0 0
        %921 = vmatprep.subr.bf16.mxu0 0
        %922 = vmatpush1.bf16.msra.mxu0 0
        %923 = vmatprep.subr.bf16.mxu0 0
        %924 = vmatpush1.bf16.msra.mxu0 0
        %925 = vmatprep.subr.bf16.mxu0 0
        %926 = vmatpush1.bf16.msra.mxu0 0
        %927 = vmatprep.subr.bf16.mxu0 0
        %928 = vmatpush1.bf16.msra.mxu0 0
        %929 = vmatprep.subr.bf16.mxu0 0
        %930 = vmatpush1.bf16.msra.mxu0 0
        %931 = vmatprep.subr.bf16.mxu0 0
        %932 = vmatpush1.bf16.msra.mxu0 0
        %933 = vmatprep.subr.bf16.mxu0 0
        %934 = vmatpush1.bf16.msra.mxu0 0
        %935 = vmatprep.mubr.bf16.mxu0 0
        %936 = vmatmul.mubr.bf16.gmra.mrb[0].mxu0 %v898
        %v937 = vpop.f32.mrb[0].mxu0
        %v938 = vadd.f32 0.0, %v937
        %v939 = vpop.f32.mrb[0].mxu0
        %v940 = vpop.f32.mrb[0].mxu0
        %v941 = vpop.f32.mrb[0].mxu0
        %942 = vdwg.mxu0
        %v943 = vrcp.pop %v893
        %v944 = vmul.f32 %v938, %v943
        %v945 = vpack.c.bf16 %v944, %v944
        %s946 = scalar_lea.vmem [#allocation11], 4
        %v947 = vld [vmem:[%s946] sm:$0xf]
        %v949 = vsel %vm723, %v945, 0
        %v952 = vsel %vm786, %v947, 0
        %954 = vmatprep.subr.bf16.mxu0 0
        %955 = vmatpush1.bf16.msra.mxu0 %v952
        %956 = vmatprep.subr.bf16.mxu0 0
        %957 = vmatpush1.bf16.msra.mxu0 0
        %958 = vmatprep.subr.bf16.mxu0 0
        %959 = vmatpush1.bf16.msra.mxu0 0
        %960 = vmatprep.subr.bf16.mxu0 0
        %961 = vmatpush1.bf16.msra.mxu0 0
        %962 = vmatprep.subr.bf16.mxu0 0
        %963 = vmatpush1.bf16.msra.mxu0 0
        %964 = vmatprep.subr.bf16.mxu0 0
        %965 = vmatpush1.bf16.msra.mxu0 0
        %966 = vmatprep.subr.bf16.mxu0 0
        %967 = vmatpush1.bf16.msra.mxu0 0
        %968 = vmatprep.subr.bf16.mxu0 0
        %969 = vmatpush1.bf16.msra.mxu0 0
        %970 = vmatprep.subr.bf16.mxu0 0
        %971 = vmatpush1.bf16.msra.mxu0 0
        %972 = vmatprep.subr.bf16.mxu0 0
        %973 = vmatpush1.bf16.msra.mxu0 0
        %974 = vmatprep.subr.bf16.mxu0 0
        %975 = vmatpush1.bf16.msra.mxu0 0
        %976 = vmatprep.subr.bf16.mxu0 0
        %977 = vmatpush1.bf16.msra.mxu0 0
        %978 = vmatprep.subr.bf16.mxu0 0
        %979 = vmatpush1.bf16.msra.mxu0 0
        %980 = vmatprep.subr.bf16.mxu0 0
        %981 = vmatpush1.bf16.msra.mxu0 0
        %982 = vmatprep.subr.bf16.mxu0 0
        %983 = vmatpush1.bf16.msra.mxu0 0
        %984 = vmatprep.subr.bf16.mxu0 0
        %985 = vmatpush1.bf16.msra.mxu0 0
        %986 = vmatprep.mubr.bf16.mxu0 0
        %987 = vmatmul.mubr.bf16.gmra.mrb[0].mxu0 %v949
        %v988 = vpop.f32.mrb[0].mxu0
        %v989 = vadd.f32 0.0, %v988
        %v990 = vpop.f32.mrb[0].mxu0
        %v991 = vpop.f32.mrb[0].mxu0
        %v992 = vpop.f32.mrb[0].mxu0
        %993 = vdwg.mxu0
        %v995 = vsel %vm723, %v832, 0
        %v998 = vsel %vm786, %v833, 0
        %1000 = vmatprep.subr.bf16.mxu0 0
        %1001 = vmatpush1.bf16.msra.mxu0 %v998
        %1002 = vmatprep.subr.bf16.mxu0 0
        %1003 = vmatpush1.bf16.msra.mxu0 0
        %1004 = vmatprep.subr.bf16.mxu0 0
        %1005 = vmatpush1.bf16.msra.mxu0 0
        %1006 = vmatprep.subr.bf16.mxu0 0
        %1007 = vmatpush1.bf16.msra.mxu0 0
        %1008 = vmatprep.subr.bf16.mxu0 0
        %1009 = vmatpush1.bf16.msra.mxu0 0
        %1010 = vmatprep.subr.bf16.mxu0 0
        %1011 = vmatpush1.bf16.msra.mxu0 0
        %1012 = vmatprep.subr.bf16.mxu0 0
        %1013 = vmatpush1.bf16.msra.mxu0 0
        %1014 = vmatprep.subr.bf16.mxu0 0
        %1015 = vmatpush1.bf16.msra.mxu0 0
        %1016 = vmatprep.subr.bf16.mxu0 0
        %1017 = vmatpush1.bf16.msra.mxu0 0
        %1018 = vmatprep.subr.bf16.mxu0 0
        %1019 = vmatpush1.bf16.msra.mxu0 0
        %1020 = vmatprep.subr.bf16.mxu0 0
        %1021 = vmatpush1.bf16.msra.mxu0 0
        %1022 = vmatprep.subr.bf16.mxu0 0
        %1023 = vmatpush1.bf16.msra.mxu0 0
        %1024 = vmatprep.subr.bf16.mxu0 0
        %1025 = vmatpush1.bf16.msra.mxu0 0
        %1026 = vmatprep.subr.bf16.mxu0 0
        %1027 = vmatpush1.bf16.msra.mxu0 0
        %1028 = vmatprep.subr.bf16.mxu0 0
        %1029 = vmatpush1.bf16.msra.mxu0 0
        %1030 = vmatprep.subr.bf16.mxu0 0
        %1031 = vmatpush1.bf16.msra.mxu0 0
        %1032 = vmatprep.mubr.bf16.mxu0 0
        %1033 = vmatmul.mubr.bf16.gmra.mrb[0].mxu0 %v995
        %v1034 = vpop.f32.mrb[0].mxu0
        %v1035 = vadd.f32 %v989, %v1034
        %v1036 = vpop.f32.mrb[0].mxu0
        %v1037 = vpop.f32.mrb[0].mxu0
        %v1038 = vpop.f32.mrb[0].mxu0
        %1039 = vdwg.mxu0
        %1040 = vrot.lane.b32.xlu0 %v719, 112
        %v1041 = vpop.permute.xlu0 %1040
        %1042 = vrot.lane.b32.xlu0 %v719, 80
        %v1043 = vpop.permute.xlu0 %1042
        %v1045 = vsel %vm723, %v1041, 0
        %v1048 = vsel %vm723, %v1043, 0
        %1050 = vmatprep.subr.bf16.mxu0 0
        %1051 = vmatpush1.bf16.xpose.msra.mxu0 %v1048
        %1052 = vmatprep.subr.bf16.mxu0 0
        %1053 = vmatpush1.bf16.xpose.msra.mxu0 0
        %1054 = vmatprep.subr.bf16.mxu0 0
        %1055 = vmatpush1.bf16.xpose.msra.mxu0 0
        %1056 = vmatprep.subr.bf16.mxu0 0
        %1057 = vmatpush1.bf16.xpose.msra.mxu0 0
        %1058 = vmatprep.subr.bf16.mxu0 0
        %1059 = vmatpush1.bf16.xpose.msra.mxu0 0
        %1060 = vmatprep.subr.bf16.mxu0 0
        %1061 = vmatpush1.bf16.xpose.msra.mxu0 0
        %1062 = vmatprep.subr.bf16.mxu0 0
        %1063 = vmatpush1.bf16.xpose.msra.mxu0 0
        %1064 = vmatprep.subr.bf16.mxu0 0
        %1065 = vmatpush1.bf16.xpose.msra.mxu0 0
        %1066 = vmatprep.subr.bf16.mxu0 0
        %1067 = vmatpush1.bf16.xpose.msra.mxu0 0
        %1068 = vmatprep.subr.bf16.mxu0 0
        %1069 = vmatpush1.bf16.xpose.msra.mxu0 0
        %1070 = vmatprep.subr.bf16.mxu0 0
        %1071 = vmatpush1.bf16.xpose.msra.mxu0 0
        %1072 = vmatprep.subr.bf16.mxu0 0
        %1073 = vmatpush1.bf16.xpose.msra.mxu0 0
        %1074 = vmatprep.subr.bf16.mxu0 0
        %1075 = vmatpush1.bf16.xpose.msra.mxu0 0
        %1076 = vmatprep.subr.bf16.mxu0 0
        %1077 = vmatpush1.bf16.xpose.msra.mxu0 0
        %1078 = vmatprep.subr.bf16.mxu0 0
        %1079 = vmatpush1.bf16.xpose.msra.mxu0 0
        %1080 = vmatprep.subr.bf16.mxu0 0
        %1081 = vmatpush1.bf16.xpose.msra.mxu0 0
        %1082 = vmatprep.mubr.bf16.mxu0 0
        %1083 = vmatmul.mubr.bf16.gmra.mrb[0].mxu0 %v1045
        %v1084 = vpop.f32.mrb[0].mxu0
        %v1085 = vadd.f32 0.0, %v1084
        %v1086 = vpop.f32.mrb[0].mxu0
        %v1087 = vpop.f32.mrb[0].mxu0
        %v1088 = vpop.f32.mrb[0].mxu0
        %1089 = vdwg.mxu0
        %v1090 = vsel %vm718, %v1085, -inf
        %v1091 = vsel %vm723, %v1090, -inf
        %1092 = vmax.xlane.f32.xlu0 %v1091
        %v1093 = vpop.xlane.xlu0 %1092
        %v1094 = vsub.f32 %v1090, %v1093
        %v1095 = vmul.f32 %v1094, 1.442695
        %v1096 = vpow.pop %v1095
        %v1097 = vsel %vm723, %v1096, 0.0
        %1098 = vadd.xlane.f32.xlu0 %v1097
        %v1099 = vpop.xlane.xlu0 %1098
        %v1100 = vpack.c.bf16 %v1096, %v1096
        %1101 = vrot.lane.b32.xlu0 %v719, 48
        %v1102 = vpop.permute.xlu0 %1101
        %v1104 = vsel %vm723, %v1100, 0
        %v1107 = vsel %vm786, %v1102, 0
        %1109 = vmatprep.subr.bf16.mxu0 0
        %1110 = vmatpush1.bf16.msra.mxu0 %v1107
        %1111 = vmatprep.subr.bf16.mxu0 0
        %1112 = vmatpush1.bf16.msra.mxu0 0
        %1113 = vmatprep.subr.bf16.mxu0 0
        %1114 = vmatpush1.bf16.msra.mxu0 0
        %1115 = vmatprep.subr.bf16.mxu0 0
        %1116 = vmatpush1.bf16.msra.mxu0 0
        %1117 = vmatprep.subr.bf16.mxu0 0
        %1118 = vmatpush1.bf16.msra.mxu0 0
        %1119 = vmatprep.subr.bf16.mxu0 0
        %1120 = vmatpush1.bf16.msra.mxu0 0
        %1121 = vmatprep.subr.bf16.mxu0 0
        %1122 = vmatpush1.bf16.msra.mxu0 0
        %1123 = vmatprep.subr.bf16.mxu0 0
        %1124 = vmatpush1.bf16.msra.mxu0 0
        %1125 = vmatprep.subr.bf16.mxu0 0
        %1126 = vmatpush1.bf16.msra.mxu0 0
        %1127 = vmatprep.subr.bf16.mxu0 0
        %1128 = vmatpush1.bf16.msra.mxu0 0
        %1129 = vmatprep.subr.bf16.mxu0 0
        %1130 = vmatpush1.bf16.msra.mxu0 0
        %1131 = vmatprep.subr.bf16.mxu0 0
        %1132 = vmatpush1.bf16.msra.mxu0 0
        %1133 = vmatprep.subr.bf16.mxu0 0
        %1134 = vmatpush1.bf16.msra.mxu0 0
        %1135 = vmatprep.subr.bf16.mxu0 0
        %1136 = vmatpush1.bf16.msra.mxu0 0
        %1137 = vmatprep.subr.bf16.mxu0 0
        %1138 = vmatpush1.bf16.msra.mxu0 0
        %1139 = vmatprep.subr.bf16.mxu0 0
        %1140 = vmatpush1.bf16.msra.mxu0 0
        %1141 = vmatprep.mubr.bf16.mxu0 0
        %1142 = vmatmul.mubr.bf16.gmra.mrb[0].mxu0 %v1104
        %v1143 = vpop.f32.mrb[0].mxu0
        %v1144 = vadd.f32 0.0, %v1143
        %v1145 = vpop.f32.mrb[0].mxu0
        %v1146 = vpop.f32.mrb[0].mxu0
        %v1147 = vpop.f32.mrb[0].mxu0
        %1148 = vdwg.mxu0
        %v1149 = vrcp.pop %v1099
        %v1150 = vmul.f32 %v1144, %v1149
        %v1151 = vpack.c.bf16 %v1150, %v1150
        %s1152 = scalar_lea.vmem [#allocation11], 8
        %v1153 = vld [vmem:[%s1152] sm:$0xf]
        %v1155 = vsel %vm723, %v1151, 0
        %v1158 = vsel %vm786, %v1153, 0
        %1160 = vmatprep.subr.bf16.mxu0 0
        %1161 = vmatpush1.bf16.msra.mxu0 %v1158
        %1162 = vmatprep.subr.bf16.mxu0 0
        %1163 = vmatpush1.bf16.msra.mxu0 0
        %1164 = vmatprep.subr.bf16.mxu0 0
        %1165 = vmatpush1.bf16.msra.mxu0 0
        %1166 = vmatprep.subr.bf16.mxu0 0
        %1167 = vmatpush1.bf16.msra.mxu0 0
        %1168 = vmatprep.subr.bf16.mxu0 0
        %1169 = vmatpush1.bf16.msra.mxu0 0
        %1170 = vmatprep.subr.bf16.mxu0 0
        %1171 = vmatpush1.bf16.msra.mxu0 0
        %1172 = vmatprep.subr.bf16.mxu0 0
        %1173 = vmatpush1.bf16.msra.mxu0 0
        %1174 = vmatprep.subr.bf16.mxu0 0
        %1175 = vmatpush1.bf16.msra.mxu0 0
        %1176 = vmatprep.subr.bf16.mxu0 0
        %1177 = vmatpush1.bf16.msra.mxu0 0
        %1178 = vmatprep.subr.bf16.mxu0 0
        %1179 = vmatpush1.bf16.msra.mxu0 0
        %1180 = vmatprep.subr.bf16.mxu0 0
        %1181 = vmatpush1.bf16.msra.mxu0 0
        %1182 = vmatprep.subr.bf16.mxu0 0
        %1183 = vmatpush1.bf16.msra.mxu0 0
        %1184 = vmatprep.subr.bf16.mxu0 0
        %1185 = vmatpush1.bf16.msra.mxu0 0
        %1186 = vmatprep.subr.bf16.mxu0 0
        %1187 = vmatpush1.bf16.msra.mxu0 0
        %1188 = vmatprep.subr.bf16.mxu0 0
        %1189 = vmatpush1.bf16.msra.mxu0 0
        %1190 = vmatprep.subr.bf16.mxu0 0
        %1191 = vmatpush1.bf16.msra.mxu0 0
        %1192 = vmatprep.mubr.bf16.mxu0 0
        %1193 = vmatmul.mubr.bf16.gmra.mrb[0].mxu0 %v1155
        %v1194 = vpop.f32.mrb[0].mxu0
        %v1195 = vadd.f32 0.0, %v1194
        %v1196 = vpop.f32.mrb[0].mxu0
        %v1197 = vpop.f32.mrb[0].mxu0
        %v1198 = vpop.f32.mrb[0].mxu0
        %1199 = vdwg.mxu0
        %v1200 = vadd.f32 %v1035, %v1195
        %1201 = vrot.lane.b32.xlu0 %v719, 104
        %v1202 = vpop.permute.xlu0 %1201
        %1203 = vrot.lane.b32.xlu0 %v719, 72
        %v1204 = vpop.permute.xlu0 %1203
        %v1206 = vsel %vm723, %v1202, 0
        %v1209 = vsel %vm723, %v1204, 0
        %1211 = vmatprep.subr.bf16.mxu0 0
        %1212 = vmatpush1.bf16.xpose.msra.mxu0 %v1209
        %1213 = vmatprep.subr.bf16.mxu0 0
        %1214 = vmatpush1.bf16.xpose.msra.mxu0 0
        %1215 = vmatprep.subr.bf16.mxu0 0
        %1216 = vmatpush1.bf16.xpose.msra.mxu0 0
        %1217 = vmatprep.subr.bf16.mxu0 0
        %1218 = vmatpush1.bf16.xpose.msra.mxu0 0
        %1219 = vmatprep.subr.bf16.mxu0 0
        %1220 = vmatpush1.bf16.xpose.msra.mxu0 0
        %1221 = vmatprep.subr.bf16.mxu0 0
        %1222 = vmatpush1.bf16.xpose.msra.mxu0 0
        %1223 = vmatprep.subr.bf16.mxu0 0
        %1224 = vmatpush1.bf16.xpose.msra.mxu0 0
        %1225 = vmatprep.subr.bf16.mxu0 0
        %1226 = vmatpush1.bf16.xpose.msra.mxu0 0
        %1227 = vmatprep.subr.bf16.mxu0 0
        %1228 = vmatpush1.bf16.xpose.msra.mxu0 0
        %1229 = vmatprep.subr.bf16.mxu0 0
        %1230 = vmatpush1.bf16.xpose.msra.mxu0 0
        %1231 = vmatprep.subr.bf16.mxu0 0
        %1232 = vmatpush1.bf16.xpose.msra.mxu0 0
        %1233 = vmatprep.subr.bf16.mxu0 0
        %1234 = vmatpush1.bf16.xpose.msra.mxu0 0
        %1235 = vmatprep.subr.bf16.mxu0 0
        %1236 = vmatpush1.bf16.xpose.msra.mxu0 0
        %1237 = vmatprep.subr.bf16.mxu0 0
        %1238 = vmatpush1.bf16.xpose.msra.mxu0 0
        %1239 = vmatprep.subr.bf16.mxu0 0
        %1240 = vmatpush1.bf16.xpose.msra.mxu0 0
        %1241 = vmatprep.subr.bf16.mxu0 0
        %1242 = vmatpush1.bf16.xpose.msra.mxu0 0
        %1243 = vmatprep.mubr.bf16.mxu0 0
        %1244 = vmatmul.mubr.bf16.gmra.mrb[0].mxu0 %v1206
        %v1245 = vpop.f32.mrb[0].mxu0
        %v1246 = vadd.f32 0.0, %v1245
        %v1247 = vpop.f32.mrb[0].mxu0
        %v1248 = vpop.f32.mrb[0].mxu0
        %v1249 = vpop.f32.mrb[0].mxu0
        %1250 = vdwg.mxu0
        %v1251 = vsel %vm718, %v1246, -inf
        %v1252 = vsel %vm723, %v1251, -inf
        %1253 = vmax.xlane.f32.xlu0 %v1252
        %v1254 = vpop.xlane.xlu0 %1253
        %v1255 = vsub.f32 %v1251, %v1254
        %v1256 = vmul.f32 %v1255, 1.442695
        %v1257 = vpow.pop %v1256
        %v1258 = vsel %vm723, %v1257, 0.0
        %1259 = vadd.xlane.f32.xlu0 %v1258
        %v1260 = vpop.xlane.xlu0 %1259
        %v1261 = vpack.c.bf16 %v1257, %v1257
        %1262 = vrot.lane.b32.xlu0 %v719, 40
        %v1263 = vpop.permute.xlu0 %1262
        %v1265 = vsel %vm723, %v1261, 0
        %v1268 = vsel %vm786, %v1263, 0
        %1270 = vmatprep.subr.bf16.mxu0 0
        %1271 = vmatpush1.bf16.msra.mxu0 %v1268
        %1272 = vmatprep.subr.bf16.mxu0 0
        %1273 = vmatpush1.bf16.msra.mxu0 0
        %1274 = vmatprep.subr.bf16.mxu0 0
        %1275 = vmatpush1.bf16.msra.mxu0 0
        %1276 = vmatprep.subr.bf16.mxu0 0
        %1277 = vmatpush1.bf16.msra.mxu0 0
        %1278 = vmatprep.subr.bf16.mxu0 0
        %1279 = vmatpush1.bf16.msra.mxu0 0
        %1280 = vmatprep.subr.bf16.mxu0 0
        %1281 = vmatpush1.bf16.msra.mxu0 0
        %1282 = vmatprep.subr.bf16.mxu0 0
        %1283 = vmatpush1.bf16.msra.mxu0 0
        %1284 = vmatprep.subr.bf16.mxu0 0
        %1285 = vmatpush1.bf16.msra.mxu0 0
        %1286 = vmatprep.subr.bf16.mxu0 0
        %1287 = vmatpush1.bf16.msra.mxu0 0
        %1288 = vmatprep.subr.bf16.mxu0 0
        %1289 = vmatpush1.bf16.msra.mxu0 0
        %1290 = vmatprep.subr.bf16.mxu0 0
        %1291 = vmatpush1.bf16.msra.mxu0 0
        %1292 = vmatprep.subr.bf16.mxu0 0
        %1293 = vmatpush1.bf16.msra.mxu0 0
        %1294 = vmatprep.subr.bf16.mxu0 0
        %1295 = vmatpush1.bf16.msra.mxu0 0
        %1296 = vmatprep.subr.bf16.mxu0 0
        %1297 = vmatpush1.bf16.msra.mxu0 0
        %1298 = vmatprep.subr.bf16.mxu0 0
        %1299 = vmatpush1.bf16.msra.mxu0 0
        %1300 = vmatprep.subr.bf16.mxu0 0
        %1301 = vmatpush1.bf16.msra.mxu0 0
        %1302 = vmatprep.mubr.bf16.mxu0 0
        %1303 = vmatmul.mubr.bf16.gmra.mrb[0].mxu0 %v1265
        %v1304 = vpop.f32.mrb[0].mxu0
        %v1305 = vadd.f32 0.0, %v1304
        %v1306 = vpop.f32.mrb[0].mxu0
        %v1307 = vpop.f32.mrb[0].mxu0
        %v1308 = vpop.f32.mrb[0].mxu0
        %1309 = vdwg.mxu0
        %v1310 = vrcp.pop %v1260
        %v1311 = vmul.f32 %v1305, %v1310
        %v1312 = vpack.c.bf16 %v1311, %v1311
        %s1313 = scalar_lea.vmem [#allocation11], 12
        %v1314 = vld [vmem:[%s1313] sm:$0xf]
        %v1316 = vsel %vm723, %v1312, 0
        %v1319 = vsel %vm786, %v1314, 0
        %1321 = vmatprep.subr.bf16.mxu0 0
        %1322 = vmatpush1.bf16.msra.mxu0 %v1319
        %1323 = vmatprep.subr.bf16.mxu0 0
        %1324 = vmatpush1.bf16.msra.mxu0 0
        %1325 = vmatprep.subr.bf16.mxu0 0
        %1326 = vmatpush1.bf16.msra.mxu0 0
        %1327 = vmatprep.subr.bf16.mxu0 0
        %1328 = vmatpush1.bf16.msra.mxu0 0
        %1329 = vmatprep.subr.bf16.mxu0 0
        %1330 = vmatpush1.bf16.msra.mxu0 0
        %1331 = vmatprep.subr.bf16.mxu0 0
        %1332 = vmatpush1.bf16.msra.mxu0 0
        %1333 = vmatprep.subr.bf16.mxu0 0
        %1334 = vmatpush1.bf16.msra.mxu0 0
        %1335 = vmatprep.subr.bf16.mxu0 0
        %1336 = vmatpush1.bf16.msra.mxu0 0
        %1337 = vmatprep.subr.bf16.mxu0 0
        %1338 = vmatpush1.bf16.msra.mxu0 0
        %1339 = vmatprep.subr.bf16.mxu0 0
        %1340 = vmatpush1.bf16.msra.mxu0 0
        %1341 = vmatprep.subr.bf16.mxu0 0
        %1342 = vmatpush1.bf16.msra.mxu0 0
        %1343 = vmatprep.subr.bf16.mxu0 0
        %1344 = vmatpush1.bf16.msra.mxu0 0
        %1345 = vmatprep.subr.bf16.mxu0 0
        %1346 = vmatpush1.bf16.msra.mxu0 0
        %1347 = vmatprep.subr.bf16.mxu0 0
        %1348 = vmatpush1.bf16.msra.mxu0 0
        %1349 = vmatprep.subr.bf16.mxu0 0
        %1350 = vmatpush1.bf16.msra.mxu0 0
        %1351 = vmatprep.subr.bf16.mxu0 0
        %1352 = vmatpush1.bf16.msra.mxu0 0
        %1353 = vmatprep.mubr.bf16.mxu0 0
        %1354 = vmatmul.mubr.bf16.gmra.mrb[0].mxu0 %v1316
        %v1355 = vpop.f32.mrb[0].mxu0
        %v1356 = vadd.f32 0.0, %v1355
        %v1357 = vpop.f32.mrb[0].mxu0
        %v1358 = vpop.f32.mrb[0].mxu0
        %v1359 = vpop.f32.mrb[0].mxu0
        %1360 = vdwg.mxu0
        %v1361 = vadd.f32 %v1200, %v1356
        %v1362 = vld [vmem:[#allocation13] sm:$0x1]
        %v1364 = vlaneseq
        %v1365 = vshrl.u32 %v1364, 7
        %v1366 = vsub.s32 0, %v1365
        %v1367 = vrot.slane %v1362, %v1366
        %v1369 = vadd.f32 %v1361, %v1367
        %v1370 = vadd.f32 %v615, %v1369
        %v1371 = vld [vmem:[#allocation14] sm:$0x1]
        %v1372 = vld [vmem:[#allocation16] sm:$0x1]
        %v1373 = vsel %vm618, %v1370, 0.0
        %1374 = vadd.xlane.f32.xlu0 %v1373
        %v1375 = vpop.xlane.xlu0 %1374
        %v1376 = vmul.f32 %v1375, %v622
        %v1377 = vsub.f32 %v1370, %v1376
        %v1378 = vmul.f32 %v1377, %v1377
        %v1379 = vsel %vm618, %v1378, 0.0
        %1380 = vadd.xlane.f32.xlu0 %v1379
        %v1381 = vpop.xlane.xlu0 %1380
        %v1382 = vmul.f32 %v1381, %v622
        %v1383 = vadd.f32 %v1382, 1e-05
        %v1384 = vrsqrt.pop %v1383
        %v1385 = vmul.f32 %v1377, %v1384
        %v1387 = vlaneseq
        %v1388 = vshrl.u32 %v1387, 7
        %v1389 = vsub.s32 0, %v1388
        %v1390 = vrot.slane %v1371, %v1389
        %v1392 = vmul.f32 %v1385, %v1390
        %v1394 = vlaneseq
        %v1395 = vshrl.u32 %v1394, 7
        %v1396 = vsub.s32 0, %v1395
        %v1397 = vrot.slane %v1372, %v1396
        %v1399 = vadd.f32 %v1392, %v1397
        %v1400 = vpack.c.bf16 %v1399, %v1399
        %v1401 = vld [vmem:[#allocation17] sm:$0xf]
        %v1402 = vld [vmem:[#allocation17 + $0x4] sm:$0xf]
        %v1403 = vld [vmem:[#allocation17 + $0x8] sm:$0xf]
        %v1404 = vld [vmem:[#allocation17 + $0xc] sm:$0xf]
        %v1405 = vld [vmem:[#allocation19] sm:$0x1]
        %v1407 = vlaneseq
        %v1408 = vshrl.u32 %v1407, 7
        %v1409 = vsub.s32 0, %v1408
        %v1410 = vrot.slane %v1405, %v1409
        %v1416 = vunpack.c.l.b16 %v1401
        %v1417 = vunpack.c.l.b16 %v1402
        %v1418 = vunpack.c.l.b16 %v1403
        %v1419 = vunpack.c.l.b16 %v1404
        %v1420 = vpack.c.b16 %v1417, %v1416
        %v1421 = vpack.c.b16 %v1419, %v1418
        %v1425 = vsel %vm618, %v1400, 0
        %1427 = vmatprep.subr.bf16.mxu0 0
        %1428 = vmatpush1.bf16.msra.mxu0 %v1420
        %1429 = vmatprep.subr.bf16.mxu0 0
        %1430 = vmatpush1.bf16.msra.mxu0 %v1421
        %1431 = vmatprep.subr.bf16.mxu0 0
        %1432 = vmatpush1.bf16.msra.mxu0 0
        %1433 = vmatprep.subr.bf16.mxu0 0
        %1434 = vmatpush1.bf16.msra.mxu0 0
        %1435 = vmatprep.subr.bf16.mxu0 0
        %1436 = vmatpush1.bf16.msra.mxu0 0
        %1437 = vmatprep.subr.bf16.mxu0 0
        %1438 = vmatpush1.bf16.msra.mxu0 0
        %1439 = vmatprep.subr.bf16.mxu0 0
        %1440 = vmatpush1.bf16.msra.mxu0 0
        %1441 = vmatprep.subr.bf16.mxu0 0
        %1442 = vmatpush1.bf16.msra.mxu0 0
        %1443 = vmatprep.subr.bf16.mxu0 0
        %1444 = vmatpush1.bf16.msra.mxu0 0
        %1445 = vmatprep.subr.bf16.mxu0 0
        %1446 = vmatpush1.bf16.msra.mxu0 0
        %1447 = vmatprep.subr.bf16.mxu0 0
        %1448 = vmatpush1.bf16.msra.mxu0 0
        %1449 = vmatprep.subr.bf16.mxu0 0
        %1450 = vmatpush1.bf16.msra.mxu0 0
        %1451 = vmatprep.subr.bf16.mxu0 0
        %1452 = vmatpush1.bf16.msra.mxu0 0
        %1453 = vmatprep.subr.bf16.mxu0 0
        %1454 = vmatpush1.bf16.msra.mxu0 0
        %1455 = vmatprep.subr.bf16.mxu0 0
        %1456 = vmatpush1.bf16.msra.mxu0 0
        %1457 = vmatprep.subr.bf16.mxu0 0
        %1458 = vmatpush1.bf16.msra.mxu0 0
        %1459 = vmatprep.mubr.bf16.mxu0 0
        %1460 = vmatmul.mubr.bf16.gmra.mrb[0].mxu0 %v1425
        %v1461 = vpop.f32.mrb[0].mxu0
        %v1462 = vadd.f32 %v1410, %v1461
        %v1463 = vpop.f32.mrb[0].mxu0
        %v1464 = vpop.f32.mrb[0].mxu0
        %v1465 = vpop.f32.mrb[0].mxu0
        %1466 = vdwg.mxu0
        %v1467 = vmul.f32 %v1462, 0.5
        %v1468 = vmul.f32 %v1462, 0.70710677
        %v1469 = verf.f32.pop %v1468
        %v1470 = vadd.f32 %v1469, 1.0
        %v1471 = vmul.f32 %v1467, %v1470
        %v1472 = vpack.c.bf16 %v1471, %v1471
        %v1473 = vld [vmem:[#allocation20] sm:$0xf]
        %v1474 = vld [vmem:[#allocation20 + $0x4] sm:$0xf]
        %v1475 = vld [vmem:[#allocation20 + $0x8] sm:$0xf]
        %v1476 = vld [vmem:[#allocation20 + $0xc] sm:$0xf]
        %v1477 = vld [vmem:[#allocation20 + $0x10] sm:$0xf]
        %v1478 = vld [vmem:[#allocation20 + $0x14] sm:$0xf]
        %v1479 = vld [vmem:[#allocation20 + $0x18] sm:$0xf]
        %v1480 = vld [vmem:[#allocation20 + $0x1c] sm:$0xf]
        %v1481 = vld [vmem:[#allocation22] sm:$0x1]
        %v1483 = vlaneseq
        %v1484 = vshrl.u32 %v1483, 7
        %v1485 = vsub.s32 0, %v1484
        %v1486 = vrot.slane %v1481, %v1485
        %v1496 = vunpack.c.l.b16 %v1473
        %v1497 = vunpack.c.l.b16 %v1474
        %v1498 = vunpack.c.l.b16 %v1475
        %v1499 = vunpack.c.l.b16 %v1476
        %v1500 = vunpack.c.l.b16 %v1477
        %v1501 = vunpack.c.l.b16 %v1478
        %v1502 = vunpack.c.l.b16 %v1479
        %v1503 = vunpack.c.l.b16 %v1480
        %v1504 = vpack.c.b16 %v1497, %v1496
        %v1505 = vpack.c.b16 %v1499, %v1498
        %v1506 = vpack.c.b16 %v1501, %v1500
        %v1507 = vpack.c.b16 %v1503, %v1502
        %vm1512 = vcmask 523264
        %v1514 = vsel %vm1512, %v1472, 0
        %1516 = vmatprep.subr.bf16.mxu0 0
        %1517 = vmatpush1.bf16.msra.mxu0 %v1504
        %1518 = vmatprep.subr.bf16.mxu0 0
        %1519 = vmatpush1.bf16.msra.mxu0 %v1505
        %1520 = vmatprep.subr.bf16.mxu0 0
        %1521 = vmatpush1.bf16.msra.mxu0 %v1506
        %1522 = vmatprep.subr.bf16.mxu0 0
        %1523 = vmatpush1.bf16.msra.mxu0 %v1507
        %1524 = vmatprep.subr.bf16.mxu0 0
        %1525 = vmatpush1.bf16.msra.mxu0 0
        %1526 = vmatprep.subr.bf16.mxu0 0
        %1527 = vmatpush1.bf16.msra.mxu0 0
        %1528 = vmatprep.subr.bf16.mxu0 0
        %1529 = vmatpush1.bf16.msra.mxu0 0
        %1530 = vmatprep.subr.bf16.mxu0 0
        %1531 = vmatpush1.bf16.msra.mxu0 0
        %1532 = vmatprep.subr.bf16.mxu0 0
        %1533 = vmatpush1.bf16.msra.mxu0 0
        %1534 = vmatprep.subr.bf16.mxu0 0
        %1535 = vmatpush1.bf16.msra.mxu0 0
        %1536 = vmatprep.subr.bf16.mxu0 0
        %1537 = vmatpush1.bf16.msra.mxu0 0
        %1538 = vmatprep.subr.bf16.mxu0 0
        %1539 = vmatpush1.bf16.msra.mxu0 0
        %1540 = vmatprep.subr.bf16.mxu0 0
        %1541 = vmatpush1.bf16.msra.mxu0 0
        %1542 = vmatprep.subr.bf16.mxu0 0
        %1543 = vmatpush1.bf16.msra.mxu0 0
        %1544 = vmatprep.subr.bf16.mxu0 0
        %1545 = vmatpush1.bf16.msra.mxu0 0
        %1546 = vmatprep.subr.bf16.mxu0 0
        %1547 = vmatpush1.bf16.msra.mxu0 0
        %1548 = vmatprep.mubr.bf16.mxu0 0
        %1549 = vmatmul.mubr.bf16.gmra.mrb[0].mxu0 %v1514
        %v1550 = vpop.f32.mrb[0].mxu0
        %v1551 = vadd.f32 %v1486, %v1550
        %v1552 = vpop.f32.mrb[0].mxu0
        %v1553 = vpop.f32.mrb[0].mxu0
        %v1554 = vpop.f32.mrb[0].mxu0
        %1555 = vdwg.mxu0
        %v1556 = vadd.f32 %v1370, %v1551
        %1557 = vst.msk [vmem:[%s613] sm:$0xff] %vm618, %v1556
        %s1558 = sand.u32 %s322, 1
        %s1559 = scalar_lea.sflag [#allocation4], %s1558
        %s1560 = sand.u32 %s322, 1
        %s1561 = smul.addr %s1560, 8
        %s1562 = scalar_lea.vmem [#allocation23], %s1561
        // Predicated region
        $region125: #{tpu_custom_call.1} parent=71 // pred_check
          %p1563 = pneg %p332
        $region126: #{tpu_custom_call.1} parent=71 // pred_check_branch
          %1565 = sbr.rel (%p1563) target = $region128
        $region127: #{tpu_custom_call.1} parent=71 // pred_region
          %s1567 = ssub.s32 128, 128
          %1568 = vsyncadd %s1559, %s1567
          %s1569 = smul.addr %s36, 128
          %s1570 = scalar_lea.hbm %s13, %s1569
          %s1572 = sshll.u32 %s1562, 4
          %s1573 = int_to_ptr.vmem [resolvable:$true] %s1572
          %1575 = dma.vmem_to_hbm [thread:$0]  %s1573, 128, %s1570, %s1559
        $region128: #{tpu_custom_call.1} parent=71 // pred_fallthru
          _
      $region72: #{tpu_custom_call.1} parent=5 // pred_fallthru
        _
      %p1576 = scmp.le.s32.totalorder 2, %s31
      // Predicated region
      $region129: #{tpu_custom_call.1} parent=5 // pred_check
        %p1577 = pneg %p1576
      $region130: #{tpu_custom_call.1} parent=5 // pred_check_branch
        %1579 = sbr.rel (%p1577) target = $region132
      $region131: #{tpu_custom_call.1} parent=5 // pred_region
        %s1580 = ssub.s32 %s31, 2
        // Predicated region
        $region133: #{tpu_custom_call.1} parent=131 // pred_check
          %p1581 = pneg %p338
        $region134: #{tpu_custom_call.1} parent=131 // pred_check_branch
          %1583 = sbr.rel (%p1581) target = $region136
        $region135: #{tpu_custom_call.1} parent=131 // pred_region
          %s1584 = sand.u32 %s323, 1
          %s1585 = scalar_lea.sflag [#allocation4], %s1584
          %s1586 = sand.u32 %s323, 1
          %s1587 = smul.addr %s1586, 8
          %s1588 = scalar_lea.vmem [#allocation23], %s1587
          %1589 = dma.done %s1585, 128
        $region136: #{tpu_custom_call.1} parent=131 // pred_fallthru
          _
      $region132: #{tpu_custom_call.1} parent=5 // pred_fallthru
        _
    $region6: #{tpu_custom_call.1} parent=1 // loop_footer
      %s35 = sadd.s32 1, %s31
    $region7: #{tpu_custom_call.1} parent=1 // loop_footer_branch
      %30 = sbr.rel target = $region3
    $region8: #{tpu_custom_call.1} parent=1 // loop_exit
      _
    %1590 = vsyncpa [#allocation3], 1
    %s1591 = scalar_lea.sflag [#allocation3], 1
    %1592 = vsyncpa %s1591, 1
    %1593 = vsyncpa [#allocation6], 1
    %1594 = vsyncpa [#allocation9], 1
    %1595 = vsyncpa [#allocation12], 1
    %1596 = vsyncpa [#allocation15], 1
    %1597 = vsyncpa [#allocation18], 1
    %1598 = vsyncpa [#allocation21], 1
    %1599 = vsyncpa [#allocation4], 1
    %s1600 = scalar_lea.sflag [#allocation4], 1
    %1601 = vsyncpa %s1600, 1

// kernel: tpu_custom_call.1
$region0: #{tpu_custom_call.1}
  #allocation0 [shape = 'u32[]', space=smem, size = 0x4, offset = 0x4, fixed_abs, tag = 'smem constant byte address 0x4 - core index']
  #allocation1 [shape = 'u32[144,128]{1,0:T(1,128)}', space=vmem, size = 0x12000, scoped, tag = 'internal scratch']
  %s0 = inlined_call_operand.hbm [shape: f32[2,8,32], index: 0, kind: input, shape index: {}]
  %s1 = inlined_call_operand.hbm [shape: f32[1,32], index: 1, kind: input, shape index: {}]
  %s2 = inlined_call_operand.hbm [shape: f32[1,32], index: 2, kind: input, shape index: {}]
  %s3 = inlined_call_operand.hbm [shape: bf16[32,96], index: 3, kind: input, shape index: {}]
  %s4 = inlined_call_operand.hbm [shape: f32[1,96], index: 4, kind: input, shape index: {}]
  %s5 = inlined_call_operand.hbm [shape: bf16[4,8,32], index: 5, kind: input, shape index: {}]
  %s6 = inlined_call_operand.hbm [shape: f32[1,32], index: 6, kind: input, shape index: {}]
  %s7 = inlined_call_operand.hbm [shape: f32[1,32], index: 7, kind: input, shape index: {}]
  %s8 = inlined_call_operand.hbm [shape: f32[1,32], index: 8, kind: input, shape index: {}]
  %s9 = inlined_call_operand.hbm [shape: bf16[32,64], index: 9, kind: input, shape index: {}]
  %s10 = inlined_call_operand.hbm [shape: f32[1,64], index: 10, kind: input, shape index: {}]
  %s11 = inlined_call_operand.hbm [shape: bf16[64,32], index: 11, kind: input, shape index: {}]
  %s12 = inlined_call_operand.hbm [shape: f32[1,32], index: 12, kind: input, shape index: {}]
  %s13 = inlined_call_operand.hbm [shape: f32[2,8,32], index: 13, kind: output, shape index: {}]
  %s14 = sld [smem:[#allocation0]]
  $region137: #{tpu_custom_call.1} parent=0
    _
  %s16 = ssub.s32 1, %s14
  %s17 = scalar_select 0, %s16, %s14
  $region1: #{tpu_custom_call.1} parent=0
    #allocation2 [shape = 'u8[8192]{0}', space=vmem, size = 0x2000, scoped, tag = 'input window, operand 0']
    #allocation3 [shape = 's32[2]{0}', space=sflag, size = 0x8, scoped, tag = 'scoped memory for tpu_custom_call.1']
    #allocation4 [shape = 's32[2]{0}', space=sflag, size = 0x8, scoped, tag = 'scoped memory for tpu_custom_call.1']
    #allocation5 [shape = 'u8[512]{0}', space=vmem, size = 0x400, scoped, tag = 'input window, operand 1, single buffered']
    #allocation6 [shape = 's32[1]{0}', space=sflag, size = 0x4, scoped, tag = 'scoped memory for tpu_custom_call.1']
    #allocation7 [shape = 'u8[512]{0}', space=vmem, size = 0x400, scoped, tag = 'input window, operand 2, single buffered']
    #allocation8 [shape = 'u8[8192]{0}', space=vmem, size = 0x2000, scoped, tag = 'input window, operand 3, single buffered']
    #allocation9 [shape = 's32[1]{0}', space=sflag, size = 0x4, scoped, tag = 'scoped memory for tpu_custom_call.1']
    #allocation10 [shape = 'u8[512]{0}', space=vmem, size = 0x400, scoped, tag = 'input window, operand 4, single buffered']
    #allocation11 [shape = 'u8[8192]{0}', space=vmem, size = 0x2000, scoped, tag = 'input window, operand 5, single buffered']
    #allocation12 [shape = 's32[1]{0}', space=sflag, size = 0x4, scoped, tag = 'scoped memory for tpu_custom_call.1']
    #allocation13 [shape = 'u8[512]{0}', space=vmem, size = 0x400, scoped, tag = 'input window, operand 6, single buffered']
    #allocation14 [shape = 'u8[512]{0}', space=vmem, size = 0x400, scoped, tag = 'input window, operand 7, single buffered']
    #allocation15 [shape = 's32[1]{0}', space=sflag, size = 0x4, scoped, tag = 'scoped memory for tpu_custom_call.1']
    #allocation16 [shape = 'u8[512]{0}', space=vmem, size = 0x400, scoped, tag = 'input window, operand 8, single buffered']
    #allocation17 [shape = 'u8[8192]{0}', space=vmem, size = 0x2000, scoped, tag = 'input window, operand 9, single buffered']
    #allocation18 [shape = 's32[1]{0}', space=sflag, size = 0x4, scoped, tag = 'scoped memory for tpu_custom_call.1']
    #allocation19 [shape = 'u8[512]{0}', space=vmem, size = 0x400, scoped, tag = 'input window, operand 10, single buffered']
    #allocation20 [shape = 'u8[16384]{0}', space=vmem, size = 0x4000, scoped, tag = 'input window, operand 11, single buffered']
    #allocation21 [shape = 's32[1]{0}', space=sflag, size = 0x4, scoped, tag = 'scoped memory for tpu_custom_call.1']
    #allocation22 [shape = 'u8[512]{0}', space=vmem, size = 0x400, scoped, tag = 'input window, operand 12, single buffered']
    #allocation23 [shape = 'u8[8192]{0}', space=vmem, size = 0x2000, scoped, tag = 'output window, operand 0']
    %18 = vsyncpa [#allocation3], 0
    %s19 = scalar_lea.sflag [#allocation3], 1
    %20 = vsyncpa %s19, 0
    %21 = vsyncpa [#allocation6], 0
    %22 = vsyncpa [#allocation9], 0
    %23 = vsyncpa [#allocation12], 0
    %24 = vsyncpa [#allocation15], 0
    %25 = vsyncpa [#allocation18], 0
    %26 = vsyncpa [#allocation21], 0
    %27 = vsyncpa [#allocation4], 0
    %s28 = scalar_lea.sflag [#allocation4], 1
    %29 = vsyncpa %s28, 0
    loop: start=0, step=1, limit=4
    $region2: #{tpu_custom_call.1} parent=1 // loop_pre_header
      _
    $region3: #{tpu_custom_call.1} parent=1 // loop_header
      %s31 = sphi 0, %s35
      %p32 = scmp.ge.s32.totalorder %s31, 4
      %s41 = sphi 0, %s43
      %s44 = sphi 0, %s41
      %s45 = sphi 0, %s44
      %s61 = sphi 0, %s45
      %s65 = sphi 0, %s65
      %s67 = sphi 0, %s65
      %s68 = sphi 0, %s67
      %s82 = sphi 0, %s68
      %s86 = sphi 0, %s86
      %s88 = sphi 0, %s86
      %s89 = sphi 0, %s88
      %s103 = sphi 0, %s89
      %s107 = sphi 0, %s107
      %s109 = sphi 0, %s107
      %s110 = sphi 0, %s109
      %s124 = sphi 0, %s110
      %s128 = sphi 0, %s128
      %s130 = sphi 0, %s128
      %s131 = sphi 0, %s130
      %s145 = sphi 0, %s131
      %s149 = sphi 0, %s149
      %s151 = sphi 0, %s149
      %s152 = sphi 0, %s151
      %s166 = sphi 0, %s152
      %s170 = sphi 0, %s170
      %s172 = sphi 0, %s170
      %s173 = sphi 0, %s172
      %s187 = sphi 0, %s173
      %s191 = sphi 0, %s191
      %s193 = sphi 0, %s191
      %s194 = sphi 0, %s193
      %s208 = sphi 0, %s194
      %s212 = sphi 0, %s212
      %s214 = sphi 0, %s212
      %s215 = sphi 0, %s214
      %s229 = sphi 0, %s215
      %s233 = sphi 0, %s233
      %s235 = sphi 0, %s233
      %s236 = sphi 0, %s235
      %s250 = sphi 0, %s236
      %s254 = sphi 0, %s254
      %s256 = sphi 0, %s254
      %s257 = sphi 0, %s256
      %s271 = sphi 0, %s257
      %s275 = sphi 0, %s275
      %s277 = sphi 0, %s275
      %s278 = sphi 0, %s277
      %s292 = sphi 0, %s278
      %s296 = sphi 0, %s296
      %s298 = sphi 0, %s296
      %s299 = sphi 0, %s298
      %s313 = sphi 0, %s299
      %s319 = sphi 0, %s321
      %s322 = sphi 0, %s319
      %s323 = sphi 0, %s322
      %s339 = sphi 0, %s323
    $region4: #{tpu_custom_call.1} parent=1 // loop_header_branch
      %34 = sbr.rel (%p32) target = $region8
    $region5: #{tpu_custom_call.1} parent=1 // loop_body
      %s36 = ssub.s32 %s31, 1
      %s37 = ssub.s32 %s31, 2
      %s38 = sadd.s32 %s31, 1
      %s39 = ssub.s32 %s31, %s38
      %p40 = scmp.eq.s32.totalorder %s39, 0
      %s42 = sadd.s32 %s41, 1
      %s43 = scalar_select %p40, %s41, %s42
      %p46 = pneg %p40
      %p47 = scmp.eq.s32.totalorder %s31, 1
      %p48 = por %p46, %p47
      %p49 = scmp.ne.s32.totalorder %s41, %s44
      %p50 = scmp.eq.s32.totalorder %s31, 0
      %p51 = por %p49, %p50
      %p52 = scmp.ne.s32.totalorder %s41, %s44
      %p53 = scmp.eq.s32.totalorder %s36, 1
      %p54 = por %p52, %p53
      %p55 = scmp.ne.s32.totalorder %s44, %s45
      %p56 = scmp.eq.s32.totalorder %s36, 0
      %p57 = por %p55, %p56
      %p58 = scmp.ne.s32.totalorder %s44, %s45
      %p59 = scmp.eq.s32.totalorder %s37, 1
      %p60 = por %p58, %p59
      %p62 = scmp.ne.s32.totalorder %s45, %s61
      %p63 = scmp.eq.s32.totalorder %s37, 0
      %p64 = por %p62, %p63
      %s66 = sadd.s32 %s65, 1
      %p69 = scmp.eq.s32.totalorder %s31, 1
      %p70 = scmp.ne.s32.totalorder %s65, %s67
      %p71 = scmp.eq.s32.totalorder %s31, 0
      %p72 = por %p70, %p71
      %p73 = scmp.ne.s32.totalorder %s65, %s67
      %p74 = scmp.eq.s32.totalorder %s36, 1
      %p75 = por %p73, %p74
      %p76 = scmp.ne.s32.totalorder %s67, %s68
      %p77 = scmp.eq.s32.totalorder %s36, 0
      %p78 = por %p76, %p77
      %p79 = scmp.ne.s32.totalorder %s67, %s68
      %p80 = scmp.eq.s32.totalorder %s37, 1
      %p81 = por %p79, %p80
      %p83 = scmp.ne.s32.totalorder %s68, %s82
      %p84 = scmp.eq.s32.totalorder %s37, 0
      %p85 = por %p83, %p84
      %s87 = sadd.s32 %s86, 1
      %p90 = scmp.eq.s32.totalorder %s31, 1
      %p91 = scmp.ne.s32.totalorder %s86, %s88
      %p92 = scmp.eq.s32.totalorder %s31, 0
      %p93 = por %p91, %p92
      %p94 = scmp.ne.s32.totalorder %s86, %s88
      %p95 = scmp.eq.s32.totalorder %s36, 1
      %p96 = por %p94, %p95
      %p97 = scmp.ne.s32.totalorder %s88, %s89
      %p98 = scmp.eq.s32.totalorder %s36, 0
      %p99 = por %p97, %p98
      %p100 = scmp.ne.s32.totalorder %s88, %s89
      %p101 = scmp.eq.s32.totalorder %s37, 1
      %p102 = por %p100, %p101
      %p104 = scmp.ne.s32.totalorder %s89, %s103
      %p105 = scmp.eq.s32.totalorder %s37, 0
      %p106 = por %p104, %p105
      %s108 = sadd.s32 %s107, 1
      %p111 = scmp.eq.s32.totalorder %s31, 1
      %p112 = scmp.ne.s32.totalorder %s107, %s109
      %p113 = scmp.eq.s32.totalorder %s31, 0
      %p114 = por %p112, %p113
      %p115 = scmp.ne.s32.totalorder %s107, %s109
      %p116 = scmp.eq.s32.totalorder %s36, 1
      %p117 = por %p115, %p116
      %p118 = scmp.ne.s32.totalorder %s109, %s110
      %p119 = scmp.eq.s32.totalorder %s36, 0
      %p120 = por %p118, %p119
      %p121 = scmp.ne.s32.totalorder %s109, %s110
      %p122 = scmp.eq.s32.totalorder %s37, 1
      %p123 = por %p121, %p122
      %p125 = scmp.ne.s32.totalorder %s110, %s124
      %p126 = scmp.eq.s32.totalorder %s37, 0
      %p127 = por %p125, %p126
      %s129 = sadd.s32 %s128, 1
      %p132 = scmp.eq.s32.totalorder %s31, 1
      %p133 = scmp.ne.s32.totalorder %s128, %s130
      %p134 = scmp.eq.s32.totalorder %s31, 0
      %p135 = por %p133, %p134
      %p136 = scmp.ne.s32.totalorder %s128, %s130
      %p137 = scmp.eq.s32.totalorder %s36, 1
      %p138 = por %p136, %p137
      %p139 = scmp.ne.s32.totalorder %s130, %s131
      %p140 = scmp.eq.s32.totalorder %s36, 0
      %p141 = por %p139, %p140
      %p142 = scmp.ne.s32.totalorder %s130, %s131
      %p143 = scmp.eq.s32.totalorder %s37, 1
      %p144 = por %p142, %p143
      %p146 = scmp.ne.s32.totalorder %s131, %s145
      %p147 = scmp.eq.s32.totalorder %s37, 0
      %p148 = por %p146, %p147
      %s150 = sadd.s32 %s149, 1
      %p153 = scmp.eq.s32.totalorder %s31, 1
      %p154 = scmp.ne.s32.totalorder %s149, %s151
      %p155 = scmp.eq.s32.totalorder %s31, 0
      %p156 = por %p154, %p155
      %p157 = scmp.ne.s32.totalorder %s149, %s151
      %p158 = scmp.eq.s32.totalorder %s36, 1
      %p159 = por %p157, %p158
      %p160 = scmp.ne.s32.totalorder %s151, %s152
      %p161 = scmp.eq.s32.totalorder %s36, 0
      %p162 = por %p160, %p161
      %p163 = scmp.ne.s32.totalorder %s151, %s152
      %p164 = scmp.eq.s32.totalorder %s37, 1
      %p165 = por %p163, %p164
      %p167 = scmp.ne.s32.totalorder %s152, %s166
      %p168 = scmp.eq.s32.totalorder %s37, 0
      %p169 = por %p167, %p168
      %s171 = sadd.s32 %s170, 1
      %p174 = scmp.eq.s32.totalorder %s31, 1
      %p175 = scmp.ne.s32.totalorder %s170, %s172
      %p176 = scmp.eq.s32.totalorder %s31, 0
      %p177 = por %p175, %p176
      %p178 = scmp.ne.s32.totalorder %s170, %s172
      %p179 = scmp.eq.s32.totalorder %s36, 1
      %p180 = por %p178, %p179
      %p181 = scmp.ne.s32.totalorder %s172, %s173
      %p182 = scmp.eq.s32.totalorder %s36, 0
      %p183 = por %p181, %p182
      %p184 = scmp.ne.s32.totalorder %s172, %s173
      %p185 = scmp.eq.s32.totalorder %s37, 1
      %p186 = por %p184, %p185
      %p188 = scmp.ne.s32.totalorder %s173, %s187
      %p189 = scmp.eq.s32.totalorder %s37, 0
      %p190 = por %p188, %p189
      %s192 = sadd.s32 %s191, 1
      %p195 = scmp.eq.s32.totalorder %s31, 1
      %p196 = scmp.ne.s32.totalorder %s191, %s193
      %p197 = scmp.eq.s32.totalorder %s31, 0
      %p198 = por %p196, %p197
      %p199 = scmp.ne.s32.totalorder %s191, %s193
      %p200 = scmp.eq.s32.totalorder %s36, 1
      %p201 = por %p199, %p200
      %p202 = scmp.ne.s32.totalorder %s193, %s194
      %p203 = scmp.eq.s32.totalorder %s36, 0
      %p204 = por %p202, %p203
      %p205 = scmp.ne.s32.totalorder %s193, %s194
      %p206 = scmp.eq.s32.totalorder %s37, 1
      %p207 = por %p205, %p206
      %p209 = scmp.ne.s32.totalorder %s194, %s208
      %p210 = scmp.eq.s32.totalorder %s37, 0
      %p211 = por %p209, %p210
      %s213 = sadd.s32 %s212, 1
      %p216 = scmp.eq.s32.totalorder %s31, 1
      %p217 = scmp.ne.s32.totalorder %s212, %s214
      %p218 = scmp.eq.s32.totalorder %s31, 0
      %p219 = por %p217, %p218
      %p220 = scmp.ne.s32.totalorder %s212, %s214
      %p221 = scmp.eq.s32.totalorder %s36, 1
      %p222 = por %p220, %p221
      %p223 = scmp.ne.s32.totalorder %s214, %s215
      %p224 = scmp.eq.s32.totalorder %s36, 0
      %p225 = por %p223, %p224
      %p226 = scmp.ne.s32.totalorder %s214, %s215
      %p227 = scmp.eq.s32.totalorder %s37, 1
      %p228 = por %p226, %p227
      %p230 = scmp.ne.s32.totalorder %s215, %s229
      %p231 = scmp.eq.s32.totalorder %s37, 0
      %p232 = por %p230, %p231
      %s234 = sadd.s32 %s233, 1
      %p237 = scmp.eq.s32.totalorder %s31, 1
      %p238 = scmp.ne.s32.totalorder %s233, %s235
      %p239 = scmp.eq.s32.totalorder %s31, 0
      %p240 = por %p238, %p239
      %p241 = scmp.ne.s32.totalorder %s233, %s235
      %p242 = scmp.eq.s32.totalorder %s36, 1
      %p243 = por %p241, %p242
      %p244 = scmp.ne.s32.totalorder %s235, %s236
      %p245 = scmp.eq.s32.totalorder %s36, 0
      %p246 = por %p244, %p245
      %p247 = scmp.ne.s32.totalorder %s235, %s236
      %p248 = scmp.eq.s32.totalorder %s37, 1
      %p249 = por %p247, %p248
      %p251 = scmp.ne.s32.totalorder %s236, %s250
      %p252 = scmp.eq.s32.totalorder %s37, 0
      %p253 = por %p251, %p252
      %s255 = sadd.s32 %s254, 1
      %p258 = scmp.eq.s32.totalorder %s31, 1
      %p259 = scmp.ne.s32.totalorder %s254, %s256
      %p260 = scmp.eq.s32.totalorder %s31, 0
      %p261 = por %p259, %p260
      %p262 = scmp.ne.s32.totalorder %s254, %s256
      %p263 = scmp.eq.s32.totalorder %s36, 1
      %p264 = por %p262, %p263
      %p265 = scmp.ne.s32.totalorder %s256, %s257
      %p266 = scmp.eq.s32.totalorder %s36, 0
      %p267 = por %p265, %p266
      %p268 = scmp.ne.s32.totalorder %s256, %s257
      %p269 = scmp.eq.s32.totalorder %s37, 1
      %p270 = por %p268, %p269
      %p272 = scmp.ne.s32.totalorder %s257, %s271
      %p273 = scmp.eq.s32.totalorder %s37, 0
      %p274 = por %p272, %p273
      %s276 = sadd.s32 %s275, 1
      %p279 = scmp.eq.s32.totalorder %s31, 1
      %p280 = scmp.ne.s32.totalorder %s275, %s277
      %p281 = scmp.eq.s32.totalorder %s31, 0
      %p282 = por %p280, %p281
      %p283 = scmp.ne.s32.totalorder %s275, %s277
      %p284 = scmp.eq.s32.totalorder %s36, 1
      %p285 = por %p283, %p284
      %p286 = scmp.ne.s32.totalorder %s277, %s278
      %p287 = scmp.eq.s32.totalorder %s36, 0
      %p288 = por %p286, %p287
      %p289 = scmp.ne.s32.totalorder %s277, %s278
      %p290 = scmp.eq.s32.totalorder %s37, 1
      %p291 = por %p289, %p290
      %p293 = scmp.ne.s32.totalorder %s278, %s292
      %p294 = scmp.eq.s32.totalorder %s37, 0
      %p295 = por %p293, %p294
      %s297 = sadd.s32 %s296, 1
      %p300 = scmp.eq.s32.totalorder %s31, 1
      %p301 = scmp.ne.s32.totalorder %s296, %s298
      %p302 = scmp.eq.s32.totalorder %s31, 0
      %p303 = por %p301, %p302
      %p304 = scmp.ne.s32.totalorder %s296, %s298
      %p305 = scmp.eq.s32.totalorder %s36, 1
      %p306 = por %p304, %p305
      %p307 = scmp.ne.s32.totalorder %s298, %s299
      %p308 = scmp.eq.s32.totalorder %s36, 0
      %p309 = por %p307, %p308
      %p310 = scmp.ne.s32.totalorder %s298, %s299
      %p311 = scmp.eq.s32.totalorder %s37, 1
      %p312 = por %p310, %p311
      %p314 = scmp.ne.s32.totalorder %s299, %s313
      %p315 = scmp.eq.s32.totalorder %s37, 0
      %p316 = por %p314, %p315
      %s317 = ssub.s32 %s31, %s38
      %p318 = scmp.eq.s32.totalorder %s317, 0
      %s320 = sadd.s32 %s319, 1
      %s321 = scalar_select %p318, %s319, %s320
      %p324 = pneg %p318
      %p325 = scmp.eq.s32.totalorder %s31, 1
      %p326 = por %p324, %p325
      %p327 = scmp.ne.s32.totalorder %s319, %s322
      %p328 = scmp.eq.s32.totalorder %s31, 0
      %p329 = por %p327, %p328
      %p330 = scmp.ne.s32.totalorder %s319, %s322
      %p331 = scmp.eq.s32.totalorder %s36, 1
      %p332 = por %p330, %p331
      %p333 = scmp.ne.s32.totalorder %s322, %s323
      %p334 = scmp.eq.s32.totalorder %s36, 0
      %p335 = por %p333, %p334
      %p336 = scmp.ne.s32.totalorder %s322, %s323
      %p337 = scmp.eq.s32.totalorder %s37, 1
      %p338 = por %p336, %p337
      %p340 = scmp.ne.s32.totalorder %s323, %s339
      %p341 = scmp.eq.s32.totalorder %s37, 0
      %p342 = por %p340, %p341
      %p343 = scmp.le.s32.totalorder 1, %s31
      %p344 = scmp.lt.s32.totalorder %s31, 3
      %p345 = pnand %p343, %p344
      %p346 = pneg %p345
      // Predicated region
      $region9: #{tpu_custom_call.1} parent=5 // pred_check
        _
      $region10: #{tpu_custom_call.1} parent=5 // pred_check_branch
        %348 = sbr.rel (%p345) target = $region12
      $region11: #{tpu_custom_call.1} parent=5 // pred_region
        %s349 = ssub.s32 %s31, 1
        // Predicated region
        $region13: #{tpu_custom_call.1} parent=11 // pred_check
          %p350 = pneg %p78
        $region14: #{tpu_custom_call.1} parent=11 // pred_check_branch
          %352 = sbr.rel (%p350) target = $region16
        $region15: #{tpu_custom_call.1} parent=11 // pred_region
          %s354 = ssub.s32 16, 16
          %355 = vsyncadd [#allocation6], %s354
          %s357 = sshll.u32 [#allocation5], 4
          %s358 = int_to_ptr.vmem [resolvable:$true] %s357
          %360 = dma.hbm_to_vmem [thread:$0]  %s1, 16, %s358, [#allocation6]
        $region16: #{tpu_custom_call.1} parent=11 // pred_fallthru
          _
        // Predicated region
        $region17: #{tpu_custom_call.1} parent=11 // pred_check
          %p361 = pneg %p99
        $region18: #{tpu_custom_call.1} parent=11 // pred_check_branch
          %363 = sbr.rel (%p361) target = $region20
        $region19: #{tpu_custom_call.1} parent=11 // pred_region
          %s365 = ssub.s32 16, 16
          %366 = vsyncadd [#allocation6], %s365
          %s368 = sshll.u32 [#allocation7], 4
          %s369 = int_to_ptr.vmem [resolvable:$true] %s368
          %371 = dma.hbm_to_vmem [thread:$0]  %s2, 16, %s369, [#allocation6]
        $region20: #{tpu_custom_call.1} parent=11 // pred_fallthru
          _
        // Predicated region
        $region21: #{tpu_custom_call.1} parent=11 // pred_check
          %p372 = pneg %p120
        $region22: #{tpu_custom_call.1} parent=11 // pred_check_branch
          %374 = sbr.rel (%p372) target = $region24
        $region23: #{tpu_custom_call.1} parent=11 // pred_region
          %s376 = ssub.s32 256, 256
          %377 = vsyncadd [#allocation9], %s376
          %s378 = sshll.u32 [#allocation8], 4
          %s379 = int_to_ptr.vmem [resolvable:$true] %s378
          %384 = dma.hbm_to_vmem [thread:$0]  %s3, 256, %s379, [#allocation9], 64, 64, 4
        $region24: #{tpu_custom_call.1} parent=11 // pred_fallthru
          _
        // Predicated region
        $region25: #{tpu_custom_call.1} parent=11 // pred_check
          %p385 = pneg %p141
        $region26: #{tpu_custom_call.1} parent=11 // pred_check_branch
          %387 = sbr.rel (%p385) target = $region28
        $region27: #{tpu_custom_call.1} parent=11 // pred_region
          %s389 = ssub.s32 16, 16
          %390 = vsyncadd [#allocation9], %s389
          %s392 = sshll.u32 [#allocation10], 4
          %s393 = int_to_ptr.vmem [resolvable:$true] %s392
          %395 = dma.hbm_to_vmem [thread:$0]  %s4, 16, %s393, [#allocation9]
        $region28: #{tpu_custom_call.1} parent=11 // pred_fallthru
          _
        // Predicated region
        $region29: #{tpu_custom_call.1} parent=11 // pred_check
          %p396 = pneg %p162
        $region30: #{tpu_custom_call.1} parent=11 // pred_check_branch
          %398 = sbr.rel (%p396) target = $region32
        $region31: #{tpu_custom_call.1} parent=11 // pred_region
          %s400 = ssub.s32 256, 256
          %401 = vsyncadd [#allocation12], %s400
          %s402 = sshll.u32 [#allocation11], 4
          %s403 = int_to_ptr.vmem [resolvable:$true] %s402
          %408 = dma.hbm_to_vmem [thread:$0]  %s5, 256, %s403, [#allocation12], 64, 64, 4
        $region32: #{tpu_custom_call.1} parent=11 // pred_fallthru
          _
        // Predicated region
        $region33: #{tpu_custom_call.1} parent=11 // pred_check
          %p409 = pneg %p183
        $region34: #{tpu_custom_call.1} parent=11 // pred_check_branch
          %411 = sbr.rel (%p409) target = $region36
        $region35: #{tpu_custom_call.1} parent=11 // pred_region
          %s413 = ssub.s32 16, 16
          %414 = vsyncadd [#allocation12], %s413
          %s416 = sshll.u32 [#allocation13], 4
          %s417 = int_to_ptr.vmem [resolvable:$true] %s416
          %419 = dma.hbm_to_vmem [thread:$0]  %s6, 16, %s417, [#allocation12]
        $region36: #{tpu_custom_call.1} parent=11 // pred_fallthru
          _
        // Predicated region
        $region37: #{tpu_custom_call.1} parent=11 // pred_check
          %p420 = pneg %p204
        $region38: #{tpu_custom_call.1} parent=11 // pred_check_branch
          %422 = sbr.rel (%p420) target = $region40
        $region39: #{tpu_custom_call.1} parent=11 // pred_region
          %s424 = ssub.s32 16, 16
          %425 = vsyncadd [#allocation15], %s424
          %s427 = sshll.u32 [#allocation14], 4
          %s428 = int_to_ptr.vmem [resolvable:$true] %s427
          %430 = dma.hbm_to_vmem [thread:$0]  %s7, 16, %s428, [#allocation15]
        $region40: #{tpu_custom_call.1} parent=11 // pred_fallthru
          _
        // Predicated region
        $region41: #{tpu_custom_call.1} parent=11 // pred_check
          %p431 = pneg %p225
        $region42: #{tpu_custom_call.1} parent=11 // pred_check_branch
          %433 = sbr.rel (%p431) target = $region44
        $region43: #{tpu_custom_call.1} parent=11 // pred_region
          %s435 = ssub.s32 16, 16
          %436 = vsyncadd [#allocation15], %s435
          %s438 = sshll.u32 [#allocation16], 4
          %s439 = int_to_ptr.vmem [resolvable:$true] %s438
          %441 = dma.hbm_to_vmem [thread:$0]  %s8, 16, %s439, [#allocation15]
        $region44: #{tpu_custom_call.1} parent=11 // pred_fallthru
          _
        // Predicated region
        $region45: #{tpu_custom_call.1} parent=11 // pred_check
          %p442 = pneg %p246
        $region46: #{tpu_custom_call.1} parent=11 // pred_check_branch
          %444 = sbr.rel (%p442) target = $region48
        $region47: #{tpu_custom_call.1} parent=11 // pred_region
          %s446 = ssub.s32 256, 256
          %447 = vsyncadd [#allocation18], %s446
          %s448 = sshll.u32 [#allocation17], 4
          %s449 = int_to_ptr.vmem [resolvable:$true] %s448
          %454 = dma.hbm_to_vmem [thread:$0]  %s9, 256, %s449, [#allocation18], 64, 64, 4
        $region48: #{tpu_custom_call.1} parent=11 // pred_fallthru
          _
        // Predicated region
        $region49: #{tpu_custom_call.1} parent=11 // pred_check
          %p455 = pneg %p267
        $region50: #{tpu_custom_call.1} parent=11 // pred_check_branch
          %457 = sbr.rel (%p455) target = $region52
        $region51: #{tpu_custom_call.1} parent=11 // pred_region
          %s459 = ssub.s32 16, 16
          %460 = vsyncadd [#allocation18], %s459
          %s462 = sshll.u32 [#allocation19], 4
          %s463 = int_to_ptr.vmem [resolvable:$true] %s462
          %465 = dma.hbm_to_vmem [thread:$0]  %s10, 16, %s463, [#allocation18]
        $region52: #{tpu_custom_call.1} parent=11 // pred_fallthru
          _
        // Predicated region
        $region53: #{tpu_custom_call.1} parent=11 // pred_check
          %p466 = pneg %p288
        $region54: #{tpu_custom_call.1} parent=11 // pred_check_branch
          %468 = sbr.rel (%p466) target = $region56
        $region55: #{tpu_custom_call.1} parent=11 // pred_region
          %s470 = ssub.s32 512, 512
          %471 = vsyncadd [#allocation21], %s470
          %s472 = sshll.u32 [#allocation20], 4
          %s473 = int_to_ptr.vmem [resolvable:$true] %s472
          %478 = dma.hbm_to_vmem [thread:$0]  %s11, 512, %s473, [#allocation21], 64, 64, 4
        $region56: #{tpu_custom_call.1} parent=11 // pred_fallthru
          _
        // Predicated region
        $region57: #{tpu_custom_call.1} parent=11 // pred_check
          %p479 = pneg %p309
        $region58: #{tpu_custom_call.1} parent=11 // pred_check_branch
          %481 = sbr.rel (%p479) target = $region60
        $region59: #{tpu_custom_call.1} parent=11 // pred_region
          %s483 = ssub.s32 16, 16
          %484 = vsyncadd [#allocation21], %s483
          %s486 = sshll.u32 [#allocation22], 4
          %s487 = int_to_ptr.vmem [resolvable:$true] %s486
          %489 = dma.hbm_to_vmem [thread:$0]  %s12, 16, %s487, [#allocation21]
        $region60: #{tpu_custom_call.1} parent=11 // pred_fallthru
          _
      $region12: #{tpu_custom_call.1} parent=5 // pred_fallthru
        _
      %p490 = scmp.lt.s32.totalorder %s31, 2
      // Predicated region
      $region61: #{tpu_custom_call.1} parent=5 // pred_check
        %p491 = pneg %p490
      $region62: #{tpu_custom_call.1} parent=5 // pred_check_branch
        %493 = sbr.rel (%p491) target = $region64
      $region63: #{tpu_custom_call.1} parent=5 // pred_region
        // Predicated region
        $region65: #{tpu_custom_call.1} parent=63 // pred_check
          %p494 = pneg %p51
        $region66: #{tpu_custom_call.1} parent=63 // pred_check_branch
          %496 = sbr.rel (%p494) target = $region68
        $region67: #{tpu_custom_call.1} parent=63 // pred_region
          %s497 = sand.u32 %s41, 1
          %s498 = scalar_lea.sflag [#allocation3], %s497
          %s499 = sand.u32 %s41, 1
          %s500 = smul.addr %s499, 8
          %s501 = scalar_lea.vmem [#allocation2], %s500
          %s503 = ssub.s32 128, 128
          %504 = vsyncadd %s498, %s503
          %s505 = smul.addr %s31, 128
          %s506 = scalar_lea.hbm %s0, %s505
          %s508 = sshll.u32 %s501, 4
          %s509 = int_to_ptr.vmem [resolvable:$true] %s508
          %511 = dma.hbm_to_vmem [thread:$0]  %s506, 128, %s509, %s498
        $region68: #{tpu_custom_call.1} parent=63 // pred_fallthru
          _
      $region64: #{tpu_custom_call.1} parent=5 // pred_fallthru
        _
      %p512 = scmp.le.s32.totalorder 1, %s31
      %p513 = scmp.lt.s32.totalorder %s31, 3
      %p514 = pnand %p512, %p513
      %p515 = pneg %p514
      // Predicated region
      $region69: #{tpu_custom_call.1} parent=5 // pred_check
        _
      $region70: #{tpu_custom_call.1} parent=5 // pred_check_branch
        %517 = sbr.rel (%p514) target = $region72
      $region71: #{tpu_custom_call.1} parent=5 // pred_region
        %s518 = ssub.s32 %s31, 1
        %s519 = sand.u32 %s44, 1
        %s520 = scalar_lea.sflag [#allocation3], %s519
        %s521 = sand.u32 %s44, 1
        %s522 = smul.addr %s521, 8
        %s523 = scalar_lea.vmem [#allocation2], %s522
        // Predicated region
        $region73: #{tpu_custom_call.1} parent=71 // pred_check
          %p524 = pneg %p57
        $region74: #{tpu_custom_call.1} parent=71 // pred_check_branch
          %526 = sbr.rel (%p524) target = $region76
        $region75: #{tpu_custom_call.1} parent=71 // pred_region
          %527 = dma.done %s520, 128
        $region76: #{tpu_custom_call.1} parent=71 // pred_fallthru
          _
        // Predicated region
        $region77: #{tpu_custom_call.1} parent=71 // pred_check
          %p528 = pneg %p78
        $region78: #{tpu_custom_call.1} parent=71 // pred_check_branch
          %530 = sbr.rel (%p528) target = $region80
        $region79: #{tpu_custom_call.1} parent=71 // pred_region
          %531 = dma.done [#allocation6], 16
        $region80: #{tpu_custom_call.1} parent=71 // pred_fallthru
          _
        // Predicated region
        $region81: #{tpu_custom_call.1} parent=71 // pred_check
          %p532 = pneg %p99
        $region82: #{tpu_custom_call.1} parent=71 // pred_check_branch
          %534 = sbr.rel (%p532) target = $region84
        $region83: #{tpu_custom_call.1} parent=71 // pred_region
          %535 = dma.done [#allocation6], 16
        $region84: #{tpu_custom_call.1} parent=71 // pred_fallthru
          _
        // Predicated region
        $region85: #{tpu_custom_call.1} parent=71 // pred_check
          %p536 = pneg %p120
        $region86: #{tpu_custom_call.1} parent=71 // pred_check_branch
          %538 = sbr.rel (%p536) target = $region88
        $region87: #{tpu_custom_call.1} parent=71 // pred_region
          %539 = dma.done [#allocation9], 256
        $region88: #{tpu_custom_call.1} parent=71 // pred_fallthru
          _
        // Predicated region
        $region89: #{tpu_custom_call.1} parent=71 // pred_check
          %p540 = pneg %p141
        $region90: #{tpu_custom_call.1} parent=71 // pred_check_branch
          %542 = sbr.rel (%p540) target = $region92
        $region91: #{tpu_custom_call.1} parent=71 // pred_region
          %543 = dma.done [#allocation9], 16
        $region92: #{tpu_custom_call.1} parent=71 // pred_fallthru
          _
        // Predicated region
        $region93: #{tpu_custom_call.1} parent=71 // pred_check
          %p544 = pneg %p162
        $region94: #{tpu_custom_call.1} parent=71 // pred_check_branch
          %546 = sbr.rel (%p544) target = $region96
        $region95: #{tpu_custom_call.1} parent=71 // pred_region
          %547 = dma.done [#allocation12], 256
        $region96: #{tpu_custom_call.1} parent=71 // pred_fallthru
          _
        // Predicated region
        $region97: #{tpu_custom_call.1} parent=71 // pred_check
          %p548 = pneg %p183
        $region98: #{tpu_custom_call.1} parent=71 // pred_check_branch
          %550 = sbr.rel (%p548) target = $region100
        $region99: #{tpu_custom_call.1} parent=71 // pred_region
          %551 = dma.done [#allocation12], 16
        $region100: #{tpu_custom_call.1} parent=71 // pred_fallthru
          _
        // Predicated region
        $region101: #{tpu_custom_call.1} parent=71 // pred_check
          %p552 = pneg %p204
        $region102: #{tpu_custom_call.1} parent=71 // pred_check_branch
          %554 = sbr.rel (%p552) target = $region104
        $region103: #{tpu_custom_call.1} parent=71 // pred_region
          %555 = dma.done [#allocation15], 16
        $region104: #{tpu_custom_call.1} parent=71 // pred_fallthru
          _
        // Predicated region
        $region105: #{tpu_custom_call.1} parent=71 // pred_check
          %p556 = pneg %p225
        $region106: #{tpu_custom_call.1} parent=71 // pred_check_branch
          %558 = sbr.rel (%p556) target = $region108
        $region107: #{tpu_custom_call.1} parent=71 // pred_region
          %559 = dma.done [#allocation15], 16
        $region108: #{tpu_custom_call.1} parent=71 // pred_fallthru
          _
        // Predicated region
        $region109: #{tpu_custom_call.1} parent=71 // pred_check
          %p560 = pneg %p246
        $region110: #{tpu_custom_call.1} parent=71 // pred_check_branch
          %562 = sbr.rel (%p560) target = $region112
        $region111: #{tpu_custom_call.1} parent=71 // pred_region
          %563 = dma.done [#allocation18], 256
        $region112: #{tpu_custom_call.1} parent=71 // pred_fallthru
          _
        // Predicated region
        $region113: #{tpu_custom_call.1} parent=71 // pred_check
          %p564 = pneg %p267
        $region114: #{tpu_custom_call.1} parent=71 // pred_check_branch
          %566 = sbr.rel (%p564) target = $region116
        $region115: #{tpu_custom_call.1} parent=71 // pred_region
          %567 = dma.done [#allocation18], 16
        $region116: #{tpu_custom_call.1} parent=71 // pred_fallthru
          _
        // Predicated region
        $region117: #{tpu_custom_call.1} parent=71 // pred_check
          %p568 = pneg %p288
        $region118: #{tpu_custom_call.1} parent=71 // pred_check_branch
          %570 = sbr.rel (%p568) target = $region120
        $region119: #{tpu_custom_call.1} parent=71 // pred_region
          %571 = dma.done [#allocation21], 512
        $region120: #{tpu_custom_call.1} parent=71 // pred_fallthru
          _
        // Predicated region
        $region121: #{tpu_custom_call.1} parent=71 // pred_check
          %p572 = pneg %p309
        $region122: #{tpu_custom_call.1} parent=71 // pred_check_branch
          %574 = sbr.rel (%p572) target = $region124
        $region123: #{tpu_custom_call.1} parent=71 // pred_region
          %575 = dma.done [#allocation21], 16
        $region124: #{tpu_custom_call.1} parent=71 // pred_fallthru
          _
        %s576 = sand.u32 %s44, 1
        %s577 = scalar_lea.sflag [#allocation3], %s576
        %s578 = sand.u32 %s44, 1
        %s579 = smul.addr %s578, 8
        %s580 = scalar_lea.vmem [#allocation2], %s579
        %p581 = pneg %p57
        %p582 = pneg %p54
        %p583 = pneg %p78
        %p584 = pneg %p75
        %p585 = pneg %p99
        %p586 = pneg %p96
        %p587 = pneg %p120
        %p588 = pneg %p117
        %p589 = pneg %p141
        %p590 = pneg %p138
        %p591 = pneg %p162
        %p592 = pneg %p159
        %p593 = pneg %p183
        %p594 = pneg %p180
        %p595 = pneg %p204
        %p596 = pneg %p201
        %p597 = pneg %p225
        %p598 = pneg %p222
        %p599 = pneg %p246
        %p600 = pneg %p243
        %p601 = pneg %p267
        %p602 = pneg %p264
        %p603 = pneg %p288
        %p604 = pneg %p285
        %p605 = pneg %p309
        %p606 = pneg %p306
        %p607 = pneg %p335
        %p608 = pneg %p332
        %s609 = sand.u32 %s322, 1
        %s610 = scalar_lea.sflag [#allocation4], %s609
        %s611 = sand.u32 %s322, 1
        %s612 = smul.addr %s611, 8
        %s613 = scalar_lea.vmem [#allocation23], %s612
        %v615 = vld [vmem:[%s523] sm:$0xff]
        %v616 = vld [vmem:[#allocation5] sm:$0x1]
        %v617 = vld [vmem:[#allocation7] sm:$0x1]
        %vm618 = vcmask 261120
        %v619 = vsel %vm618, %v615, 0.0
        %620 = vadd.xlane.f32.xlu0 %v619
        %v621 = vpop.xlane.xlu0 %620
        %v622 = vrcp.pop 32.0
        %v623 = vmul.f32 %v621, %v622
        %v624 = vsub.f32 %v615, %v623
        %v625 = vmul.f32 %v624, %v624
        %v626 = vsel %vm618, %v625, 0.0
        %627 = vadd.xlane.f32.xlu0 %v626
        %v628 = vpop.xlane.xlu0 %627
        %v629 = vmul.f32 %v628, %v622
        %v630 = vadd.f32 %v629, 1e-05
        %v631 = vrsqrt.pop %v630
        %v632 = vmul.f32 %v624, %v631
        %v634 = vlaneseq
        %v635 = vshrl.u32 %v634, 7
        %v636 = vsub.s32 0, %v635
        %v637 = vrot.slane %v616, %v636
        %v639 = vmul.f32 %v632, %v637
        %v641 = vlaneseq
        %v642 = vshrl.u32 %v641, 7
        %v643 = vsub.s32 0, %v642
        %v644 = vrot.slane %v617, %v643
        %v646 = vadd.f32 %v639, %v644
        %v647 = vpack.c.bf16 %v646, %v646
        %v648 = vld [vmem:[#allocation8] sm:$0xf]
        %v649 = vld [vmem:[#allocation8 + $0x4] sm:$0xf]
        %v650 = vld [vmem:[#allocation8 + $0x8] sm:$0xf]
        %v651 = vld [vmem:[#allocation8 + $0xc] sm:$0xf]
        %v652 = vld [vmem:[#allocation10] sm:$0x1]
        %v654 = vlaneseq
        %v655 = vshrl.u32 %v654, 7
        %v656 = vsub.s32 0, %v655
        %v657 = vrot.slane %v652, %v656
        %v663 = vunpack.c.l.b16 %v648
        %v664 = vunpack.c.l.b16 %v649
        %v665 = vunpack.c.l.b16 %v650
        %v666 = vunpack.c.l.b16 %v651
        %v667 = vpack.c.b16 %v664, %v663
        %v668 = vpack.c.b16 %v666, %v665
        %v672 = vsel %vm618, %v647, 0
        %674 = vmatprep.subr.bf16.mxu0 0
        %675 = vmatpush1.bf16.msra.mxu0 %v667
        %676 = vmatprep.subr.bf16.mxu0 0
        %677 = vmatpush1.bf16.msra.mxu0 %v668
        %678 = vmatprep.subr.bf16.mxu0 0
        %679 = vmatpush1.bf16.msra.mxu0 0
        %680 = vmatprep.subr.bf16.mxu0 0
        %681 = vmatpush1.bf16.msra.mxu0 0
        %682 = vmatprep.subr.bf16.mxu0 0
        %683 = vmatpush1.bf16.msra.mxu0 0
        %684 = vmatprep.subr.bf16.mxu0 0
        %685 = vmatpush1.bf16.msra.mxu0 0
        %686 = vmatprep.subr.bf16.mxu0 0
        %687 = vmatpush1.bf16.msra.mxu0 0
        %688 = vmatprep.subr.bf16.mxu0 0
        %689 = vmatpush1.bf16.msra.mxu0 0
        %690 = vmatprep.subr.bf16.mxu0 0
        %691 = vmatpush1.bf16.msra.mxu0 0
        %692 = vmatprep.subr.bf16.mxu0 0
        %693 = vmatpush1.bf16.msra.mxu0 0
        %694 = vmatprep.subr.bf16.mxu0 0
        %695 = vmatpush1.bf16.msra.mxu0 0
        %696 = vmatprep.subr.bf16.mxu0 0
        %697 = vmatpush1.bf16.msra.mxu0 0
        %698 = vmatprep.subr.bf16.mxu0 0
        %699 = vmatpush1.bf16.msra.mxu0 0
        %700 = vmatprep.subr.bf16.mxu0 0
        %701 = vmatpush1.bf16.msra.mxu0 0
        %702 = vmatprep.subr.bf16.mxu0 0
        %703 = vmatpush1.bf16.msra.mxu0 0
        %704 = vmatprep.subr.bf16.mxu0 0
        %705 = vmatpush1.bf16.msra.mxu0 0
        %706 = vmatprep.mubr.bf16.mxu0 0
        %707 = vmatmul.mubr.bf16.gmra.mrb[0].mxu0 %v672
        %v708 = vpop.f32.mrb[0].mxu0
        %v709 = vadd.f32 %v657, %v708
        %v710 = vpop.f32.mrb[0].mxu0
        %v711 = vpop.f32.mrb[0].mxu0
        %v712 = vpop.f32.mrb[0].mxu0
        %713 = vdwg.mxu0
        %v714 = vlaneseq
        %v715 = vshrl.u32 %v714, 7
        %v716 = vlaneseq
        %v717 = vand.u32 %v716, 127
        %vm718 = vcmp.le.s32.totalorder %v717, %v715
        %v719 = vpack.c.bf16 %v709, %v709
        %721 = vrot.lane.b32.xlu0 %v719, 96
        %v722 = vpop.permute.xlu0 %721
        %vm723 = vcmask 64512
        %v725 = vsel %vm723, %v719, 0
        %v728 = vsel %vm723, %v722, 0
        %730 = vmatprep.subr.bf16.mxu0 0
        %731 = vmatpush1.bf16.xpose.msra.mxu0 %v728
        %732 = vmatprep.subr.bf16.mxu0 0
        %733 = vmatpush1.bf16.xpose.msra.mxu0 0
        %734 = vmatprep.subr.bf16.mxu0 0
        %735 = vmatpush1.bf16.xpose.msra.mxu0 0
        %736 = vmatprep.subr.bf16.mxu0 0
        %737 = vmatpush1.bf16.xpose.msra.mxu0 0
        %738 = vmatprep.subr.bf16.mxu0 0
        %739 = vmatpush1.bf16.xpose.msra.mxu0 0
        %740 = vmatprep.subr.bf16.mxu0 0
        %741 = vmatpush1.bf16.xpose.msra.mxu0 0
        %742 = vmatprep.subr.bf16.mxu0 0
        %743 = vmatpush1.bf16.xpose.msra.mxu0 0
        %744 = vmatprep.subr.bf16.mxu0 0
        %745 = vmatpush1.bf16.xpose.msra.mxu0 0
        %746 = vmatprep.subr.bf16.mxu0 0
        %747 = vmatpush1.bf16.xpose.msra.mxu0 0
        %748 = vmatprep.subr.bf16.mxu0 0
        %749 = vmatpush1.bf16.xpose.msra.mxu0 0
        %750 = vmatprep.subr.bf16.mxu0 0
        %751 = vmatpush1.bf16.xpose.msra.mxu0 0
        %752 = vmatprep.subr.bf16.mxu0 0
        %753 = vmatpush1.bf16.xpose.msra.mxu0 0
        %754 = vmatprep.subr.bf16.mxu0 0
        %755 = vmatpush1.bf16.xpose.msra.mxu0 0
        %756 = vmatprep.subr.bf16.mxu0 0
        %757 = vmatpush1.bf16.xpose.msra.mxu0 0
        %758 = vmatprep.subr.bf16.mxu0 0
        %759 = vmatpush1.bf16.xpose.msra.mxu0 0
        %760 = vmatprep.subr.bf16.mxu0 0
        %761 = vmatpush1.bf16.xpose.msra.mxu0 0
        %762 = vmatprep.mubr.bf16.mxu0 0
        %763 = vmatmul.mubr.bf16.gmra.mrb[0].mxu0 %v725
        %v764 = vpop.f32.mrb[0].mxu0
        %v765 = vadd.f32 0.0, %v764
        %v766 = vpop.f32.mrb[0].mxu0
        %v767 = vpop.f32.mrb[0].mxu0
        %v768 = vpop.f32.mrb[0].mxu0
        %769 = vdwg.mxu0
        %v770 = vsel %vm718, %v765, -inf
        %v771 = vsel %vm723, %v770, -inf
        %772 = vmax.xlane.f32.xlu0 %v771
        %v773 = vpop.xlane.xlu0 %772
        %v774 = vsub.f32 %v770, %v773
        %v775 = vmul.f32 %v774, 1.442695
        %v776 = vpow.pop %v775
        %v777 = vsel %vm723, %v776, 0.0
        %778 = vadd.xlane.f32.xlu0 %v777
        %v779 = vpop.xlane.xlu0 %778
        %v780 = vpack.c.bf16 %v776, %v776
        %781 = vrot.lane.b32.xlu0 %v719, 64
        %v782 = vpop.permute.xlu0 %781
        %v784 = vsel %vm723, %v780, 0
        %vm786 = vcmask 1043456
        %v788 = vsel %vm786, %v782, 0
        %790 = vmatprep.subr.bf16.mxu0 0
        %791 = vmatpush1.bf16.msra.mxu0 %v788
        %792 = vmatprep.subr.bf16.mxu0 0
        %793 = vmatpush1.bf16.msra.mxu0 0
        %794 = vmatprep.subr.bf16.mxu0 0
        %795 = vmatpush1.bf16.msra.mxu0 0
        %796 = vmatprep.subr.bf16.mxu0 0
        %797 = vmatpush1.bf16.msra.mxu0 0
        %798 = vmatprep.subr.bf16.mxu0 0
        %799 = vmatpush1.bf16.msra.mxu0 0
        %800 = vmatprep.subr.bf16.mxu0 0
        %801 = vmatpush1.bf16.msra.mxu0 0
        %802 = vmatprep.subr.bf16.mxu0 0
        %803 = vmatpush1.bf16.msra.mxu0 0
        %804 = vmatprep.subr.bf16.mxu0 0
        %805 = vmatpush1.bf16.msra.mxu0 0
        %806 = vmatprep.subr.bf16.mxu0 0
        %807 = vmatpush1.bf16.msra.mxu0 0
        %808 = vmatprep.subr.bf16.mxu0 0
        %809 = vmatpush1.bf16.msra.mxu0 0
        %810 = vmatprep.subr.bf16.mxu0 0
        %811 = vmatpush1.bf16.msra.mxu0 0
        %812 = vmatprep.subr.bf16.mxu0 0
        %813 = vmatpush1.bf16.msra.mxu0 0
        %814 = vmatprep.subr.bf16.mxu0 0
        %815 = vmatpush1.bf16.msra.mxu0 0
        %816 = vmatprep.subr.bf16.mxu0 0
        %817 = vmatpush1.bf16.msra.mxu0 0
        %818 = vmatprep.subr.bf16.mxu0 0
        %819 = vmatpush1.bf16.msra.mxu0 0
        %820 = vmatprep.subr.bf16.mxu0 0
        %821 = vmatpush1.bf16.msra.mxu0 0
        %822 = vmatprep.mubr.bf16.mxu0 0
        %823 = vmatmul.mubr.bf16.gmra.mrb[0].mxu0 %v784
        %v824 = vpop.f32.mrb[0].mxu0
        %v825 = vadd.f32 0.0, %v824
        %v826 = vpop.f32.mrb[0].mxu0
        %v827 = vpop.f32.mrb[0].mxu0
        %v828 = vpop.f32.mrb[0].mxu0
        %829 = vdwg.mxu0
        %v830 = vrcp.pop %v779
        %v831 = vmul.f32 %v825, %v830
        %v832 = vpack.c.bf16 %v831, %v831
        %v833 = vld [vmem:[#allocation11] sm:$0xf]
        %834 = vrot.lane.b32.xlu0 %v719, 120
        %v835 = vpop.permute.xlu0 %834
        %836 = vrot.lane.b32.xlu0 %v719, 88
        %v837 = vpop.permute.xlu0 %836
        %v839 = vsel %vm723, %v835, 0
        %v842 = vsel %vm723, %v837, 0
        %844 = vmatprep.subr.bf16.mxu0 0
        %845 = vmatpush1.bf16.xpose.msra.mxu0 %v842
        %846 = vmatprep.subr.bf16.mxu0 0
        %847 = vmatpush1.bf16.xpose.msra.mxu0 0
        %848 = vmatprep.subr.bf16.mxu0 0
        %849 = vmatpush1.bf16.xpose.msra.mxu0 0
        %850 = vmatprep.subr.bf16.mxu0 0
        %851 = vmatpush1.bf16.xpose.msra.mxu0 0
        %852 = vmatprep.subr.bf16.mxu0 0
        %853 = vmatpush1.bf16.xpose.msra.mxu0 0
        %854 = vmatprep.subr.bf16.mxu0 0
        %855 = vmatpush1.bf16.xpose.msra.mxu0 0
        %856 = vmatprep.subr.bf16.mxu0 0
        %857 = vmatpush1.bf16.xpose.msra.mxu0 0
        %858 = vmatprep.subr.bf16.mxu0 0
        %859 = vmatpush1.bf16.xpose.msra.mxu0 0
        %860 = vmatprep.subr.bf16.mxu0 0
        %861 = vmatpush1.bf16.xpose.msra.mxu0 0
        %862 = vmatprep.subr.bf16.mxu0 0
        %863 = vmatpush1.bf16.xpose.msra.mxu0 0
        %864 = vmatprep.subr.bf16.mxu0 0
        %865 = vmatpush1.bf16.xpose.msra.mxu0 0
        %866 = vmatprep.subr.bf16.mxu0 0
        %867 = vmatpush1.bf16.xpose.msra.mxu0 0
        %868 = vmatprep.subr.bf16.mxu0 0
        %869 = vmatpush1.bf16.xpose.msra.mxu0 0
        %870 = vmatprep.subr.bf16.mxu0 0
        %871 = vmatpush1.bf16.xpose.msra.mxu0 0
        %872 = vmatprep.subr.bf16.mxu0 0
        %873 = vmatpush1.bf16.xpose.msra.mxu0 0
        %874 = vmatprep.subr.bf16.mxu0 0
        %875 = vmatpush1.bf16.xpose.msra.mxu0 0
        %876 = vmatprep.mubr.bf16.mxu0 0
        %877 = vmatmul.mubr.bf16.gmra.mrb[0].mxu0 %v839
        %v878 = vpop.f32.mrb[0].mxu0
        %v879 = vadd.f32 0.0, %v878
        %v880 = vpop.f32.mrb[0].mxu0
        %v881 = vpop.f32.mrb[0].mxu0
        %v882 = vpop.f32.mrb[0].mxu0
        %883 = vdwg.mxu0
        %v884 = vsel %vm718, %v879, -inf
        %v885 = vsel %vm723, %v884, -inf
        %886 = vmax.xlane.f32.xlu0 %v885
        %v887 = vpop.xlane.xlu0 %886
        %v888 = vsub.f32 %v884, %v887
        %v889 = vmul.f32 %v888, 1.442695
        %v890 = vpow.pop %v889
        %v891 = vsel %vm723, %v890, 0.0
        %892 = vadd.xlane.f32.xlu0 %v891
        %v893 = vpop.xlane.xlu0 %892
        %v894 = vpack.c.bf16 %v890, %v890
        %895 = vrot.lane.b32.xlu0 %v719, 56
        %v896 = vpop.permute.xlu0 %895
        %v898 = vsel %vm723, %v894, 0
        %v901 = vsel %vm786, %v896, 0
        %903 = vmatprep.subr.bf16.mxu0 0
        %904 = vmatpush1.bf16.msra.mxu0 %v901
        %905 = vmatprep.subr.bf16.mxu0 0
        %906 = vmatpush1.bf16.msra.mxu0 0
        %907 = vmatprep.subr.bf16.mxu0 0
        %908 = vmatpush1.bf16.msra.mxu0 0
        %909 = vmatprep.subr.bf16.mxu0 0
        %910 = vmatpush1.bf16.msra.mxu0 0
        %911 = vmatprep.subr.bf16.mxu0 0
        %912 = vmatpush1.bf16.msra.mxu0 0
        %913 = vmatprep.subr.bf16.mxu0 0
        %914 = vmatpush1.bf16.msra.mxu0 0
        %915 = vmatprep.subr.bf16.mxu0 0
        %916 = vmatpush1.bf16.msra.mxu0 0
        %917 = vmatprep.subr.bf16.mxu0 0
        %918 = vmatpush1.bf16.msra.mxu0 0
        %919 = vmatprep.subr.bf16.mxu0 0
        %920 = vmatpush1.bf16.msra.mxu0 0
        %921 = vmatprep.subr.bf16.mxu0 0
        %922 = vmatpush1.bf16.msra.mxu0 0
        %923 = vmatprep.subr.bf16.mxu0 0
        %924 = vmatpush1.bf16.msra.mxu0 0
        %925 = vmatprep.subr.bf16.mxu0 0
        %926 = vmatpush1.bf16.msra.mxu0 0
        %927 = vmatprep.subr.bf16.mxu0 0
        %928 = vmatpush1.bf16.msra.mxu0 0
        %929 = vmatprep.subr.bf16.mxu0 0
        %930 = vmatpush1.bf16.msra.mxu0 0
        %931 = vmatprep.subr.bf16.mxu0 0
        %932 = vmatpush1.bf16.msra.mxu0 0
        %933 = vmatprep.subr.bf16.mxu0 0
        %934 = vmatpush1.bf16.msra.mxu0 0
        %935 = vmatprep.mubr.bf16.mxu0 0
        %936 = vmatmul.mubr.bf16.gmra.mrb[0].mxu0 %v898
        %v937 = vpop.f32.mrb[0].mxu0
        %v938 = vadd.f32 0.0, %v937
        %v939 = vpop.f32.mrb[0].mxu0
        %v940 = vpop.f32.mrb[0].mxu0
        %v941 = vpop.f32.mrb[0].mxu0
        %942 = vdwg.mxu0
        %v943 = vrcp.pop %v893
        %v944 = vmul.f32 %v938, %v943
        %v945 = vpack.c.bf16 %v944, %v944
        %s946 = scalar_lea.vmem [#allocation11], 4
        %v947 = vld [vmem:[%s946] sm:$0xf]
        %v949 = vsel %vm723, %v945, 0
        %v952 = vsel %vm786, %v947, 0
        %954 = vmatprep.subr.bf16.mxu0 0
        %955 = vmatpush1.bf16.msra.mxu0 %v952
        %956 = vmatprep.subr.bf16.mxu0 0
        %957 = vmatpush1.bf16.msra.mxu0 0
        %958 = vmatprep.subr.bf16.mxu0 0
        %959 = vmatpush1.bf16.msra.mxu0 0
        %960 = vmatprep.subr.bf16.mxu0 0
        %961 = vmatpush1.bf16.msra.mxu0 0
        %962 = vmatprep.subr.bf16.mxu0 0
        %963 = vmatpush1.bf16.msra.mxu0 0
        %964 = vmatprep.subr.bf16.mxu0 0
        %965 = vmatpush1.bf16.msra.mxu0 0
        %966 = vmatprep.subr.bf16.mxu0 0
        %967 = vmatpush1.bf16.msra.mxu0 0
        %968 = vmatprep.subr.bf16.mxu0 0
        %969 = vmatpush1.bf16.msra.mxu0 0
        %970 = vmatprep.subr.bf16.mxu0 0
        %971 = vmatpush1.bf16.msra.mxu0 0
        %972 = vmatprep.subr.bf16.mxu0 0
        %973 = vmatpush1.bf16.msra.mxu0 0
        %974 = vmatprep.subr.bf16.mxu0 0
        %975 = vmatpush1.bf16.msra.mxu0 0
        %976 = vmatprep.subr.bf16.mxu0 0
        %977 = vmatpush1.bf16.msra.mxu0 0
        %978 = vmatprep.subr.bf16.mxu0 0
        %979 = vmatpush1.bf16.msra.mxu0 0
        %980 = vmatprep.subr.bf16.mxu0 0
        %981 = vmatpush1.bf16.msra.mxu0 0
        %982 = vmatprep.subr.bf16.mxu0 0
        %983 = vmatpush1.bf16.msra.mxu0 0
        %984 = vmatprep.subr.bf16.mxu0 0
        %985 = vmatpush1.bf16.msra.mxu0 0
        %986 = vmatprep.mubr.bf16.mxu0 0
        %987 = vmatmul.mubr.bf16.gmra.mrb[0].mxu0 %v949
        %v988 = vpop.f32.mrb[0].mxu0
        %v989 = vadd.f32 0.0, %v988
        %v990 = vpop.f32.mrb[0].mxu0
        %v991 = vpop.f32.mrb[0].mxu0
        %v992 = vpop.f32.mrb[0].mxu0
        %993 = vdwg.mxu0
        %v995 = vsel %vm723, %v832, 0
        %v998 = vsel %vm786, %v833, 0
        %1000 = vmatprep.subr.bf16.mxu0 0
        %1001 = vmatpush1.bf16.msra.mxu0 %v998
        %1002 = vmatprep.subr.bf16.mxu0 0
        %1003 = vmatpush1.bf16.msra.mxu0 0
        %1004 = vmatprep.subr.bf16.mxu0 0
        %1005 = vmatpush1.bf16.msra.mxu0 0
        %1006 = vmatprep.subr.bf16.mxu0 0
        %1007 = vmatpush1.bf16.msra.mxu0 0
        %1008 = vmatprep.subr.bf16.mxu0 0
        %1009 = vmatpush1.bf16.msra.mxu0 0
        %1010 = vmatprep.subr.bf16.mxu0 0
        %1011 = vmatpush1.bf16.msra.mxu0 0
        %1012 = vmatprep.subr.bf16.mxu0 0
        %1013 = vmatpush1.bf16.msra.mxu0 0
        %1014 = vmatprep.subr.bf16.mxu0 0
        %1015 = vmatpush1.bf16.msra.mxu0 0
        %1016 = vmatprep.subr.bf16.mxu0 0
        %1017 = vmatpush1.bf16.msra.mxu0 0
        %1018 = vmatprep.subr.bf16.mxu0 0
        %1019 = vmatpush1.bf16.msra.mxu0 0
        %1020 = vmatprep.subr.bf16.mxu0 0
        %1021 = vmatpush1.bf16.msra.mxu0 0
        %1022 = vmatprep.subr.bf16.mxu0 0
        %1023 = vmatpush1.bf16.msra.mxu0 0
        %1024 = vmatprep.subr.bf16.mxu0 0
        %1025 = vmatpush1.bf16.msra.mxu0 0
        %1026 = vmatprep.subr.bf16.mxu0 0
        %1027 = vmatpush1.bf16.msra.mxu0 0
        %1028 = vmatprep.subr.bf16.mxu0 0
        %1029 = vmatpush1.bf16.msra.mxu0 0
        %1030 = vmatprep.subr.bf16.mxu0 0
        %1031 = vmatpush1.bf16.msra.mxu0 0
        %1032 = vmatprep.mubr.bf16.mxu0 0
        %1033 = vmatmul.mubr.bf16.gmra.mrb[0].mxu0 %v995
        %v1034 = vpop.f32.mrb[0].mxu0
        %v1035 = vadd.f32 %v989, %v1034
        %v1036 = vpop.f32.mrb[0].mxu0
        %v1037 = vpop.f32.mrb[0].mxu0
        %v1038 = vpop.f32.mrb[0].mxu0
        %1039 = vdwg.mxu0
        %1040 = vrot.lane.b32.xlu0 %v719, 112
        %v1041 = vpop.permute.xlu0 %1040
        %1042 = vrot.lane.b32.xlu0 %v719, 80
        %v1043 = vpop.permute.xlu0 %1042
        %v1045 = vsel %vm723, %v1041, 0
        %v1048 = vsel %vm723, %v1043, 0
        %1050 = vmatprep.subr.bf16.mxu0 0
        %1051 = vmatpush1.bf16.xpose.msra.mxu0 %v1048
        %1052 = vmatprep.subr.bf16.mxu0 0
        %1053 = vmatpush1.bf16.xpose.msra.mxu0 0
        %1054 = vmatprep.subr.bf16.mxu0 0
        %1055 = vmatpush1.bf16.xpose.msra.mxu0 0
        %1056 = vmatprep.subr.bf16.mxu0 0
        %1057 = vmatpush1.bf16.xpose.msra.mxu0 0
        %1058 = vmatprep.subr.bf16.mxu0 0
        %1059 = vmatpush1.bf16.xpose.msra.mxu0 0
        %1060 = vmatprep.subr.bf16.mxu0 0
        %1061 = vmatpush1.bf16.xpose.msra.mxu0 0
        %1062 = vmatprep.subr.bf16.mxu0 0
        %1063 = vmatpush1.bf16.xpose.msra.mxu0 0
        %1064 = vmatprep.subr.bf16.mxu0 0
        %1065 = vmatpush1.bf16.xpose.msra.mxu0 0
        %1066 = vmatprep.subr.bf16.mxu0 0
        %1067 = vmatpush1.bf16.xpose.msra.mxu0 0
        %1068 = vmatprep.subr.bf16.mxu0 0
        %1069 = vmatpush1.bf16.xpose.msra.mxu0 0
        %1070 = vmatprep.subr.bf16.mxu0 0
        %1071 = vmatpush1.bf16.xpose.msra.mxu0 0
        %1072 = vmatprep.subr.bf16.mxu0 0
        %1073 = vmatpush1.bf16.xpose.msra.mxu0 0
        %1074 = vmatprep.subr.bf16.mxu0 0
        %1075 = vmatpush1.bf16.xpose.msra.mxu0 0
        %1076 = vmatprep.subr.bf16.mxu0 0
        %1077 = vmatpush1.bf16.xpose.msra.mxu0 0
        %1078 = vmatprep.subr.bf16.mxu0 0
        %1079 = vmatpush1.bf16.xpose.msra.mxu0 0
        %1080 = vmatprep.subr.bf16.mxu0 0
        %1081 = vmatpush1.bf16.xpose.msra.mxu0 0
        %1082 = vmatprep.mubr.bf16.mxu0 0
        %1083 = vmatmul.mubr.bf16.gmra.mrb[0].mxu0 %v1045
        %v1084 = vpop.f32.mrb[0].mxu0
        %v1085 = vadd.f32 0.0, %v1084
        %v1086 = vpop.f32.mrb[0].mxu0
        %v1087 = vpop.f32.mrb[0].mxu0
        %v1088 = vpop.f32.mrb[0].mxu0
        %1089 = vdwg.mxu0
        %v1090 = vsel %vm718, %v1085, -inf
        %v1091 = vsel %vm723, %v1090, -inf
        %1092 = vmax.xlane.f32.xlu0 %v1091
        %v1093 = vpop.xlane.xlu0 %1092
        %v1094 = vsub.f32 %v1090, %v1093
        %v1095 = vmul.f32 %v1094, 1.442695
        %v1096 = vpow.pop %v1095
        %v1097 = vsel %vm723, %v1096, 0.0
        %1098 = vadd.xlane.f32.xlu0 %v1097
        %v1099 = vpop.xlane.xlu0 %1098
        %v1100 = vpack.c.bf16 %v1096, %v1096
        %1101 = vrot.lane.b32.xlu0 %v719, 48
        %v1102 = vpop.permute.xlu0 %1101
        %v1104 = vsel %vm723, %v1100, 0
        %v1107 = vsel %vm786, %v1102, 0
        %1109 = vmatprep.subr.bf16.mxu0 0
        %1110 = vmatpush1.bf16.msra.mxu0 %v1107
        %1111 = vmatprep.subr.bf16.mxu0 0
        %1112 = vmatpush1.bf16.msra.mxu0 0
        %1113 = vmatprep.subr.bf16.mxu0 0
        %1114 = vmatpush1.bf16.msra.mxu0 0
        %1115 = vmatprep.subr.bf16.mxu0 0
        %1116 = vmatpush1.bf16.msra.mxu0 0
        %1117 = vmatprep.subr.bf16.mxu0 0
        %1118 = vmatpush1.bf16.msra.mxu0 0
        %1119 = vmatprep.subr.bf16.mxu0 0
        %1120 = vmatpush1.bf16.msra.mxu0 0
        %1121 = vmatprep.subr.bf16.mxu0 0
        %1122 = vmatpush1.bf16.msra.mxu0 0
        %1123 = vmatprep.subr.bf16.mxu0 0
        %1124 = vmatpush1.bf16.msra.mxu0 0
        %1125 = vmatprep.subr.bf16.mxu0 0
        %1126 = vmatpush1.bf16.msra.mxu0 0
        %1127 = vmatprep.subr.bf16.mxu0 0
        %1128 = vmatpush1.bf16.msra.mxu0 0
        %1129 = vmatprep.subr.bf16.mxu0 0
        %1130 = vmatpush1.bf16.msra.mxu0 0
        %1131 = vmatprep.subr.bf16.mxu0 0
        %1132 = vmatpush1.bf16.msra.mxu0 0
        %1133 = vmatprep.subr.bf16.mxu0 0
        %1134 = vmatpush1.bf16.msra.mxu0 0
        %1135 = vmatprep.subr.bf16.mxu0 0
        %1136 = vmatpush1.bf16.msra.mxu0 0
        %1137 = vmatprep.subr.bf16.mxu0 0
        %1138 = vmatpush1.bf16.msra.mxu0 0
        %1139 = vmatprep.subr.bf16.mxu0 0
        %1140 = vmatpush1.bf16.msra.mxu0 0
        %1141 = vmatprep.mubr.bf16.mxu0 0
        %1142 = vmatmul.mubr.bf16.gmra.mrb[0].mxu0 %v1104
        %v1143 = vpop.f32.mrb[0].mxu0
        %v1144 = vadd.f32 0.0, %v1143
        %v1145 = vpop.f32.mrb[0].mxu0
        %v1146 = vpop.f32.mrb[0].mxu0
        %v1147 = vpop.f32.mrb[0].mxu0
        %1148 = vdwg.mxu0
        %v1149 = vrcp.pop %v1099
        %v1150 = vmul.f32 %v1144, %v1149
        %v1151 = vpack.c.bf16 %v1150, %v1150
        %s1152 = scalar_lea.vmem [#allocation11], 8
        %v1153 = vld [vmem:[%s1152] sm:$0xf]
        %v1155 = vsel %vm723, %v1151, 0
        %v1158 = vsel %vm786, %v1153, 0
        %1160 = vmatprep.subr.bf16.mxu0 0
        %1161 = vmatpush1.bf16.msra.mxu0 %v1158
        %1162 = vmatprep.subr.bf16.mxu0 0
        %1163 = vmatpush1.bf16.msra.mxu0 0
        %1164 = vmatprep.subr.bf16.mxu0 0
        %1165 = vmatpush1.bf16.msra.mxu0 0
        %1166 = vmatprep.subr.bf16.mxu0 0
        %1167 = vmatpush1.bf16.msra.mxu0 0
        %1168 = vmatprep.subr.bf16.mxu0 0
        %1169 = vmatpush1.bf16.msra.mxu0 0
        %1170 = vmatprep.subr.bf16.mxu0 0
        %1171 = vmatpush1.bf16.msra.mxu0 0
        %1172 = vmatprep.subr.bf16.mxu0 0
        %1173 = vmatpush1.bf16.msra.mxu0 0
        %1174 = vmatprep.subr.bf16.mxu0 0
        %1175 = vmatpush1.bf16.msra.mxu0 0
        %1176 = vmatprep.subr.bf16.mxu0 0
        %1177 = vmatpush1.bf16.msra.mxu0 0
        %1178 = vmatprep.subr.bf16.mxu0 0
        %1179 = vmatpush1.bf16.msra.mxu0 0
        %1180 = vmatprep.subr.bf16.mxu0 0
        %1181 = vmatpush1.bf16.msra.mxu0 0
        %1182 = vmatprep.subr.bf16.mxu0 0
        %1183 = vmatpush1.bf16.msra.mxu0 0
        %1184 = vmatprep.subr.bf16.mxu0 0
        %1185 = vmatpush1.bf16.msra.mxu0 0
        %1186 = vmatprep.subr.bf16.mxu0 0
        %1187 = vmatpush1.bf16.msra.mxu0 0
        %1188 = vmatprep.subr.bf16.mxu0 0
        %1189 = vmatpush1.bf16.msra.mxu0 0
        %1190 = vmatprep.subr.bf16.mxu0 0
        %1191 = vmatpush1.bf16.msra.mxu0 0
        %1192 = vmatprep.mubr.bf16.mxu0 0
        %1193 = vmatmul.mubr.bf16.gmra.mrb[0].mxu0 %v1155
        %v1194 = vpop.f32.mrb[0].mxu0
        %v1195 = vadd.f32 0.0, %v1194
        %v1196 = vpop.f32.mrb[0].mxu0
        %v1197 = vpop.f32.mrb[0].mxu0
        %v1198 = vpop.f32.mrb[0].mxu0
        %1199 = vdwg.mxu0
        %v1200 = vadd.f32 %v1035, %v1195
        %1201 = vrot.lane.b32.xlu0 %v719, 104
        %v1202 = vpop.permute.xlu0 %1201
        %1203 = vrot.lane.b32.xlu0 %v719, 72
        %v1204 = vpop.permute.xlu0 %1203
        %v1206 = vsel %vm723, %v1202, 0
        %v1209 = vsel %vm723, %v1204, 0
        %1211 = vmatprep.subr.bf16.mxu0 0
        %1212 = vmatpush1.bf16.xpose.msra.mxu0 %v1209
        %1213 = vmatprep.subr.bf16.mxu0 0
        %1214 = vmatpush1.bf16.xpose.msra.mxu0 0
        %1215 = vmatprep.subr.bf16.mxu0 0
        %1216 = vmatpush1.bf16.xpose.msra.mxu0 0
        %1217 = vmatprep.subr.bf16.mxu0 0
        %1218 = vmatpush1.bf16.xpose.msra.mxu0 0
        %1219 = vmatprep.subr.bf16.mxu0 0
        %1220 = vmatpush1.bf16.xpose.msra.mxu0 0
        %1221 = vmatprep.subr.bf16.mxu0 0
        %1222 = vmatpush1.bf16.xpose.msra.mxu0 0
        %1223 = vmatprep.subr.bf16.mxu0 0
        %1224 = vmatpush1.bf16.xpose.msra.mxu0 0
        %1225 = vmatprep.subr.bf16.mxu0 0
        %1226 = vmatpush1.bf16.xpose.msra.mxu0 0
        %1227 = vmatprep.subr.bf16.mxu0 0
        %1228 = vmatpush1.bf16.xpose.msra.mxu0 0
        %1229 = vmatprep.subr.bf16.mxu0 0
        %1230 = vmatpush1.bf16.xpose.msra.mxu0 0
        %1231 = vmatprep.subr.bf16.mxu0 0
        %1232 = vmatpush1.bf16.xpose.msra.mxu0 0
        %1233 = vmatprep.subr.bf16.mxu0 0
        %1234 = vmatpush1.bf16.xpose.msra.mxu0 0
        %1235 = vmatprep.subr.bf16.mxu0 0
        %1236 = vmatpush1.bf16.xpose.msra.mxu0 0
        %1237 = vmatprep.subr.bf16.mxu0 0
        %1238 = vmatpush1.bf16.xpose.msra.mxu0 0
        %1239 = vmatprep.subr.bf16.mxu0 0
        %1240 = vmatpush1.bf16.xpose.msra.mxu0 0
        %1241 = vmatprep.subr.bf16.mxu0 0
        %1242 = vmatpush1.bf16.xpose.msra.mxu0 0
        %1243 = vmatprep.mubr.bf16.mxu0 0
        %1244 = vmatmul.mubr.bf16.gmra.mrb[0].mxu0 %v1206
        %v1245 = vpop.f32.mrb[0].mxu0
        %v1246 = vadd.f32 0.0, %v1245
        %v1247 = vpop.f32.mrb[0].mxu0
        %v1248 = vpop.f32.mrb[0].mxu0
        %v1249 = vpop.f32.mrb[0].mxu0
        %1250 = vdwg.mxu0
        %v1251 = vsel %vm718, %v1246, -inf
        %v1252 = vsel %vm723, %v1251, -inf
        %1253 = vmax.xlane.f32.xlu0 %v1252
        %v1254 = vpop.xlane.xlu0 %1253
        %v1255 = vsub.f32 %v1251, %v1254
        %v1256 = vmul.f32 %v1255, 1.442695
        %v1257 = vpow.pop %v1256
        %v1258 = vsel %vm723, %v1257, 0.0
        %1259 = vadd.xlane.f32.xlu0 %v1258
        %v1260 = vpop.xlane.xlu0 %1259
        %v1261 = vpack.c.bf16 %v1257, %v1257
        %1262 = vrot.lane.b32.xlu0 %v719, 40
        %v1263 = vpop.permute.xlu0 %1262
        %v1265 = vsel %vm723, %v1261, 0
        %v1268 = vsel %vm786, %v1263, 0
        %1270 = vmatprep.subr.bf16.mxu0 0
        %1271 = vmatpush1.bf16.msra.mxu0 %v1268
        %1272 = vmatprep.subr.bf16.mxu0 0
        %1273 = vmatpush1.bf16.msra.mxu0 0
        %1274 = vmatprep.subr.bf16.mxu0 0
        %1275 = vmatpush1.bf16.msra.mxu0 0
        %1276 = vmatprep.subr.bf16.mxu0 0
        %1277 = vmatpush1.bf16.msra.mxu0 0
        %1278 = vmatprep.subr.bf16.mxu0 0
        %1279 = vmatpush1.bf16.msra.mxu0 0
        %1280 = vmatprep.subr.bf16.mxu0 0
        %1281 = vmatpush1.bf16.msra.mxu0 0
        %1282 = vmatprep.subr.bf16.mxu0 0
        %1283 = vmatpush1.bf16.msra.mxu0 0
        %1284 = vmatprep.subr.bf16.mxu0 0
        %1285 = vmatpush1.bf16.msra.mxu0 0
        %1286 = vmatprep.subr.bf16.mxu0 0
        %1287 = vmatpush1.bf16.msra.mxu0 0
        %1288 = vmatprep.subr.bf16.mxu0 0
        %1289 = vmatpush1.bf16.msra.mxu0 0
        %1290 = vmatprep.subr.bf16.mxu0 0
        %1291 = vmatpush1.bf16.msra.mxu0 0
        %1292 = vmatprep.subr.bf16.mxu0 0
        %1293 = vmatpush1.bf16.msra.mxu0 0
        %1294 = vmatprep.subr.bf16.mxu0 0
        %1295 = vmatpush1.bf16.msra.mxu0 0
        %1296 = vmatprep.subr.bf16.mxu0 0
        %1297 = vmatpush1.bf16.msra.mxu0 0
        %1298 = vmatprep.subr.bf16.mxu0 0
        %1299 = vmatpush1.bf16.msra.mxu0 0
        %1300 = vmatprep.subr.bf16.mxu0 0
        %1301 = vmatpush1.bf16.msra.mxu0 0
        %1302 = vmatprep.mubr.bf16.mxu0 0
        %1303 = vmatmul.mubr.bf16.gmra.mrb[0].mxu0 %v1265
        %v1304 = vpop.f32.mrb[0].mxu0
        %v1305 = vadd.f32 0.0, %v1304
        %v1306 = vpop.f32.mrb[0].mxu0
        %v1307 = vpop.f32.mrb[0].mxu0
        %v1308 = vpop.f32.mrb[0].mxu0
        %1309 = vdwg.mxu0
        %v1310 = vrcp.pop %v1260
        %v1311 = vmul.f32 %v1305, %v1310
        %v1312 = vpack.c.bf16 %v1311, %v1311
        %s1313 = scalar_lea.vmem [#allocation11], 12
        %v1314 = vld [vmem:[%s1313] sm:$0xf]
        %v1316 = vsel %vm723, %v1312, 0
        %v1319 = vsel %vm786, %v1314, 0
        %1321 = vmatprep.subr.bf16.mxu0 0
        %1322 = vmatpush1.bf16.msra.mxu0 %v1319
        %1323 = vmatprep.subr.bf16.mxu0 0
        %1324 = vmatpush1.bf16.msra.mxu0 0
        %1325 = vmatprep.subr.bf16.mxu0 0
        %1326 = vmatpush1.bf16.msra.mxu0 0
        %1327 = vmatprep.subr.bf16.mxu0 0
        %1328 = vmatpush1.bf16.msra.mxu0 0
        %1329 = vmatprep.subr.bf16.mxu0 0
        %1330 = vmatpush1.bf16.msra.mxu0 0
        %1331 = vmatprep.subr.bf16.mxu0 0
        %1332 = vmatpush1.bf16.msra.mxu0 0
        %1333 = vmatprep.subr.bf16.mxu0 0
        %1334 = vmatpush1.bf16.msra.mxu0 0
        %1335 = vmatprep.subr.bf16.mxu0 0
        %1336 = vmatpush1.bf16.msra.mxu0 0
        %1337 = vmatprep.subr.bf16.mxu0 0
        %1338 = vmatpush1.bf16.msra.mxu0 0
        %1339 = vmatprep.subr.bf16.mxu0 0
        %1340 = vmatpush1.bf16.msra.mxu0 0
        %1341 = vmatprep.subr.bf16.mxu0 0
        %1342 = vmatpush1.bf16.msra.mxu0 0
        %1343 = vmatprep.subr.bf16.mxu0 0
        %1344 = vmatpush1.bf16.msra.mxu0 0
        %1345 = vmatprep.subr.bf16.mxu0 0
        %1346 = vmatpush1.bf16.msra.mxu0 0
        %1347 = vmatprep.subr.bf16.mxu0 0
        %1348 = vmatpush1.bf16.msra.mxu0 0
        %1349 = vmatprep.subr.bf16.mxu0 0
        %1350 = vmatpush1.bf16.msra.mxu0 0
        %1351 = vmatprep.subr.bf16.mxu0 0
        %1352 = vmatpush1.bf16.msra.mxu0 0
        %1353 = vmatprep.mubr.bf16.mxu0 0
        %1354 = vmatmul.mubr.bf16.gmra.mrb[0].mxu0 %v1316
        %v1355 = vpop.f32.mrb[0].mxu0
        %v1356 = vadd.f32 0.0, %v1355
        %v1357 = vpop.f32.mrb[0].mxu0
        %v1358 = vpop.f32.mrb[0].mxu0
        %v1359 = vpop.f32.mrb[0].mxu0
        %1360 = vdwg.mxu0
        %v1361 = vadd.f32 %v1200, %v1356
        %v1362 = vld [vmem:[#allocation13] sm:$0x1]
        %v1364 = vlaneseq
        %v1365 = vshrl.u32 %v1364, 7
        %v1366 = vsub.s32 0, %v1365
        %v1367 = vrot.slane %v1362, %v1366
        %v1369 = vadd.f32 %v1361, %v1367
        %v1370 = vadd.f32 %v615, %v1369
        %v1371 = vld [vmem:[#allocation14] sm:$0x1]
        %v1372 = vld [vmem:[#allocation16] sm:$0x1]
        %v1373 = vsel %vm618, %v1370, 0.0
        %1374 = vadd.xlane.f32.xlu0 %v1373
        %v1375 = vpop.xlane.xlu0 %1374
        %v1376 = vmul.f32 %v1375, %v622
        %v1377 = vsub.f32 %v1370, %v1376
        %v1378 = vmul.f32 %v1377, %v1377
        %v1379 = vsel %vm618, %v1378, 0.0
        %1380 = vadd.xlane.f32.xlu0 %v1379
        %v1381 = vpop.xlane.xlu0 %1380
        %v1382 = vmul.f32 %v1381, %v622
        %v1383 = vadd.f32 %v1382, 1e-05
        %v1384 = vrsqrt.pop %v1383
        %v1385 = vmul.f32 %v1377, %v1384
        %v1387 = vlaneseq
        %v1388 = vshrl.u32 %v1387, 7
        %v1389 = vsub.s32 0, %v1388
        %v1390 = vrot.slane %v1371, %v1389
        %v1392 = vmul.f32 %v1385, %v1390
        %v1394 = vlaneseq
        %v1395 = vshrl.u32 %v1394, 7
        %v1396 = vsub.s32 0, %v1395
        %v1397 = vrot.slane %v1372, %v1396
        %v1399 = vadd.f32 %v1392, %v1397
        %v1400 = vpack.c.bf16 %v1399, %v1399
        %v1401 = vld [vmem:[#allocation17] sm:$0xf]
        %v1402 = vld [vmem:[#allocation17 + $0x4] sm:$0xf]
        %v1403 = vld [vmem:[#allocation17 + $0x8] sm:$0xf]
        %v1404 = vld [vmem:[#allocation17 + $0xc] sm:$0xf]
        %v1405 = vld [vmem:[#allocation19] sm:$0x1]
        %v1407 = vlaneseq
        %v1408 = vshrl.u32 %v1407, 7
        %v1409 = vsub.s32 0, %v1408
        %v1410 = vrot.slane %v1405, %v1409
        %v1416 = vunpack.c.l.b16 %v1401
        %v1417 = vunpack.c.l.b16 %v1402
        %v1418 = vunpack.c.l.b16 %v1403
        %v1419 = vunpack.c.l.b16 %v1404
        %v1420 = vpack.c.b16 %v1417, %v1416
        %v1421 = vpack.c.b16 %v1419, %v1418
        %v1425 = vsel %vm618, %v1400, 0
        %1427 = vmatprep.subr.bf16.mxu0 0
        %1428 = vmatpush1.bf16.msra.mxu0 %v1420
        %1429 = vmatprep.subr.bf16.mxu0 0
        %1430 = vmatpush1.bf16.msra.mxu0 %v1421
        %1431 = vmatprep.subr.bf16.mxu0 0
        %1432 = vmatpush1.bf16.msra.mxu0 0
        %1433 = vmatprep.subr.bf16.mxu0 0
        %1434 = vmatpush1.bf16.msra.mxu0 0
        %1435 = vmatprep.subr.bf16.mxu0 0
        %1436 = vmatpush1.bf16.msra.mxu0 0
        %1437 = vmatprep.subr.bf16.mxu0 0
        %1438 = vmatpush1.bf16.msra.mxu0 0
        %1439 = vmatprep.subr.bf16.mxu0 0
        %1440 = vmatpush1.bf16.msra.mxu0 0
        %1441 = vmatprep.subr.bf16.mxu0 0
        %1442 = vmatpush1.bf16.msra.mxu0 0
        %1443 = vmatprep.subr.bf16.mxu0 0
        %1444 = vmatpush1.bf16.msra.mxu0 0
        %1445 = vmatprep.subr.bf16.mxu0 0
        %1446 = vmatpush1.bf16.msra.mxu0 0
        %1447 = vmatprep.subr.bf16.mxu0 0
        %1448 = vmatpush1.bf16.msra.mxu0 0
        %1449 = vmatprep.subr.bf16.mxu0 0
        %1450 = vmatpush1.bf16.msra.mxu0 0
        %1451 = vmatprep.subr.bf16.mxu0 0
        %1452 = vmatpush1.bf16.msra.mxu0 0
        %1453 = vmatprep.subr.bf16.mxu0 0
        %1454 = vmatpush1.bf16.msra.mxu0 0
        %1455 = vmatprep.subr.bf16.mxu0 0
        %1456 = vmatpush1.bf16.msra.mxu0 0
        %1457 = vmatprep.subr.bf16.mxu0 0
        %1458 = vmatpush1.bf16.msra.mxu0 0
        %1459 = vmatprep.mubr.bf16.mxu0 0
        %1460 = vmatmul.mubr.bf16.gmra.mrb[0].mxu0 %v1425
        %v1461 = vpop.f32.mrb[0].mxu0
        %v1462 = vadd.f32 %v1410, %v1461
        %v1463 = vpop.f32.mrb[0].mxu0
        %v1464 = vpop.f32.mrb[0].mxu0
        %v1465 = vpop.f32.mrb[0].mxu0
        %1466 = vdwg.mxu0
        %v1467 = vmul.f32 %v1462, 0.5
        %v1468 = vmul.f32 %v1462, 0.70710677
        %v1469 = verf.f32.pop %v1468
        %v1470 = vadd.f32 %v1469, 1.0
        %v1471 = vmul.f32 %v1467, %v1470
        %v1472 = vpack.c.bf16 %v1471, %v1471
        %v1473 = vld [vmem:[#allocation20] sm:$0xf]
        %v1474 = vld [vmem:[#allocation20 + $0x4] sm:$0xf]
        %v1475 = vld [vmem:[#allocation20 + $0x8] sm:$0xf]
        %v1476 = vld [vmem:[#allocation20 + $0xc] sm:$0xf]
        %v1477 = vld [vmem:[#allocation20 + $0x10] sm:$0xf]
        %v1478 = vld [vmem:[#allocation20 + $0x14] sm:$0xf]
        %v1479 = vld [vmem:[#allocation20 + $0x18] sm:$0xf]
        %v1480 = vld [vmem:[#allocation20 + $0x1c] sm:$0xf]
        %v1481 = vld [vmem:[#allocation22] sm:$0x1]
        %v1483 = vlaneseq
        %v1484 = vshrl.u32 %v1483, 7
        %v1485 = vsub.s32 0, %v1484
        %v1486 = vrot.slane %v1481, %v1485
        %v1496 = vunpack.c.l.b16 %v1473
        %v1497 = vunpack.c.l.b16 %v1474
        %v1498 = vunpack.c.l.b16 %v1475
        %v1499 = vunpack.c.l.b16 %v1476
        %v1500 = vunpack.c.l.b16 %v1477
        %v1501 = vunpack.c.l.b16 %v1478
        %v1502 = vunpack.c.l.b16 %v1479
        %v1503 = vunpack.c.l.b16 %v1480
        %v1504 = vpack.c.b16 %v1497, %v1496
        %v1505 = vpack.c.b16 %v1499, %v1498
        %v1506 = vpack.c.b16 %v1501, %v1500
        %v1507 = vpack.c.b16 %v1503, %v1502
        %vm1512 = vcmask 523264
        %v1514 = vsel %vm1512, %v1472, 0
        %1516 = vmatprep.subr.bf16.mxu0 0
        %1517 = vmatpush1.bf16.msra.mxu0 %v1504
        %1518 = vmatprep.subr.bf16.mxu0 0
        %1519 = vmatpush1.bf16.msra.mxu0 %v1505
        %1520 = vmatprep.subr.bf16.mxu0 0
        %1521 = vmatpush1.bf16.msra.mxu0 %v1506
        %1522 = vmatprep.subr.bf16.mxu0 0
        %1523 = vmatpush1.bf16.msra.mxu0 %v1507
        %1524 = vmatprep.subr.bf16.mxu0 0
        %1525 = vmatpush1.bf16.msra.mxu0 0
        %1526 = vmatprep.subr.bf16.mxu0 0
        %1527 = vmatpush1.bf16.msra.mxu0 0
        %1528 = vmatprep.subr.bf16.mxu0 0
        %1529 = vmatpush1.bf16.msra.mxu0 0
        %1530 = vmatprep.subr.bf16.mxu0 0
        %1531 = vmatpush1.bf16.msra.mxu0 0
        %1532 = vmatprep.subr.bf16.mxu0 0
        %1533 = vmatpush1.bf16.msra.mxu0 0
        %1534 = vmatprep.subr.bf16.mxu0 0
        %1535 = vmatpush1.bf16.msra.mxu0 0
        %1536 = vmatprep.subr.bf16.mxu0 0
        %1537 = vmatpush1.bf16.msra.mxu0 0
        %1538 = vmatprep.subr.bf16.mxu0 0
        %1539 = vmatpush1.bf16.msra.mxu0 0
        %1540 = vmatprep.subr.bf16.mxu0 0
        %1541 = vmatpush1.bf16.msra.mxu0 0
        %1542 = vmatprep.subr.bf16.mxu0 0
        %1543 = vmatpush1.bf16.msra.mxu0 0
        %1544 = vmatprep.subr.bf16.mxu0 0
        %1545 = vmatpush1.bf16.msra.mxu0 0
        %1546 = vmatprep.subr.bf16.mxu0 0
        %1547 = vmatpush1.bf16.msra.mxu0 0
        %1548 = vmatprep.mubr.bf16.mxu0 0
        %1549 = vmatmul.mubr.bf16.gmra.mrb[0].mxu0 %v1514
        %v1550 = vpop.f32.mrb[0].mxu0
        %v1551 = vadd.f32 %v1486, %v1550
        %v1552 = vpop.f32.mrb[0].mxu0
        %v1553 = vpop.f32.mrb[0].mxu0
        %v1554 = vpop.f32.mrb[0].mxu0
        %1555 = vdwg.mxu0
        %v1556 = vadd.f32 %v1370, %v1551
        %1557 = vst.msk [vmem:[%s613] sm:$0xff] %vm618, %v1556
        %s1558 = sand.u32 %s322, 1
        %s1559 = scalar_lea.sflag [#allocation4], %s1558
        %s1560 = sand.u32 %s322, 1
        %s1561 = smul.addr %s1560, 8
        %s1562 = scalar_lea.vmem [#allocation23], %s1561
        // Predicated region
        $region125: #{tpu_custom_call.1} parent=71 // pred_check
          %p1563 = pneg %p332
        $region126: #{tpu_custom_call.1} parent=71 // pred_check_branch
          %1565 = sbr.rel (%p1563) target = $region128
        $region127: #{tpu_custom_call.1} parent=71 // pred_region
          %s1567 = ssub.s32 128, 128
          %1568 = vsyncadd %s1559, %s1567
          %s1569 = smul.addr %s36, 128
          %s1570 = scalar_lea.hbm %s13, %s1569
          %s1572 = sshll.u32 %s1562, 4
          %s1573 = int_to_ptr.vmem [resolvable:$true] %s1572
          %1575 = dma.vmem_to_hbm [thread:$0]  %s1573, 128, %s1570, %s1559
        $region128: #{tpu_custom_call.1} parent=71 // pred_fallthru
          _
      $region72: #{tpu_custom_call.1} parent=5 // pred_fallthru
        _
      %p1576 = scmp.le.s32.totalorder 2, %s31
      // Predicated region
      $region129: #{tpu_custom_call.1} parent=5 // pred_check
        %p1577 = pneg %p1576
      $region130: #{tpu_custom_call.1} parent=5 // pred_check_branch
        %1579 = sbr.rel (%p1577) target = $region132
      $region131: #{tpu_custom_call.1} parent=5 // pred_region
        %s1580 = ssub.s32 %s31, 2
        // Predicated region
        $region133: #{tpu_custom_call.1} parent=131 // pred_check
          %p1581 = pneg %p338
        $region134: #{tpu_custom_call.1} parent=131 // pred_check_branch
          %1583 = sbr.rel (%p1581) target = $region136
        $region135: #{tpu_custom_call.1} parent=131 // pred_region
          %s1584 = sand.u32 %s323, 1
          %s1585 = scalar_lea.sflag [#allocation4], %s1584
          %s1586 = sand.u32 %s323, 1
          %s1587 = smul.addr %s1586, 8
          %s1588 = scalar_lea.vmem [#allocation23], %s1587
          %1589 = dma.done %s1585, 128
        $region136: #{tpu_custom_call.1} parent=131 // pred_fallthru
          _
      $region132: #{tpu_custom_call.1} parent=5 // pred_fallthru
        _
    $region6: #{tpu_custom_call.1} parent=1 // loop_footer
      %s35 = sadd.s32 1, %s31
    $region7: #{tpu_custom_call.1} parent=1 // loop_footer_branch
      %30 = sbr.rel target = $region3
    $region8: #{tpu_custom_call.1} parent=1 // loop_exit
      _
    %1590 = vsyncpa [#allocation3], 1
    %s1591 = scalar_lea.sflag [#allocation3], 1
    %1592 = vsyncpa %s1591, 1
    %1593 = vsyncpa [#allocation6], 1
    %1594 = vsyncpa [#allocation9], 1
    %1595 = vsyncpa [#allocation12], 1
    %1596 = vsyncpa [#allocation15], 1
    %1597 = vsyncpa [#allocation18], 1
    %1598 = vsyncpa [#allocation21], 1
    %1599 = vsyncpa [#allocation4], 1
    %s1600 = scalar_lea.sflag [#allocation4], 1
    %1601 = vsyncpa %s1600, 1

</llo_original>
